<compile_context>
chip_gen: v5e
topology: v5e:2x2
jax: 0.10.0
libtpu: 0.0.40
codegen_flags: <defaults>
</compile_context>

<pallas_src>
import numpy as np

import jax
import jax.numpy as jnp
from jax.experimental import pallas as pl
from jax.experimental.pallas import tpu as pltpu

EPS = 1e-5
LEAKY = 0.2
_HS = (4, 8, 16, 32)  # input spatial size of the 4 stride-2 deconv layers


# -----------------------------------------------------------------------------
# Parameter init (PyTorch layouts: Linear (out,in), ConvTranspose2d (Cin,Cout,K,K))
# -----------------------------------------------------------------------------
def init_generator_params(key, in_embedding_dim, projected_embedding_dim,
                          noise_dim, channels_dim, out_channels):
    concat_dim = projected_embedding_dim + noise_dim
    chans = [concat_dim, channels_dim * 8, channels_dim * 4,
             channels_dim * 2, channels_dim, out_channels]
    keys = jax.random.split(key, 20)
    p = {}
    p["lin_w"] = 0.05 * jax.random.normal(
        keys[0], (projected_embedding_dim, in_embedding_dim), jnp.float32)
    p["lin_b"] = 0.05 * jax.random.normal(
        keys[1], (projected_embedding_dim,), jnp.float32)
    p["lin_gamma"] = 1.0 + 0.1 * jax.random.normal(
        keys[2], (projected_embedding_dim,), jnp.float32)
    p["lin_beta"] = 0.1 * jax.random.normal(
        keys[3], (projected_embedding_dim,), jnp.float32)
    for i in range(5):
        p[f"conv{i}_w"] = 0.05 * jax.random.normal(
            keys[4 + 3 * i], (chans[i], chans[i + 1], 4, 4), jnp.float32)
        if i < 4:
            p[f"bn{i}_gamma"] = 1.0 + 0.1 * jax.random.normal(
                keys[5 + 3 * i], (chans[i + 1],), jnp.float32)
            p[f"bn{i}_beta"] = 0.1 * jax.random.normal(
                keys[6 + 3 * i], (chans[i + 1],), jnp.float32)
    return p


# -----------------------------------------------------------------------------
# Host-side weight preprocessing (numpy, done once)
# -----------------------------------------------------------------------------
def _band_weights_fused(w_np, win):
    """Tap-fused banded matrices for k=4, s=2, p=1 ConvTranspose2d (NO column pad).

    For output-row phase a in {even, odd}, output row 2m+a of one image is
        [padded_row(m+a) | padded_row(m+a+1)]  @  W_a,
    where each padded row is laid out as (win*Cin) lanes of the UNPADDED width
    (the zero column border is folded into the band structure), and
    W_a = vstack(W_{a,t_r=0}, W_{a,t_r=1}) has shape (2*win*Cin, 2*win*Cout).
    Output lanes are laid out as (ow, Cout).  Returns [W_even, W_odd].
    """
    cin, cout = w_np.shape[0], w_np.shape[1]
    out = []
    for a in (0, 1):
        blocks = []
        for t_r in (0, 1):
            kh = 3 - 2 * t_r - a
            m = np.zeros((win * cin, 2 * win * cout), np.float32)
            for l in range(win):
                for b in (0, 1):
                    for t_c in (0, 1):
                        col = l + b + t_c - 1          # unpadded input column
                        if col < 0 or col >= win:       # falls on zero border
                            continue
                        kw = 3 - 2 * t_c - b
                        m[col * cin:(col + 1) * cin,
                          (2 * l + b) * cout:(2 * l + b + 1) * cout] = w_np[:, :, kh, kw]
            blocks.append(m)
        out.append(np.concatenate(blocks, axis=0))      # (2*win*Cin, 2*win*Cout)
    return out


def _interleave_matrix(batch, h):
    """Block-diagonal 0/1 matrix interleaving even/odd output rows for all images.

    Maps vstack(z_even, z_odd) (rows (b,m)) -> flat (b, output row r) order:
      out[b*2h + 2m]   = z_even[b*h + m]
      out[b*2h + 2m+1] = z_odd [b*h + m]
    """
    s = np.zeros((batch * 2 * h, 2 * batch * h), np.float32)
    for b in range(batch):
        for m in range(h):
            s[b * 2 * h + 2 * m, b * h + m] = 1.0
            s[b * 2 * h + 2 * m + 1, batch * h + b * h + m] = 1.0
    return s


def prepare_operands(params, batch_size):
    """Torch-layout params -> flat tuple of MXU-friendly kernel operands."""
    bf16 = jnp.bfloat16
    P = params["lin_w"].shape[0]
    w0 = np.asarray(params["conv0_w"], np.float32)      # (Ccat, C8, 4, 4)
    C8 = w0.shape[1]

    ops = []
    # Linear projection + BN1d (packed: rows = [bias, gamma, beta])
    ops.append(jnp.asarray(np.asarray(params["lin_w"], np.float32).T))        # (Ein, P) f32
    lin_pack = np.stack([np.asarray(params["lin_b"], np.float32),
                         np.asarray(params["lin_gamma"], np.float32),
                         np.asarray(params["lin_beta"], np.float32)], axis=0)  # (3, P)
    ops.append(jnp.asarray(lin_pack))

    # Layer 0: ConvT(k4,s1,p0) on a 1x1 input  ==  x @ W0, W0[ci,(oh*4+ow)*C8+co]
    w0f = np.transpose(w0, (0, 2, 3, 1)).reshape(w0.shape[0], 16 * C8)
    ops.append(jnp.asarray(w0f[:P], dtype=bf16))                              # proj part
    ops.append(jnp.asarray(w0f[P:], dtype=bf16))                              # noise part
    gb0 = np.stack([np.asarray(params["bn0_gamma"], np.float32),
                    np.asarray(params["bn0_beta"], np.float32)], axis=0)      # (2, C8)
    ops.append(jnp.asarray(gb0))
    t0 = np.tile(np.eye(C8, dtype=np.float32), (16, 1))                       # (16*C8, C8)
    ops.append(jnp.asarray(t0))
    ops.append(jnp.asarray(np.ascontiguousarray(t0.T)))                       # (C8, 16*C8)

    # Layers 1..4 (stride-2 deconvs); BN params only for layers 1..3
    for i in range(1, 5):
        w = np.asarray(params[f"conv{i}_w"], np.float32)
        cout = w.shape[1]
        win = _HS[i - 1]
        w_even, w_odd = _band_weights_fused(w, win)
        ops.append(jnp.asarray(w_even, dtype=bf16))
        ops.append(jnp.asarray(w_odd, dtype=bf16))
        ops.append(jnp.asarray(_interleave_matrix(batch_size, win), dtype=bf16))
        if i < 4:
            gb = np.stack([np.asarray(params[f"bn{i}_gamma"], np.float32),
                           np.asarray(params[f"bn{i}_beta"], np.float32)], axis=0)
            ops.append(jnp.asarray(gb))                                       # (2, Cout)
            t = np.tile(np.eye(cout, dtype=np.float32), (2 * win, 1))         # (2W*Cout, Cout)
            ops.append(jnp.asarray(t))
            ops.append(jnp.asarray(np.ascontiguousarray(t.T)))                # (Cout, 2W*Cout)
    return tuple(ops)


# -----------------------------------------------------------------------------
# Fully fused generator kernel
# -----------------------------------------------------------------------------
def make_generator_forward(channels_dim, out_channels):
    C8, C4, C2, C1 = 8 * channels_dim, 4 * channels_dim, 2 * channels_dim, channels_dim
    OC = out_channels

    def kernel(*refs):
        emb, noise = refs[0], refs[1]
        ops = refs[2:30]
        o_ref = refs[30]
        pads = refs[31:35]
        B = emb.shape[0]
        f32, bf16 = jnp.float32, jnp.bfloat16

        lwT, lin_pack, w0p, w0n, gb0, t0, tt0 = ops[0:7]
        layer_ops = [ops[7 + 6 * i: 13 + 6 * i] for i in range(3)]   # layers 1..3
        w4e, w4o, s4 = ops[25], ops[26], ops[27]

        # Zero ONLY the 1-row top/bottom borders (interiors are fully overwritten).
        for p in pads:
            zrow = jnp.zeros((B, p.shape[2]), f32)
            p[:, 0, :] = zrow
            p[:, p.shape[1] - 1, :] = zrow

        # ---- Linear -> BatchNorm1d (batch stats) -> LeakyReLU(0.2) ----
        lin = lin_pack[...]
        y = jnp.dot(emb[...], lwT[...], preferred_element_type=f32) + lin[0:1, :]
        mu = jnp.mean(y, axis=0, keepdims=True)
        var = jnp.maximum(jnp.mean(y * y, axis=0, keepdims=True) - mu * mu, 0.0)
        z = (y - mu) * jax.lax.rsqrt(var + EPS) * lin[1:2, :] + lin[2:3, :]
        proj = jnp.where(z >= 0.0, z, LEAKY * z)                       # (B, P) f32

        # ---- Layer 0: ConvT(k4,s1,p0) on the 1x1 [proj|noise] input -> BN2d -> ReLU
        y0 = (jnp.dot(proj.astype(bf16), w0p[...], preferred_element_type=f32)
              + jnp.dot(noise[...].astype(bf16), w0n[...],
                        preferred_element_type=f32))                   # (B, 16*C8)
        cnt0 = float(B * 16)
        s1 = jnp.dot(jnp.sum(y0, axis=0, keepdims=True), t0[...],
                     preferred_element_type=f32)                       # (1, C8)
        s2 = jnp.dot(jnp.sum(y0 * y0, axis=0, keepdims=True), t0[...],
                     preferred_element_type=f32)
        m0 = s1 / cnt0
        v0 = jnp.maximum(s2 / cnt0 - m0 * m0, 0.0)
        gbv0 = gb0[...]
        sc = gbv0[0:1, :] * jax.lax.rsqrt(v0 + EPS)
        sh = gbv0[1:2, :] - m0 * sc
        sc_b = jnp.dot(sc, tt0[...], preferred_element_type=f32)       # (1, 16*C8)
        sh_b = jnp.dot(sh, tt0[...], preferred_element_type=f32)
        a0 = jnp.maximum(y0 * sc_b + sh_b, 0.0)                        # (B, 16*C8)
        row_w = 4 * C8                                                  # 128 lanes
        for oh in range(4):   # write row oh into the padded (B, 6, 4*C8) buffer
            pads[0][:, 1 + oh, :] = a0[:, oh * row_w:(oh + 1) * row_w]

        # ---- Stride-2 ConvTranspose layers (tap-fused, phase-decomposed) ----
        def up_layer(src, H, w_e, w_o, s_mat, bn, dst, final=False):
            kw = src.shape[2]                  # W*Cin (lane-dense, no col pad)

            def lhs(a):
                l0 = src[:, a:a + H, :]        # padded rows a .. a+H-1
                l1 = src[:, a + 1:a + 1 + H, :]  # padded rows a+1 .. a+H
                cat = jnp.concatenate([l0, l1], axis=-1)       # (B, H, 2*kw) f32
                return cat.reshape(B * H, 2 * kw).astype(bf16)

            y_e = jnp.dot(lhs(0), w_e[...], preferred_element_type=f32)  # (B*H, 2W*Cout)
            y_o = jnp.dot(lhs(1), w_o[...], preferred_element_type=f32)

            if bn is not None:
                gb, T, Tt = bn
                rs1 = (jnp.sum(y_e, axis=0, keepdims=True)
                       + jnp.sum(y_o, axis=0, keepdims=True))
                rs2 = (jnp.sum(y_e * y_e, axis=0, keepdims=True)
                       + jnp.sum(y_o * y_o, axis=0, keepdims=True))
                ch1 = jnp.dot(rs1, T[...], preferred_element_type=f32)   # (1, Cout)
                ch2 = jnp.dot(rs2, T[...], preferred_element_type=f32)
                cnt = float(B * 4 * H * H)
                mu_ = ch1 / cnt
                var_ = jnp.maximum(ch2 / cnt - mu_ * mu_, 0.0)
                gbv = gb[...]
                sc_ = gbv[0:1, :] * jax.lax.rsqrt(var_ + EPS)
                sh_ = gbv[1:2, :] - mu_ * sc_
                scb = jnp.dot(sc_, Tt[...], preferred_element_type=f32)  # (1, 2W*Cout)
                shb = jnp.dot(sh_, Tt[...], preferred_element_type=f32)
                z_e = jnp.maximum(y_e * scb + shb, 0.0)
                z_o = jnp.maximum(y_o * scb + shb, 0.0)
            else:
                z_e = jnp.tanh(y_e)
                z_o = jnp.tanh(y_o)

            # One block-diagonal selection matmul interleaves all even/odd rows
            # of all images (replaces per-image interleave matmuls).
            zcat = jnp.concatenate([z_e, z_o], axis=0).astype(bf16)      # (2BH, 2W*Cout)
            Y = jnp.dot(s_mat[...], zcat, preferred_element_type=f32)    # (B*2H, 2W*Cout)
            Y = Y.reshape(B, 2 * H, Y.shape[-1])
            if final:
                dst[...] = Y
            else:
                dst[:, 1:1 + 2 * H, :] = Y

        lo0, lo1, lo2 = layer_ops
        up_layer(pads[0], 4, lo0[0], lo0[1], lo0[2], (lo0[3], lo0[4], lo0[5]), pads[1])
        up_layer(pads[1], 8, lo1[0], lo1[1], lo1[2], (lo1[3], lo1[4], lo1[5]), pads[2])
        up_layer(pads[2], 16, lo2[0], lo2[1], lo2[2], (lo2[3], lo2[4], lo2[5]), pads[3])
        up_layer(pads[3], 32, w4e, w4o, s4, None, o_ref, final=True)   # tanh, no BN

    @jax.jit
    def forward(operands, input_embedding, noise):
        B = input_embedding.shape[0]
        noise2d = noise.reshape(B, -1)
        out = pl.pallas_call(
            kernel,
            out_shape=jax.ShapeDtypeStruct((B, 64, 64 * OC), jnp.float32),
            scratch_shapes=[
                pltpu.VMEM((B, 6, 4 * C8), jnp.float32),    # lane width 128
                pltpu.VMEM((B, 10, 8 * C4), jnp.float32),   # 128
                pltpu.VMEM((B, 18, 16 * C2), jnp.float32),  # 128
                pltpu.VMEM((B, 34, 32 * C1), jnp.float32),  # 128
            ],
        )(input_embedding, noise2d, *operands)
        img = out.reshape(B, 64, 64, OC)
        return jnp.transpose(img, (0, 3, 1, 2))   # NCHW like the PyTorch module

    return forward


# -----------------------------------------------------------------------------
# Pure-JAX (XLA) reference for correctness checking
# -----------------------------------------------------------------------------
@jax.jit
def reference_forward(params, emb, noise):
    y = emb @ params["lin_w"].T + params["lin_b"]
    mu = y.mean(0, keepdims=True)
    var = ((y - mu) ** 2).mean(0, keepdims=True)
    z = (y - mu) / jnp.sqrt(var + EPS) * params["lin_gamma"] + params["lin_beta"]
    z = jnp.where(z >= 0, z, LEAKY * z)
    x = jnp.concatenate([z, noise.reshape(noise.shape[0], -1)], axis=1)[:, :, None, None]
    strides = [1, 2, 2, 2, 2]
    pads_ = [0, 1, 1, 1, 1]
    for i in range(5):
        w_t = params[f"conv{i}_w"]
        K = 4
        pad = K - 1 - pads_[i]
        w_conv = jnp.transpose(w_t[:, :, ::-1, ::-1], (1, 0, 2, 3))   # OIHW, flipped
        x = jax.lax.conv_general_dilated(
            x, w_conv, (1, 1), [(pad, pad), (pad, pad)],
            lhs_dilation=(strides[i], strides[i]),
            dimension_numbers=("NCHW", "OIHW", "NCHW"))
        if i < 4:
            mu = x.mean(axis=(0, 2, 3), keepdims=True)
            var = ((x - mu) ** 2).mean(axis=(0, 2, 3), keepdims=True)
            x = ((x - mu) / jnp.sqrt(var + EPS)
                 * params[f"bn{i}_gamma"].reshape(1, -1, 1, 1)
                 + params[f"bn{i}_beta"].reshape(1, -1, 1, 1))
            x = jnp.maximum(x, 0.0)
        else:
            x = jnp.tanh(x)
    return x


if __name__ == "__main__":
    key = jax.random.PRNGKey(0)
    k_param, k_emb, k_noise = jax.random.split(key, 3)

    B = 2
    in_embedding_dim = 32
    projected_embedding_dim = 16
    noise_dim = 16
    channels_dim = 4
    out_channels = 3

    params = init_generator_params(
        k_param, in_embedding_dim, projected_embedding_dim,
        noise_dim, channels_dim, out_channels)
    operands = prepare_operands(params, B)
    forward = make_generator_forward(channels_dim, out_channels)

    input_embedding = jax.random.normal(k_emb, (B, in_embedding_dim), jnp.float32)
    noise = jax.random.normal(k_noise, (B, noise_dim, 1, 1), jnp.float32)

    out = jax.block_until_ready(forward(operands, input_embedding, noise))

    assert out.shape == (B, out_channels, 64, 64), out.shape
    assert bool(jnp.all(jnp.isfinite(out)))
    assert bool(jnp.all(jnp.abs(out) <= 1.0 + 1e-6))   # tanh output range

    ref = jax.block_until_ready(reference_forward(params, input_embedding, noise))
    max_diff = float(jnp.max(jnp.abs(out - ref)))
    mean_diff = float(jnp.mean(jnp.abs(out - ref)))
    # bf16 matmul operands -> slightly looser tolerance than the f32 version.
    assert max_diff < 0.15 and mean_diff < 0.03, (max_diff, mean_diff)

    print("KERNEL_OK")
</pallas_src>

<mosaic_0001>
module attributes {stable_mosaic.version = 11 : i64} {
  func.func @kernel(%arg0: memref<2x32xf32, #tpu.memory_space<vmem>>, %arg1: memref<2x16xf32, #tpu.memory_space<vmem>>, %arg2: memref<32x16xf32, #tpu.memory_space<vmem>>, %arg3: memref<3x16xf32, #tpu.memory_space<vmem>>, %arg4: memref<16x512xbf16, #tpu.memory_space<vmem>>, %arg5: memref<16x512xbf16, #tpu.memory_space<vmem>>, %arg6: memref<2x32xf32, #tpu.memory_space<vmem>>, %arg7: memref<512x32xf32, #tpu.memory_space<vmem>>, %arg8: memref<32x512xf32, #tpu.memory_space<vmem>>, %arg9: memref<256x128xbf16, #tpu.memory_space<vmem>>, %arg10: memref<256x128xbf16, #tpu.memory_space<vmem>>, %arg11: memref<16x16xbf16, #tpu.memory_space<vmem>>, %arg12: memref<2x16xf32, #tpu.memory_space<vmem>>, %arg13: memref<128x16xf32, #tpu.memory_space<vmem>>, %arg14: memref<16x128xf32, #tpu.memory_space<vmem>>, %arg15: memref<256x128xbf16, #tpu.memory_space<vmem>>, %arg16: memref<256x128xbf16, #tpu.memory_space<vmem>>, %arg17: memref<32x32xbf16, #tpu.memory_space<vmem>>, %arg18: memref<2x8xf32, #tpu.memory_space<vmem>>, %arg19: memref<128x8xf32, #tpu.memory_space<vmem>>, %arg20: memref<8x128xf32, #tpu.memory_space<vmem>>, %arg21: memref<256x128xbf16, #tpu.memory_space<vmem>>, %arg22: memref<256x128xbf16, #tpu.memory_space<vmem>>, %arg23: memref<64x64xbf16, #tpu.memory_space<vmem>>, %arg24: memref<2x4xf32, #tpu.memory_space<vmem>>, %arg25: memref<128x4xf32, #tpu.memory_space<vmem>>, %arg26: memref<4x128xf32, #tpu.memory_space<vmem>>, %arg27: memref<256x192xbf16, #tpu.memory_space<vmem>>, %arg28: memref<256x192xbf16, #tpu.memory_space<vmem>>, %arg29: memref<128x128xbf16, #tpu.memory_space<vmem>>, %arg30: memref<2x64x192xf32, #tpu.memory_space<vmem>>, %arg31: memref<2x6x128xf32, #tpu.memory_space<vmem>>, %arg32: memref<2x10x128xf32, #tpu.memory_space<vmem>>, %arg33: memref<2x18x128xf32, #tpu.memory_space<vmem>>, %arg34: memref<2x34x128xf32, #tpu.memory_space<vmem>>) attributes {dimension_semantics = [], scalar_prefetch = 0 : i64, scratch_operands = 4 : i64, tpu.core_type = #tpu.core_type<tc>} {
    %cst = arith.constant 0.000000e+00 : f32
    %0 = vector.broadcast %cst : f32 to vector<2x128xf32>
    %c0 = arith.constant 0 : index
    %c0_0 = arith.constant 0 : index
    %c0_1 = arith.constant 0 : index
    %1 = vector.load %arg31[%c0, %c0_0, %c0_1] : memref<2x6x128xf32, #tpu.memory_space<vmem>>, vector<2x1x128xf32>
    %2 = vector.shape_cast %1 : vector<2x1x128xf32> to vector<2x128xf32>
    %3 = vector.shape_cast %0 : vector<2x128xf32> to vector<2x1x128xf32>
    tpu.vector_store %arg31[%c0, %c0_0, %c0_1], %3 {strides = array<i32>} : memref<2x6x128xf32, #tpu.memory_space<vmem>>, vector<2x1x128xf32>,
    %c0_2 = arith.constant 0 : index
    %c5 = arith.constant 5 : index
    %c0_3 = arith.constant 0 : index
    %4 = vector.load %arg31[%c0_2, %c5, %c0_3] : memref<2x6x128xf32, #tpu.memory_space<vmem>>, vector<2x1x128xf32>
    %5 = vector.shape_cast %4 : vector<2x1x128xf32> to vector<2x128xf32>
    %6 = vector.shape_cast %0 : vector<2x128xf32> to vector<2x1x128xf32>
    tpu.vector_store %arg31[%c0_2, %c5, %c0_3], %6 {strides = array<i32>} : memref<2x6x128xf32, #tpu.memory_space<vmem>>, vector<2x1x128xf32>,
    %cst_4 = arith.constant 0.000000e+00 : f32
    %7 = vector.broadcast %cst_4 : f32 to vector<2x128xf32>
    %c0_5 = arith.constant 0 : index
    %c0_6 = arith.constant 0 : index
    %c0_7 = arith.constant 0 : index
    %8 = vector.load %arg32[%c0_5, %c0_6, %c0_7] : memref<2x10x128xf32, #tpu.memory_space<vmem>>, vector<2x1x128xf32>
    %9 = vector.shape_cast %8 : vector<2x1x128xf32> to vector<2x128xf32>
    %10 = vector.shape_cast %7 : vector<2x128xf32> to vector<2x1x128xf32>
    tpu.vector_store %arg32[%c0_5, %c0_6, %c0_7], %10 {strides = array<i32>} : memref<2x10x128xf32, #tpu.memory_space<vmem>>, vector<2x1x128xf32>,
    %c0_8 = arith.constant 0 : index
    %c9 = arith.constant 9 : index
    %c0_9 = arith.constant 0 : index
    %11 = vector.load %arg32[%c0_8, %c9, %c0_9] : memref<2x10x128xf32, #tpu.memory_space<vmem>>, vector<2x1x128xf32>
    %12 = vector.shape_cast %11 : vector<2x1x128xf32> to vector<2x128xf32>
    %13 = vector.shape_cast %7 : vector<2x128xf32> to vector<2x1x128xf32>
    tpu.vector_store %arg32[%c0_8, %c9, %c0_9], %13 {strides = array<i32>} : memref<2x10x128xf32, #tpu.memory_space<vmem>>, vector<2x1x128xf32>,
    %cst_10 = arith.constant 0.000000e+00 : f32
    %14 = vector.broadcast %cst_10 : f32 to vector<2x128xf32>
    %c0_11 = arith.constant 0 : index
    %c0_12 = arith.constant 0 : index
    %c0_13 = arith.constant 0 : index
    %15 = vector.load %arg33[%c0_11, %c0_12, %c0_13] : memref<2x18x128xf32, #tpu.memory_space<vmem>>, vector<2x1x128xf32>
    %16 = vector.shape_cast %15 : vector<2x1x128xf32> to vector<2x128xf32>
    %17 = vector.shape_cast %14 : vector<2x128xf32> to vector<2x1x128xf32>
    tpu.vector_store %arg33[%c0_11, %c0_12, %c0_13], %17 {strides = array<i32>} : memref<2x18x128xf32, #tpu.memory_space<vmem>>, vector<2x1x128xf32>,
    %c0_14 = arith.constant 0 : index
    %c17 = arith.constant 17 : index
    %c0_15 = arith.constant 0 : index
    %18 = vector.load %arg33[%c0_14, %c17, %c0_15] : memref<2x18x128xf32, #tpu.memory_space<vmem>>, vector<2x1x128xf32>
    %19 = vector.shape_cast %18 : vector<2x1x128xf32> to vector<2x128xf32>
    %20 = vector.shape_cast %14 : vector<2x128xf32> to vector<2x1x128xf32>
    tpu.vector_store %arg33[%c0_14, %c17, %c0_15], %20 {strides = array<i32>} : memref<2x18x128xf32, #tpu.memory_space<vmem>>, vector<2x1x128xf32>,
    %cst_16 = arith.constant 0.000000e+00 : f32
    %21 = vector.broadcast %cst_16 : f32 to vector<2x128xf32>
    %c0_17 = arith.constant 0 : index
    %c0_18 = arith.constant 0 : index
    %c0_19 = arith.constant 0 : index
    %22 = vector.load %arg34[%c0_17, %c0_18, %c0_19] : memref<2x34x128xf32, #tpu.memory_space<vmem>>, vector<2x1x128xf32>
    %23 = vector.shape_cast %22 : vector<2x1x128xf32> to vector<2x128xf32>
    %24 = vector.shape_cast %21 : vector<2x128xf32> to vector<2x1x128xf32>
    tpu.vector_store %arg34[%c0_17, %c0_18, %c0_19], %24 {strides = array<i32>} : memref<2x34x128xf32, #tpu.memory_space<vmem>>, vector<2x1x128xf32>,
    %c0_20 = arith.constant 0 : index
    %c33 = arith.constant 33 : index
    %c0_21 = arith.constant 0 : index
    %25 = vector.load %arg34[%c0_20, %c33, %c0_21] : memref<2x34x128xf32, #tpu.memory_space<vmem>>, vector<2x1x128xf32>
    %26 = vector.shape_cast %25 : vector<2x1x128xf32> to vector<2x128xf32>
    %27 = vector.shape_cast %21 : vector<2x128xf32> to vector<2x1x128xf32>
    tpu.vector_store %arg34[%c0_20, %c33, %c0_21], %27 {strides = array<i32>} : memref<2x34x128xf32, #tpu.memory_space<vmem>>, vector<2x1x128xf32>,
    %c0_22 = arith.constant 0 : index
    %c0_23 = arith.constant 0 : index
    %28 = vector.load %arg3[%c0_22, %c0_23] : memref<3x16xf32, #tpu.memory_space<vmem>>, vector<3x16xf32>
    %c0_24 = arith.constant 0 : index
    %c0_25 = arith.constant 0 : index
    %29 = vector.load %arg0[%c0_24, %c0_25] : memref<2x32xf32, #tpu.memory_space<vmem>>, vector<2x32xf32>
    %c0_26 = arith.constant 0 : index
    %c0_27 = arith.constant 0 : index
    %30 = vector.load %arg2[%c0_26, %c0_27] : memref<32x16xf32, #tpu.memory_space<vmem>>, vector<32x16xf32>
    %cst_28 = arith.constant dense<0.000000e+00> : vector<2x16xf32>
    %31 = tpu.matmul %29, %30, %cst_28 {dimension_numbers = #tpu.dot_dimension_numbers<[1], [0], [0], [1], [0, 0, 1, 1], [], []>} : vector<2x32xf32>, vector<32x16xf32>, vector<2x16xf32> -> vector<2x16xf32>
    %32 = vector.extract_strided_slice %28 {offsets = [0, 0], sizes = [1, 16], strides = [1, 1]} : vector<3x16xf32> to vector<1x16xf32>
    %33 = vector.broadcast %32 : vector<1x16xf32> to vector<2x16xf32>
    %34 = arith.addf %31, %33 : vector<2x16xf32>
    %cst_29 = arith.constant dense<0.000000e+00> : vector<16xf32>
    %35 = vector.multi_reduction <add>, %34, %cst_29 [0] : vector<2x16xf32> to vector<16xf32>
    %36 = vector.shape_cast %35 : vector<16xf32> to vector<1x16xf32>
    %cst_30 = arith.constant 2.000000e+00 : f32
    %37 = vector.broadcast %cst_30 : f32 to vector<1x16xf32>
    %38 = arith.divf %36, %37 : vector<1x16xf32>
    %39 = arith.mulf %34, %34 : vector<2x16xf32>
    %cst_31 = arith.constant dense<0.000000e+00> : vector<16xf32>
    %40 = vector.multi_reduction <add>, %39, %cst_31 [0] : vector<2x16xf32> to vector<16xf32>
    %41 = vector.shape_cast %40 : vector<16xf32> to vector<1x16xf32>
    %cst_32 = arith.constant 2.000000e+00 : f32
    %42 = vector.broadcast %cst_32 : f32 to vector<1x16xf32>
    %43 = arith.divf %41, %42 : vector<1x16xf32>
    %44 = arith.mulf %38, %38 : vector<1x16xf32>
    %45 = arith.subf %43, %44 : vector<1x16xf32>
    %cst_33 = arith.constant 0.000000e+00 : f32
    %46 = vector.broadcast %cst_33 : f32 to vector<1x16xf32>
    %47 = arith.maximumf %45, %46 : vector<1x16xf32>
    %48 = vector.broadcast %38 : vector<1x16xf32> to vector<2x16xf32>
    %49 = arith.subf %34, %48 : vector<2x16xf32>
    %cst_34 = arith.constant 9.99999974E-6 : f32
    %50 = vector.broadcast %cst_34 : f32 to vector<1x16xf32>
    %51 = arith.addf %47, %50 : vector<1x16xf32>
    %52 = math.rsqrt %51 : vector<1x16xf32>
    %53 = vector.broadcast %52 : vector<1x16xf32> to vector<2x16xf32>
    %54 = arith.mulf %49, %53 : vector<2x16xf32>
    %55 = vector.extract_strided_slice %28 {offsets = [1, 0], sizes = [1, 16], strides = [1, 1]} : vector<3x16xf32> to vector<1x16xf32>
    %56 = vector.broadcast %55 : vector<1x16xf32> to vector<2x16xf32>
    %57 = arith.mulf %54, %56 : vector<2x16xf32>
    %58 = vector.extract_strided_slice %28 {offsets = [2, 0], sizes = [1, 16], strides = [1, 1]} : vector<3x16xf32> to vector<1x16xf32>
    %59 = vector.broadcast %58 : vector<1x16xf32> to vector<2x16xf32>
    %60 = arith.addf %57, %59 : vector<2x16xf32>
    %cst_35 = arith.constant 0.000000e+00 : f32
    %61 = vector.broadcast %cst_35 : f32 to vector<2x16xf32>
    %62 = arith.cmpf oge, %60, %61 : vector<2x16xf32>
    %cst_36 = arith.constant 2.000000e-01 : f32
    %63 = vector.broadcast %cst_36 : f32 to vector<2x16xf32>
    %64 = arith.mulf %63, %60 : vector<2x16xf32>
    %65 = arith.select %62, %60, %64 : vector<2x16xi1>, vector<2x16xf32>
    %66 = arith.truncf %65 : vector<2x16xf32> to vector<2x16xbf16>
    %c0_37 = arith.constant 0 : index
    %c0_38 = arith.constant 0 : index
    %67 = vector.load %arg4[%c0_37, %c0_38] : memref<16x512xbf16, #tpu.memory_space<vmem>>, vector<16x512xbf16>
    %cst_39 = arith.constant dense<0.000000e+00> : vector<2x512xf32>
    %68 = tpu.matmul %66, %67, %cst_39 {dimension_numbers = #tpu.dot_dimension_numbers<[1], [0], [0], [1], [0, 0, 1, 1], [], []>} : vector<2x16xbf16>, vector<16x512xbf16>, vector<2x512xf32> -> vector<2x512xf32>
    %c0_40 = arith.constant 0 : index
    %c0_41 = arith.constant 0 : index
    %69 = vector.load %arg1[%c0_40, %c0_41] : memref<2x16xf32, #tpu.memory_space<vmem>>, vector<2x16xf32>
    %70 = arith.truncf %69 : vector<2x16xf32> to vector<2x16xbf16>
    %c0_42 = arith.constant 0 : index
    %c0_43 = arith.constant 0 : index
    %71 = vector.load %arg5[%c0_42, %c0_43] : memref<16x512xbf16, #tpu.memory_space<vmem>>, vector<16x512xbf16>
    %cst_44 = arith.constant dense<0.000000e+00> : vector<2x512xf32>
    %72 = tpu.matmul %70, %71, %cst_44 {dimension_numbers = #tpu.dot_dimension_numbers<[1], [0], [0], [1], [0, 0, 1, 1], [], []>} : vector<2x16xbf16>, vector<16x512xbf16>, vector<2x512xf32> -> vector<2x512xf32>
    %73 = arith.addf %68, %72 : vector<2x512xf32>
    %cst_45 = arith.constant dense<0.000000e+00> : vector<512xf32>
    %74 = vector.multi_reduction <add>, %73, %cst_45 [0] : vector<2x512xf32> to vector<512xf32>
    %75 = vector.shape_cast %74 : vector<512xf32> to vector<1x512xf32>
    %c0_46 = arith.constant 0 : index
    %c0_47 = arith.constant 0 : index
    %76 = vector.load %arg7[%c0_46, %c0_47] : memref<512x32xf32, #tpu.memory_space<vmem>>, vector<512x32xf32>
    %cst_48 = arith.constant dense<0.000000e+00> : vector<1x32xf32>
    %77 = tpu.matmul %75, %76, %cst_48 {dimension_numbers = #tpu.dot_dimension_numbers<[1], [0], [0], [1], [0, 0, 1, 1], [], []>} : vector<1x512xf32>, vector<512x32xf32>, vector<1x32xf32> -> vector<1x32xf32>
    %78 = arith.mulf %73, %73 : vector<2x512xf32>
    %cst_49 = arith.constant dense<0.000000e+00> : vector<512xf32>
    %79 = vector.multi_reduction <add>, %78, %cst_49 [0] : vector<2x512xf32> to vector<512xf32>
    %80 = vector.shape_cast %79 : vector<512xf32> to vector<1x512xf32>
    %c0_50 = arith.constant 0 : index
    %c0_51 = arith.constant 0 : index
    %81 = vector.load %arg7[%c0_50, %c0_51] : memref<512x32xf32, #tpu.memory_space<vmem>>, vector<512x32xf32>
    %cst_52 = arith.constant dense<0.000000e+00> : vector<1x32xf32>
    %82 = tpu.matmul %80, %81, %cst_52 {dimension_numbers = #tpu.dot_dimension_numbers<[1], [0], [0], [1], [0, 0, 1, 1], [], []>} : vector<1x512xf32>, vector<512x32xf32>, vector<1x32xf32> -> vector<1x32xf32>
    %cst_53 = arith.constant 3.200000e+01 : f32
    %83 = vector.broadcast %cst_53 : f32 to vector<1x32xf32>
    %84 = arith.divf %77, %83 : vector<1x32xf32>
    %cst_54 = arith.constant 3.200000e+01 : f32
    %85 = vector.broadcast %cst_54 : f32 to vector<1x32xf32>
    %86 = arith.divf %82, %85 : vector<1x32xf32>
    %87 = arith.mulf %84, %84 : vector<1x32xf32>
    %88 = arith.subf %86, %87 : vector<1x32xf32>
    %cst_55 = arith.constant 0.000000e+00 : f32
    %89 = vector.broadcast %cst_55 : f32 to vector<1x32xf32>
    %90 = arith.maximumf %88, %89 : vector<1x32xf32>
    %c0_56 = arith.constant 0 : index
    %c0_57 = arith.constant 0 : index
    %91 = vector.load %arg6[%c0_56, %c0_57] : memref<2x32xf32, #tpu.memory_space<vmem>>, vector<2x32xf32>
    %92 = vector.extract_strided_slice %91 {offsets = [0, 0], sizes = [1, 32], strides = [1, 1]} : vector<2x32xf32> to vector<1x32xf32>
    %cst_58 = arith.constant 9.99999974E-6 : f32
    %93 = vector.broadcast %cst_58 : f32 to vector<1x32xf32>
    %94 = arith.addf %90, %93 : vector<1x32xf32>
    %95 = math.rsqrt %94 : vector<1x32xf32>
    %96 = arith.mulf %92, %95 : vector<1x32xf32>
    %97 = vector.extract_strided_slice %91 {offsets = [1, 0], sizes = [1, 32], strides = [1, 1]} : vector<2x32xf32> to vector<1x32xf32>
    %98 = arith.mulf %84, %96 : vector<1x32xf32>
    %99 = arith.subf %97, %98 : vector<1x32xf32>
    %c0_59 = arith.constant 0 : index
    %c0_60 = arith.constant 0 : index
    %100 = vector.load %arg8[%c0_59, %c0_60] : memref<32x512xf32, #tpu.memory_space<vmem>>, vector<32x512xf32>
    %cst_61 = arith.constant dense<0.000000e+00> : vector<1x512xf32>
    %101 = tpu.matmul %96, %100, %cst_61 {dimension_numbers = #tpu.dot_dimension_numbers<[1], [0], [0], [1], [0, 0, 1, 1], [], []>} : vector<1x32xf32>, vector<32x512xf32>, vector<1x512xf32> -> vector<1x512xf32>
    %c0_62 = arith.constant 0 : index
    %c0_63 = arith.constant 0 : index
    %102 = vector.load %arg8[%c0_62, %c0_63] : memref<32x512xf32, #tpu.memory_space<vmem>>, vector<32x512xf32>
    %cst_64 = arith.constant dense<0.000000e+00> : vector<1x512xf32>
    %103 = tpu.matmul %99, %102, %cst_64 {dimension_numbers = #tpu.dot_dimension_numbers<[1], [0], [0], [1], [0, 0, 1, 1], [], []>} : vector<1x32xf32>, vector<32x512xf32>, vector<1x512xf32> -> vector<1x512xf32>
    %104 = vector.broadcast %101 : vector<1x512xf32> to vector<2x512xf32>
    %105 = arith.mulf %73, %104 : vector<2x512xf32>
    %106 = vector.broadcast %103 : vector<1x512xf32> to vector<2x512xf32>
    %107 = arith.addf %105, %106 : vector<2x512xf32>
    %cst_65 = arith.constant 0.000000e+00 : f32
    %108 = vector.broadcast %cst_65 : f32 to vector<2x512xf32>
    %109 = arith.maximumf %107, %108 : vector<2x512xf32>
    %110 = vector.extract_strided_slice %109 {offsets = [0, 0], sizes = [2, 128], strides = [1, 1]} : vector<2x512xf32> to vector<2x128xf32>
    %c0_66 = arith.constant 0 : index
    %c1 = arith.constant 1 : index
    %c0_67 = arith.constant 0 : index
    %111 = vector.load %arg31[%c0_66, %c1, %c0_67] : memref<2x6x128xf32, #tpu.memory_space<vmem>>, vector<2x1x128xf32>
    %112 = vector.shape_cast %111 : vector<2x1x128xf32> to vector<2x128xf32>
    %113 = vector.shape_cast %110 : vector<2x128xf32> to vector<2x1x128xf32>
    tpu.vector_store %arg31[%c0_66, %c1, %c0_67], %113 {strides = array<i32>} : memref<2x6x128xf32, #tpu.memory_space<vmem>>, vector<2x1x128xf32>,
    %114 = vector.extract_strided_slice %109 {offsets = [0, 128], sizes = [2, 128], strides = [1, 1]} : vector<2x512xf32> to vector<2x128xf32>
    %c0_68 = arith.constant 0 : index
    %c2 = arith.constant 2 : index
    %c0_69 = arith.constant 0 : index
    %115 = vector.load %arg31[%c0_68, %c2, %c0_69] : memref<2x6x128xf32, #tpu.memory_space<vmem>>, vector<2x1x128xf32>
    %116 = vector.shape_cast %115 : vector<2x1x128xf32> to vector<2x128xf32>
    %117 = vector.shape_cast %114 : vector<2x128xf32> to vector<2x1x128xf32>
    tpu.vector_store %arg31[%c0_68, %c2, %c0_69], %117 {strides = array<i32>} : memref<2x6x128xf32, #tpu.memory_space<vmem>>, vector<2x1x128xf32>,
    %118 = vector.extract_strided_slice %109 {offsets = [0, 256], sizes = [2, 128], strides = [1, 1]} : vector<2x512xf32> to vector<2x128xf32>
    %c0_70 = arith.constant 0 : index
    %c3 = arith.constant 3 : index
    %c0_71 = arith.constant 0 : index
    %119 = vector.load %arg31[%c0_70, %c3, %c0_71] : memref<2x6x128xf32, #tpu.memory_space<vmem>>, vector<2x1x128xf32>
    %120 = vector.shape_cast %119 : vector<2x1x128xf32> to vector<2x128xf32>
    %121 = vector.shape_cast %118 : vector<2x128xf32> to vector<2x1x128xf32>
    tpu.vector_store %arg31[%c0_70, %c3, %c0_71], %121 {strides = array<i32>} : memref<2x6x128xf32, #tpu.memory_space<vmem>>, vector<2x1x128xf32>,
    %122 = vector.extract_strided_slice %109 {offsets = [0, 384], sizes = [2, 128], strides = [1, 1]} : vector<2x512xf32> to vector<2x128xf32>
    %c0_72 = arith.constant 0 : index
    %c4 = arith.constant 4 : index
    %c0_73 = arith.constant 0 : index
    %123 = vector.load %arg31[%c0_72, %c4, %c0_73] : memref<2x6x128xf32, #tpu.memory_space<vmem>>, vector<2x1x128xf32>
    %124 = vector.shape_cast %123 : vector<2x1x128xf32> to vector<2x128xf32>
    %125 = vector.shape_cast %122 : vector<2x128xf32> to vector<2x1x128xf32>
    tpu.vector_store %arg31[%c0_72, %c4, %c0_73], %125 {strides = array<i32>} : memref<2x6x128xf32, #tpu.memory_space<vmem>>, vector<2x1x128xf32>,
    %c0_74 = arith.constant 0 : index
    %c0_75 = arith.constant 0 : index
    %c0_76 = arith.constant 0 : index
    %126 = vector.load %arg31[%c0_74, %c0_75, %c0_76] : memref<2x6x128xf32, #tpu.memory_space<vmem>>, vector<2x4x128xf32>
    %c0_77 = arith.constant 0 : index
    %c1_78 = arith.constant 1 : index
    %c0_79 = arith.constant 0 : index
    %127 = vector.load %arg31[%c0_77, %c1_78, %c0_79] : memref<2x6x128xf32, #tpu.memory_space<vmem>>, vector<2x4x128xf32>
    %128 = tpu.concatenate %126, %127 in 2 : vector<2x4x128xf32>, vector<2x4x128xf32> -> vector<2x4x256xf32>
    %129 = vector.shape_cast %128 : vector<2x4x256xf32> to vector<8x256xf32>
    %130 = arith.truncf %129 : vector<8x256xf32> to vector<8x256xbf16>
    %c0_80 = arith.constant 0 : index
    %c0_81 = arith.constant 0 : index
    %131 = vector.load %arg9[%c0_80, %c0_81] : memref<256x128xbf16, #tpu.memory_space<vmem>>, vector<256x128xbf16>
    %cst_82 = arith.constant dense<0.000000e+00> : vector<8x128xf32>
    %132 = tpu.matmul %130, %131, %cst_82 {dimension_numbers = #tpu.dot_dimension_numbers<[1], [0], [0], [1], [0, 0, 1, 1], [], []>} : vector<8x256xbf16>, vector<256x128xbf16>, vector<8x128xf32> -> vector<8x128xf32>
    %c0_83 = arith.constant 0 : index
    %c1_84 = arith.constant 1 : index
    %c0_85 = arith.constant 0 : index
    %133 = vector.load %arg31[%c0_83, %c1_84, %c0_85] : memref<2x6x128xf32, #tpu.memory_space<vmem>>, vector<2x4x128xf32>
    %c0_86 = arith.constant 0 : index
    %c2_87 = arith.constant 2 : index
    %c0_88 = arith.constant 0 : index
    %134 = vector.load %arg31[%c0_86, %c2_87, %c0_88] : memref<2x6x128xf32, #tpu.memory_space<vmem>>, vector<2x4x128xf32>
    %135 = tpu.concatenate %133, %134 in 2 : vector<2x4x128xf32>, vector<2x4x128xf32> -> vector<2x4x256xf32>
    %136 = vector.shape_cast %135 : vector<2x4x256xf32> to vector<8x256xf32>
    %137 = arith.truncf %136 : vector<8x256xf32> to vector<8x256xbf16>
    %c0_89 = arith.constant 0 : index
    %c0_90 = arith.constant 0 : index
    %138 = vector.load %arg10[%c0_89, %c0_90] : memref<256x128xbf16, #tpu.memory_space<vmem>>, vector<256x128xbf16>
    %cst_91 = arith.constant dense<0.000000e+00> : vector<8x128xf32>
    %139 = tpu.matmul %137, %138, %cst_91 {dimension_numbers = #tpu.dot_dimension_numbers<[1], [0], [0], [1], [0, 0, 1, 1], [], []>} : vector<8x256xbf16>, vector<256x128xbf16>, vector<8x128xf32> -> vector<8x128xf32>
    %cst_92 = arith.constant dense<0.000000e+00> : vector<128xf32>
    %140 = vector.multi_reduction <add>, %132, %cst_92 [0] : vector<8x128xf32> to vector<128xf32>
    %141 = vector.shape_cast %140 : vector<128xf32> to vector<1x128xf32>
    %cst_93 = arith.constant dense<0.000000e+00> : vector<128xf32>
    %142 = vector.multi_reduction <add>, %139, %cst_93 [0] : vector<8x128xf32> to vector<128xf32>
    %143 = vector.shape_cast %142 : vector<128xf32> to vector<1x128xf32>
    %144 = arith.addf %141, %143 : vector<1x128xf32>
    %145 = arith.mulf %132, %132 : vector<8x128xf32>
    %cst_94 = arith.constant dense<0.000000e+00> : vector<128xf32>
    %146 = vector.multi_reduction <add>, %145, %cst_94 [0] : vector<8x128xf32> to vector<128xf32>
    %147 = vector.shape_cast %146 : vector<128xf32> to vector<1x128xf32>
    %148 = arith.mulf %139, %139 : vector<8x128xf32>
    %cst_95 = arith.constant dense<0.000000e+00> : vector<128xf32>
    %149 = vector.multi_reduction <add>, %148, %cst_95 [0] : vector<8x128xf32> to vector<128xf32>
    %150 = vector.shape_cast %149 : vector<128xf32> to vector<1x128xf32>
    %151 = arith.addf %147, %150 : vector<1x128xf32>
    %c0_96 = arith.constant 0 : index
    %c0_97 = arith.constant 0 : index
    %152 = vector.load %arg13[%c0_96, %c0_97] : memref<128x16xf32, #tpu.memory_space<vmem>>, vector<128x16xf32>
    %cst_98 = arith.constant dense<0.000000e+00> : vector<1x16xf32>
    %153 = tpu.matmul %144, %152, %cst_98 {dimension_numbers = #tpu.dot_dimension_numbers<[1], [0], [0], [1], [0, 0, 1, 1], [], []>} : vector<1x128xf32>, vector<128x16xf32>, vector<1x16xf32> -> vector<1x16xf32>
    %c0_99 = arith.constant 0 : index
    %c0_100 = arith.constant 0 : index
    %154 = vector.load %arg13[%c0_99, %c0_100] : memref<128x16xf32, #tpu.memory_space<vmem>>, vector<128x16xf32>
    %cst_101 = arith.constant dense<0.000000e+00> : vector<1x16xf32>
    %155 = tpu.matmul %151, %154, %cst_101 {dimension_numbers = #tpu.dot_dimension_numbers<[1], [0], [0], [1], [0, 0, 1, 1], [], []>} : vector<1x128xf32>, vector<128x16xf32>, vector<1x16xf32> -> vector<1x16xf32>
    %cst_102 = arith.constant 1.280000e+02 : f32
    %156 = vector.broadcast %cst_102 : f32 to vector<1x16xf32>
    %157 = arith.divf %153, %156 : vector<1x16xf32>
    %cst_103 = arith.constant 1.280000e+02 : f32
    %158 = vector.broadcast %cst_103 : f32 to vector<1x16xf32>
    %159 = arith.divf %155, %158 : vector<1x16xf32>
    %160 = arith.mulf %157, %157 : vector<1x16xf32>
    %161 = arith.subf %159, %160 : vector<1x16xf32>
    %cst_104 = arith.constant 0.000000e+00 : f32
    %162 = vector.broadcast %cst_104 : f32 to vector<1x16xf32>
    %163 = arith.maximumf %161, %162 : vector<1x16xf32>
    %c0_105 = arith.constant 0 : index
    %c0_106 = arith.constant 0 : index
    %164 = vector.load %arg12[%c0_105, %c0_106] : memref<2x16xf32, #tpu.memory_space<vmem>>, vector<2x16xf32>
    %165 = vector.extract_strided_slice %164 {offsets = [0, 0], sizes = [1, 16], strides = [1, 1]} : vector<2x16xf32> to vector<1x16xf32>
    %cst_107 = arith.constant 9.99999974E-6 : f32
    %166 = vector.broadcast %cst_107 : f32 to vector<1x16xf32>
    %167 = arith.addf %163, %166 : vector<1x16xf32>
    %168 = math.rsqrt %167 : vector<1x16xf32>
    %169 = arith.mulf %165, %168 : vector<1x16xf32>
    %170 = vector.extract_strided_slice %164 {offsets = [1, 0], sizes = [1, 16], strides = [1, 1]} : vector<2x16xf32> to vector<1x16xf32>
    %171 = arith.mulf %157, %169 : vector<1x16xf32>
    %172 = arith.subf %170, %171 : vector<1x16xf32>
    %c0_108 = arith.constant 0 : index
    %c0_109 = arith.constant 0 : index
    %173 = vector.load %arg14[%c0_108, %c0_109] : memref<16x128xf32, #tpu.memory_space<vmem>>, vector<16x128xf32>
    %cst_110 = arith.constant dense<0.000000e+00> : vector<1x128xf32>
    %174 = tpu.matmul %169, %173, %cst_110 {dimension_numbers = #tpu.dot_dimension_numbers<[1], [0], [0], [1], [0, 0, 1, 1], [], []>} : vector<1x16xf32>, vector<16x128xf32>, vector<1x128xf32> -> vector<1x128xf32>
    %c0_111 = arith.constant 0 : index
    %c0_112 = arith.constant 0 : index
    %175 = vector.load %arg14[%c0_111, %c0_112] : memref<16x128xf32, #tpu.memory_space<vmem>>, vector<16x128xf32>
    %cst_113 = arith.constant dense<0.000000e+00> : vector<1x128xf32>
    %176 = tpu.matmul %172, %175, %cst_113 {dimension_numbers = #tpu.dot_dimension_numbers<[1], [0], [0], [1], [0, 0, 1, 1], [], []>} : vector<1x16xf32>, vector<16x128xf32>, vector<1x128xf32> -> vector<1x128xf32>
    %177 = vector.broadcast %174 : vector<1x128xf32> to vector<8x128xf32>
    %178 = arith.mulf %132, %177 : vector<8x128xf32>
    %179 = vector.broadcast %176 : vector<1x128xf32> to vector<8x128xf32>
    %180 = arith.addf %178, %179 : vector<8x128xf32>
    %cst_114 = arith.constant 0.000000e+00 : f32
    %181 = vector.broadcast %cst_114 : f32 to vector<8x128xf32>
    %182 = arith.maximumf %180, %181 : vector<8x128xf32>
    %183 = vector.broadcast %174 : vector<1x128xf32> to vector<8x128xf32>
    %184 = arith.mulf %139, %183 : vector<8x128xf32>
    %185 = vector.broadcast %176 : vector<1x128xf32> to vector<8x128xf32>
    %186 = arith.addf %184, %185 : vector<8x128xf32>
    %cst_115 = arith.constant 0.000000e+00 : f32
    %187 = vector.broadcast %cst_115 : f32 to vector<8x128xf32>
    %188 = arith.maximumf %186, %187 : vector<8x128xf32>
    %189 = tpu.concatenate %182, %188 in 0 : vector<8x128xf32>, vector<8x128xf32> -> vector<16x128xf32>
    %190 = arith.truncf %189 : vector<16x128xf32> to vector<16x128xbf16>
    %c0_116 = arith.constant 0 : index
    %c0_117 = arith.constant 0 : index
    %191 = vector.load %arg11[%c0_116, %c0_117] : memref<16x16xbf16, #tpu.memory_space<vmem>>, vector<16x16xbf16>
    %cst_118 = arith.constant dense<0.000000e+00> : vector<16x128xf32>
    %192 = tpu.matmul %191, %190, %cst_118 {dimension_numbers = #tpu.dot_dimension_numbers<[1], [0], [0], [1], [0, 0, 1, 1], [], []>} : vector<16x16xbf16>, vector<16x128xbf16>, vector<16x128xf32> -> vector<16x128xf32>
    %193 = vector.shape_cast %192 : vector<16x128xf32> to vector<2x8x128xf32>
    %c0_119 = arith.constant 0 : index
    %c1_120 = arith.constant 1 : index
    %c0_121 = arith.constant 0 : index
    %194 = vector.load %arg32[%c0_119, %c1_120, %c0_121] : memref<2x10x128xf32, #tpu.memory_space<vmem>>, vector<2x8x128xf32>
    tpu.vector_store %arg32[%c0_119, %c1_120, %c0_121], %193 {strides = array<i32>} : memref<2x10x128xf32, #tpu.memory_space<vmem>>, vector<2x8x128xf32>,
    %c0_122 = arith.constant 0 : index
    %c0_123 = arith.constant 0 : index
    %c0_124 = arith.constant 0 : index
    %195 = vector.load %arg32[%c0_122, %c0_123, %c0_124] : memref<2x10x128xf32, #tpu.memory_space<vmem>>, vector<2x8x128xf32>
    %c0_125 = arith.constant 0 : index
    %c1_126 = arith.constant 1 : index
    %c0_127 = arith.constant 0 : index
    %196 = vector.load %arg32[%c0_125, %c1_126, %c0_127] : memref<2x10x128xf32, #tpu.memory_space<vmem>>, vector<2x8x128xf32>
    %197 = tpu.concatenate %195, %196 in 2 : vector<2x8x128xf32>, vector<2x8x128xf32> -> vector<2x8x256xf32>
    %198 = vector.shape_cast %197 : vector<2x8x256xf32> to vector<16x256xf32>
    %199 = arith.truncf %198 : vector<16x256xf32> to vector<16x256xbf16>
    %c0_128 = arith.constant 0 : index
    %c0_129 = arith.constant 0 : index
    %200 = vector.load %arg15[%c0_128, %c0_129] : memref<256x128xbf16, #tpu.memory_space<vmem>>, vector<256x128xbf16>
    %cst_130 = arith.constant dense<0.000000e+00> : vector<16x128xf32>
    %201 = tpu.matmul %199, %200, %cst_130 {dimension_numbers = #tpu.dot_dimension_numbers<[1], [0], [0], [1], [0, 0, 1, 1], [], []>} : vector<16x256xbf16>, vector<256x128xbf16>, vector<16x128xf32> -> vector<16x128xf32>
    %c0_131 = arith.constant 0 : index
    %c1_132 = arith.constant 1 : index
    %c0_133 = arith.constant 0 : index
    %202 = vector.load %arg32[%c0_131, %c1_132, %c0_133] : memref<2x10x128xf32, #tpu.memory_space<vmem>>, vector<2x8x128xf32>
    %c0_134 = arith.constant 0 : index
    %c2_135 = arith.constant 2 : index
    %c0_136 = arith.constant 0 : index
    %203 = vector.load %arg32[%c0_134, %c2_135, %c0_136] : memref<2x10x128xf32, #tpu.memory_space<vmem>>, vector<2x8x128xf32>
    %204 = tpu.concatenate %202, %203 in 2 : vector<2x8x128xf32>, vector<2x8x128xf32> -> vector<2x8x256xf32>
    %205 = vector.shape_cast %204 : vector<2x8x256xf32> to vector<16x256xf32>
    %206 = arith.truncf %205 : vector<16x256xf32> to vector<16x256xbf16>
    %c0_137 = arith.constant 0 : index
    %c0_138 = arith.constant 0 : index
    %207 = vector.load %arg16[%c0_137, %c0_138] : memref<256x128xbf16, #tpu.memory_space<vmem>>, vector<256x128xbf16>
    %cst_139 = arith.constant dense<0.000000e+00> : vector<16x128xf32>
    %208 = tpu.matmul %206, %207, %cst_139 {dimension_numbers = #tpu.dot_dimension_numbers<[1], [0], [0], [1], [0, 0, 1, 1], [], []>} : vector<16x256xbf16>, vector<256x128xbf16>, vector<16x128xf32> -> vector<16x128xf32>
    %cst_140 = arith.constant dense<0.000000e+00> : vector<128xf32>
    %209 = vector.multi_reduction <add>, %201, %cst_140 [0] : vector<16x128xf32> to vector<128xf32>
    %210 = vector.shape_cast %209 : vector<128xf32> to vector<1x128xf32>
    %cst_141 = arith.constant dense<0.000000e+00> : vector<128xf32>
    %211 = vector.multi_reduction <add>, %208, %cst_141 [0] : vector<16x128xf32> to vector<128xf32>
    %212 = vector.shape_cast %211 : vector<128xf32> to vector<1x128xf32>
    %213 = arith.addf %210, %212 : vector<1x128xf32>
    %214 = arith.mulf %201, %201 : vector<16x128xf32>
    %cst_142 = arith.constant dense<0.000000e+00> : vector<128xf32>
    %215 = vector.multi_reduction <add>, %214, %cst_142 [0] : vector<16x128xf32> to vector<128xf32>
    %216 = vector.shape_cast %215 : vector<128xf32> to vector<1x128xf32>
    %217 = arith.mulf %208, %208 : vector<16x128xf32>
    %cst_143 = arith.constant dense<0.000000e+00> : vector<128xf32>
    %218 = vector.multi_reduction <add>, %217, %cst_143 [0] : vector<16x128xf32> to vector<128xf32>
    %219 = vector.shape_cast %218 : vector<128xf32> to vector<1x128xf32>
    %220 = arith.addf %216, %219 : vector<1x128xf32>
    %c0_144 = arith.constant 0 : index
    %c0_145 = arith.constant 0 : index
    %221 = vector.load %arg19[%c0_144, %c0_145] : memref<128x8xf32, #tpu.memory_space<vmem>>, vector<128x8xf32>
    %cst_146 = arith.constant dense<0.000000e+00> : vector<1x8xf32>
    %222 = tpu.matmul %213, %221, %cst_146 {dimension_numbers = #tpu.dot_dimension_numbers<[1], [0], [0], [1], [0, 0, 1, 1], [], []>} : vector<1x128xf32>, vector<128x8xf32>, vector<1x8xf32> -> vector<1x8xf32>
    %c0_147 = arith.constant 0 : index
    %c0_148 = arith.constant 0 : index
    %223 = vector.load %arg19[%c0_147, %c0_148] : memref<128x8xf32, #tpu.memory_space<vmem>>, vector<128x8xf32>
    %cst_149 = arith.constant dense<0.000000e+00> : vector<1x8xf32>
    %224 = tpu.matmul %220, %223, %cst_149 {dimension_numbers = #tpu.dot_dimension_numbers<[1], [0], [0], [1], [0, 0, 1, 1], [], []>} : vector<1x128xf32>, vector<128x8xf32>, vector<1x8xf32> -> vector<1x8xf32>
    %cst_150 = arith.constant 5.120000e+02 : f32
    %225 = vector.broadcast %cst_150 : f32 to vector<1x8xf32>
    %226 = arith.divf %222, %225 : vector<1x8xf32>
    %cst_151 = arith.constant 5.120000e+02 : f32
    %227 = vector.broadcast %cst_151 : f32 to vector<1x8xf32>
    %228 = arith.divf %224, %227 : vector<1x8xf32>
    %229 = arith.mulf %226, %226 : vector<1x8xf32>
    %230 = arith.subf %228, %229 : vector<1x8xf32>
    %cst_152 = arith.constant 0.000000e+00 : f32
    %231 = vector.broadcast %cst_152 : f32 to vector<1x8xf32>
    %232 = arith.maximumf %230, %231 : vector<1x8xf32>
    %c0_153 = arith.constant 0 : index
    %c0_154 = arith.constant 0 : index
    %233 = vector.load %arg18[%c0_153, %c0_154] : memref<2x8xf32, #tpu.memory_space<vmem>>, vector<2x8xf32>
    %234 = vector.extract_strided_slice %233 {offsets = [0, 0], sizes = [1, 8], strides = [1, 1]} : vector<2x8xf32> to vector<1x8xf32>
    %cst_155 = arith.constant 9.99999974E-6 : f32
    %235 = vector.broadcast %cst_155 : f32 to vector<1x8xf32>
    %236 = arith.addf %232, %235 : vector<1x8xf32>
    %237 = math.rsqrt %236 : vector<1x8xf32>
    %238 = arith.mulf %234, %237 : vector<1x8xf32>
    %239 = vector.extract_strided_slice %233 {offsets = [1, 0], sizes = [1, 8], strides = [1, 1]} : vector<2x8xf32> to vector<1x8xf32>
    %240 = arith.mulf %226, %238 : vector<1x8xf32>
    %241 = arith.subf %239, %240 : vector<1x8xf32>
    %c0_156 = arith.constant 0 : index
    %c0_157 = arith.constant 0 : index
    %242 = vector.load %arg20[%c0_156, %c0_157] : memref<8x128xf32, #tpu.memory_space<vmem>>, vector<8x128xf32>
    %cst_158 = arith.constant dense<0.000000e+00> : vector<1x128xf32>
    %243 = tpu.matmul %238, %242, %cst_158 {dimension_numbers = #tpu.dot_dimension_numbers<[1], [0], [0], [1], [0, 0, 1, 1], [], []>} : vector<1x8xf32>, vector<8x128xf32>, vector<1x128xf32> -> vector<1x128xf32>
    %c0_159 = arith.constant 0 : index
    %c0_160 = arith.constant 0 : index
    %244 = vector.load %arg20[%c0_159, %c0_160] : memref<8x128xf32, #tpu.memory_space<vmem>>, vector<8x128xf32>
    %cst_161 = arith.constant dense<0.000000e+00> : vector<1x128xf32>
    %245 = tpu.matmul %241, %244, %cst_161 {dimension_numbers = #tpu.dot_dimension_numbers<[1], [0], [0], [1], [0, 0, 1, 1], [], []>} : vector<1x8xf32>, vector<8x128xf32>, vector<1x128xf32> -> vector<1x128xf32>
    %246 = vector.broadcast %243 : vector<1x128xf32> to vector<16x128xf32>
    %247 = arith.mulf %201, %246 : vector<16x128xf32>
    %248 = vector.broadcast %245 : vector<1x128xf32> to vector<16x128xf32>
    %249 = arith.addf %247, %248 : vector<16x128xf32>
    %cst_162 = arith.constant 0.000000e+00 : f32
    %250 = vector.broadcast %cst_162 : f32 to vector<16x128xf32>
    %251 = arith.maximumf %249, %250 : vector<16x128xf32>
    %252 = vector.broadcast %243 : vector<1x128xf32> to vector<16x128xf32>
    %253 = arith.mulf %208, %252 : vector<16x128xf32>
    %254 = vector.broadcast %245 : vector<1x128xf32> to vector<16x128xf32>
    %255 = arith.addf %253, %254 : vector<16x128xf32>
    %cst_163 = arith.constant 0.000000e+00 : f32
    %256 = vector.broadcast %cst_163 : f32 to vector<16x128xf32>
    %257 = arith.maximumf %255, %256 : vector<16x128xf32>
    %258 = tpu.concatenate %251, %257 in 0 : vector<16x128xf32>, vector<16x128xf32> -> vector<32x128xf32>
    %259 = arith.truncf %258 : vector<32x128xf32> to vector<32x128xbf16>
    %c0_164 = arith.constant 0 : index
    %c0_165 = arith.constant 0 : index
    %260 = vector.load %arg17[%c0_164, %c0_165] : memref<32x32xbf16, #tpu.memory_space<vmem>>, vector<32x32xbf16>
    %cst_166 = arith.constant dense<0.000000e+00> : vector<32x128xf32>
    %261 = tpu.matmul %260, %259, %cst_166 {dimension_numbers = #tpu.dot_dimension_numbers<[1], [0], [0], [1], [0, 0, 1, 1], [], []>} : vector<32x32xbf16>, vector<32x128xbf16>, vector<32x128xf32> -> vector<32x128xf32>
    %262 = vector.shape_cast %261 : vector<32x128xf32> to vector<2x16x128xf32>
    %c0_167 = arith.constant 0 : index
    %c1_168 = arith.constant 1 : index
    %c0_169 = arith.constant 0 : index
    %263 = vector.load %arg33[%c0_167, %c1_168, %c0_169] : memref<2x18x128xf32, #tpu.memory_space<vmem>>, vector<2x16x128xf32>
    tpu.vector_store %arg33[%c0_167, %c1_168, %c0_169], %262 {strides = array<i32>} : memref<2x18x128xf32, #tpu.memory_space<vmem>>, vector<2x16x128xf32>,
    %c0_170 = arith.constant 0 : index
    %c0_171 = arith.constant 0 : index
    %c0_172 = arith.constant 0 : index
    %264 = vector.load %arg33[%c0_170, %c0_171, %c0_172] : memref<2x18x128xf32, #tpu.memory_space<vmem>>, vector<2x16x128xf32>
    %c0_173 = arith.constant 0 : index
    %c1_174 = arith.constant 1 : index
    %c0_175 = arith.constant 0 : index
    %265 = vector.load %arg33[%c0_173, %c1_174, %c0_175] : memref<2x18x128xf32, #tpu.memory_space<vmem>>, vector<2x16x128xf32>
    %266 = tpu.concatenate %264, %265 in 2 : vector<2x16x128xf32>, vector<2x16x128xf32> -> vector<2x16x256xf32>
    %267 = vector.shape_cast %266 : vector<2x16x256xf32> to vector<32x256xf32>
    %268 = arith.truncf %267 : vector<32x256xf32> to vector<32x256xbf16>
    %c0_176 = arith.constant 0 : index
    %c0_177 = arith.constant 0 : index
    %269 = vector.load %arg21[%c0_176, %c0_177] : memref<256x128xbf16, #tpu.memory_space<vmem>>, vector<256x128xbf16>
    %cst_178 = arith.constant dense<0.000000e+00> : vector<32x128xf32>
    %270 = tpu.matmul %268, %269, %cst_178 {dimension_numbers = #tpu.dot_dimension_numbers<[1], [0], [0], [1], [0, 0, 1, 1], [], []>} : vector<32x256xbf16>, vector<256x128xbf16>, vector<32x128xf32> -> vector<32x128xf32>
    %c0_179 = arith.constant 0 : index
    %c1_180 = arith.constant 1 : index
    %c0_181 = arith.constant 0 : index
    %271 = vector.load %arg33[%c0_179, %c1_180, %c0_181] : memref<2x18x128xf32, #tpu.memory_space<vmem>>, vector<2x16x128xf32>
    %c0_182 = arith.constant 0 : index
    %c2_183 = arith.constant 2 : index
    %c0_184 = arith.constant 0 : index
    %272 = vector.load %arg33[%c0_182, %c2_183, %c0_184] : memref<2x18x128xf32, #tpu.memory_space<vmem>>, vector<2x16x128xf32>
    %273 = tpu.concatenate %271, %272 in 2 : vector<2x16x128xf32>, vector<2x16x128xf32> -> vector<2x16x256xf32>
    %274 = vector.shape_cast %273 : vector<2x16x256xf32> to vector<32x256xf32>
    %275 = arith.truncf %274 : vector<32x256xf32> to vector<32x256xbf16>
    %c0_185 = arith.constant 0 : index
    %c0_186 = arith.constant 0 : index
    %276 = vector.load %arg22[%c0_185, %c0_186] : memref<256x128xbf16, #tpu.memory_space<vmem>>, vector<256x128xbf16>
    %cst_187 = arith.constant dense<0.000000e+00> : vector<32x128xf32>
    %277 = tpu.matmul %275, %276, %cst_187 {dimension_numbers = #tpu.dot_dimension_numbers<[1], [0], [0], [1], [0, 0, 1, 1], [], []>} : vector<32x256xbf16>, vector<256x128xbf16>, vector<32x128xf32> -> vector<32x128xf32>
    %cst_188 = arith.constant dense<0.000000e+00> : vector<128xf32>
    %278 = vector.multi_reduction <add>, %270, %cst_188 [0] : vector<32x128xf32> to vector<128xf32>
    %279 = vector.shape_cast %278 : vector<128xf32> to vector<1x128xf32>
    %cst_189 = arith.constant dense<0.000000e+00> : vector<128xf32>
    %280 = vector.multi_reduction <add>, %277, %cst_189 [0] : vector<32x128xf32> to vector<128xf32>
    %281 = vector.shape_cast %280 : vector<128xf32> to vector<1x128xf32>
    %282 = arith.addf %279, %281 : vector<1x128xf32>
    %283 = arith.mulf %270, %270 : vector<32x128xf32>
    %cst_190 = arith.constant dense<0.000000e+00> : vector<128xf32>
    %284 = vector.multi_reduction <add>, %283, %cst_190 [0] : vector<32x128xf32> to vector<128xf32>
    %285 = vector.shape_cast %284 : vector<128xf32> to vector<1x128xf32>
    %286 = arith.mulf %277, %277 : vector<32x128xf32>
    %cst_191 = arith.constant dense<0.000000e+00> : vector<128xf32>
    %287 = vector.multi_reduction <add>, %286, %cst_191 [0] : vector<32x128xf32> to vector<128xf32>
    %288 = vector.shape_cast %287 : vector<128xf32> to vector<1x128xf32>
    %289 = arith.addf %285, %288 : vector<1x128xf32>
    %c0_192 = arith.constant 0 : index
    %c0_193 = arith.constant 0 : index
    %290 = vector.load %arg25[%c0_192, %c0_193] : memref<128x4xf32, #tpu.memory_space<vmem>>, vector<128x4xf32>
    %cst_194 = arith.constant dense<0.000000e+00> : vector<1x4xf32>
    %291 = tpu.matmul %282, %290, %cst_194 {dimension_numbers = #tpu.dot_dimension_numbers<[1], [0], [0], [1], [0, 0, 1, 1], [], []>} : vector<1x128xf32>, vector<128x4xf32>, vector<1x4xf32> -> vector<1x4xf32>
    %c0_195 = arith.constant 0 : index
    %c0_196 = arith.constant 0 : index
    %292 = vector.load %arg25[%c0_195, %c0_196] : memref<128x4xf32, #tpu.memory_space<vmem>>, vector<128x4xf32>
    %cst_197 = arith.constant dense<0.000000e+00> : vector<1x4xf32>
    %293 = tpu.matmul %289, %292, %cst_197 {dimension_numbers = #tpu.dot_dimension_numbers<[1], [0], [0], [1], [0, 0, 1, 1], [], []>} : vector<1x128xf32>, vector<128x4xf32>, vector<1x4xf32> -> vector<1x4xf32>
    %cst_198 = arith.constant 2.048000e+03 : f32
    %294 = vector.broadcast %cst_198 : f32 to vector<1x4xf32>
    %295 = arith.divf %291, %294 : vector<1x4xf32>
    %cst_199 = arith.constant 2.048000e+03 : f32
    %296 = vector.broadcast %cst_199 : f32 to vector<1x4xf32>
    %297 = arith.divf %293, %296 : vector<1x4xf32>
    %298 = arith.mulf %295, %295 : vector<1x4xf32>
    %299 = arith.subf %297, %298 : vector<1x4xf32>
    %cst_200 = arith.constant 0.000000e+00 : f32
    %300 = vector.broadcast %cst_200 : f32 to vector<1x4xf32>
    %301 = arith.maximumf %299, %300 : vector<1x4xf32>
    %c0_201 = arith.constant 0 : index
    %c0_202 = arith.constant 0 : index
    %302 = vector.load %arg24[%c0_201, %c0_202] : memref<2x4xf32, #tpu.memory_space<vmem>>, vector<2x4xf32>
    %303 = vector.extract_strided_slice %302 {offsets = [0, 0], sizes = [1, 4], strides = [1, 1]} : vector<2x4xf32> to vector<1x4xf32>
    %cst_203 = arith.constant 9.99999974E-6 : f32
    %304 = vector.broadcast %cst_203 : f32 to vector<1x4xf32>
    %305 = arith.addf %301, %304 : vector<1x4xf32>
    %306 = math.rsqrt %305 : vector<1x4xf32>
    %307 = arith.mulf %303, %306 : vector<1x4xf32>
    %308 = vector.extract_strided_slice %302 {offsets = [1, 0], sizes = [1, 4], strides = [1, 1]} : vector<2x4xf32> to vector<1x4xf32>
    %309 = arith.mulf %295, %307 : vector<1x4xf32>
    %310 = arith.subf %308, %309 : vector<1x4xf32>
    %c0_204 = arith.constant 0 : index
    %c0_205 = arith.constant 0 : index
    %311 = vector.load %arg26[%c0_204, %c0_205] : memref<4x128xf32, #tpu.memory_space<vmem>>, vector<4x128xf32>
    %cst_206 = arith.constant dense<0.000000e+00> : vector<1x128xf32>
    %312 = tpu.matmul %307, %311, %cst_206 {dimension_numbers = #tpu.dot_dimension_numbers<[1], [0], [0], [1], [0, 0, 1, 1], [], []>} : vector<1x4xf32>, vector<4x128xf32>, vector<1x128xf32> -> vector<1x128xf32>
    %c0_207 = arith.constant 0 : index
    %c0_208 = arith.constant 0 : index
    %313 = vector.load %arg26[%c0_207, %c0_208] : memref<4x128xf32, #tpu.memory_space<vmem>>, vector<4x128xf32>
    %cst_209 = arith.constant dense<0.000000e+00> : vector<1x128xf32>
    %314 = tpu.matmul %310, %313, %cst_209 {dimension_numbers = #tpu.dot_dimension_numbers<[1], [0], [0], [1], [0, 0, 1, 1], [], []>} : vector<1x4xf32>, vector<4x128xf32>, vector<1x128xf32> -> vector<1x128xf32>
    %315 = vector.broadcast %312 : vector<1x128xf32> to vector<32x128xf32>
    %316 = arith.mulf %270, %315 : vector<32x128xf32>
    %317 = vector.broadcast %314 : vector<1x128xf32> to vector<32x128xf32>
    %318 = arith.addf %316, %317 : vector<32x128xf32>
    %cst_210 = arith.constant 0.000000e+00 : f32
    %319 = vector.broadcast %cst_210 : f32 to vector<32x128xf32>
    %320 = arith.maximumf %318, %319 : vector<32x128xf32>
    %321 = vector.broadcast %312 : vector<1x128xf32> to vector<32x128xf32>
    %322 = arith.mulf %277, %321 : vector<32x128xf32>
    %323 = vector.broadcast %314 : vector<1x128xf32> to vector<32x128xf32>
    %324 = arith.addf %322, %323 : vector<32x128xf32>
    %cst_211 = arith.constant 0.000000e+00 : f32
    %325 = vector.broadcast %cst_211 : f32 to vector<32x128xf32>
    %326 = arith.maximumf %324, %325 : vector<32x128xf32>
    %327 = tpu.concatenate %320, %326 in 0 : vector<32x128xf32>, vector<32x128xf32> -> vector<64x128xf32>
    %328 = arith.truncf %327 : vector<64x128xf32> to vector<64x128xbf16>
    %c0_212 = arith.constant 0 : index
    %c0_213 = arith.constant 0 : index
    %329 = vector.load %arg23[%c0_212, %c0_213] : memref<64x64xbf16, #tpu.memory_space<vmem>>, vector<64x64xbf16>
    %cst_214 = arith.constant dense<0.000000e+00> : vector<64x128xf32>
    %330 = tpu.matmul %329, %328, %cst_214 {dimension_numbers = #tpu.dot_dimension_numbers<[1], [0], [0], [1], [0, 0, 1, 1], [], []>} : vector<64x64xbf16>, vector<64x128xbf16>, vector<64x128xf32> -> vector<64x128xf32>
    %331 = vector.shape_cast %330 : vector<64x128xf32> to vector<2x32x128xf32>
    %c0_215 = arith.constant 0 : index
    %c1_216 = arith.constant 1 : index
    %c0_217 = arith.constant 0 : index
    %332 = vector.load %arg34[%c0_215, %c1_216, %c0_217] : memref<2x34x128xf32, #tpu.memory_space<vmem>>, vector<2x32x128xf32>
    tpu.vector_store %arg34[%c0_215, %c1_216, %c0_217], %331 {strides = array<i32>} : memref<2x34x128xf32, #tpu.memory_space<vmem>>, vector<2x32x128xf32>,
    %c0_218 = arith.constant 0 : index
    %c0_219 = arith.constant 0 : index
    %c0_220 = arith.constant 0 : index
    %333 = vector.load %arg34[%c0_218, %c0_219, %c0_220] : memref<2x34x128xf32, #tpu.memory_space<vmem>>, vector<2x32x128xf32>
    %c0_221 = arith.constant 0 : index
    %c1_222 = arith.constant 1 : index
    %c0_223 = arith.constant 0 : index
    %334 = vector.load %arg34[%c0_221, %c1_222, %c0_223] : memref<2x34x128xf32, #tpu.memory_space<vmem>>, vector<2x32x128xf32>
    %335 = tpu.concatenate %333, %334 in 2 : vector<2x32x128xf32>, vector<2x32x128xf32> -> vector<2x32x256xf32>
    %336 = vector.shape_cast %335 : vector<2x32x256xf32> to vector<64x256xf32>
    %337 = arith.truncf %336 : vector<64x256xf32> to vector<64x256xbf16>
    %c0_224 = arith.constant 0 : index
    %c0_225 = arith.constant 0 : index
    %338 = vector.load %arg27[%c0_224, %c0_225] : memref<256x192xbf16, #tpu.memory_space<vmem>>, vector<256x192xbf16>
    %cst_226 = arith.constant dense<0.000000e+00> : vector<64x192xf32>
    %339 = tpu.matmul %337, %338, %cst_226 {dimension_numbers = #tpu.dot_dimension_numbers<[1], [0], [0], [1], [0, 0, 1, 1], [], []>} : vector<64x256xbf16>, vector<256x192xbf16>, vector<64x192xf32> -> vector<64x192xf32>
    %c0_227 = arith.constant 0 : index
    %c1_228 = arith.constant 1 : index
    %c0_229 = arith.constant 0 : index
    %340 = vector.load %arg34[%c0_227, %c1_228, %c0_229] : memref<2x34x128xf32, #tpu.memory_space<vmem>>, vector<2x32x128xf32>
    %c0_230 = arith.constant 0 : index
    %c2_231 = arith.constant 2 : index
    %c0_232 = arith.constant 0 : index
    %341 = vector.load %arg34[%c0_230, %c2_231, %c0_232] : memref<2x34x128xf32, #tpu.memory_space<vmem>>, vector<2x32x128xf32>
    %342 = tpu.concatenate %340, %341 in 2 : vector<2x32x128xf32>, vector<2x32x128xf32> -> vector<2x32x256xf32>
    %343 = vector.shape_cast %342 : vector<2x32x256xf32> to vector<64x256xf32>
    %344 = arith.truncf %343 : vector<64x256xf32> to vector<64x256xbf16>
    %c0_233 = arith.constant 0 : index
    %c0_234 = arith.constant 0 : index
    %345 = vector.load %arg28[%c0_233, %c0_234] : memref<256x192xbf16, #tpu.memory_space<vmem>>, vector<256x192xbf16>
    %cst_235 = arith.constant dense<0.000000e+00> : vector<64x192xf32>
    %346 = tpu.matmul %344, %345, %cst_235 {dimension_numbers = #tpu.dot_dimension_numbers<[1], [0], [0], [1], [0, 0, 1, 1], [], []>} : vector<64x256xbf16>, vector<256x192xbf16>, vector<64x192xf32> -> vector<64x192xf32>
    %347 = math.tanh %339 : vector<64x192xf32>
    %348 = math.tanh %346 : vector<64x192xf32>
    %349 = tpu.concatenate %347, %348 in 0 : vector<64x192xf32>, vector<64x192xf32> -> vector<128x192xf32>
    %350 = arith.truncf %349 : vector<128x192xf32> to vector<128x192xbf16>
    %c0_236 = arith.constant 0 : index
    %c0_237 = arith.constant 0 : index
    %351 = vector.load %arg29[%c0_236, %c0_237] : memref<128x128xbf16, #tpu.memory_space<vmem>>, vector<128x128xbf16>
    %cst_238 = arith.constant dense<0.000000e+00> : vector<128x192xf32>
    %352 = tpu.matmul %351, %350, %cst_238 {dimension_numbers = #tpu.dot_dimension_numbers<[1], [0], [0], [1], [0, 0, 1, 1], [], []>} : vector<128x128xbf16>, vector<128x192xbf16>, vector<128x192xf32> -> vector<128x192xf32>
    %353 = vector.shape_cast %352 : vector<128x192xf32> to vector<2x64x192xf32>
    %c0_239 = arith.constant 0 : index
    %c0_240 = arith.constant 0 : index
    %c0_241 = arith.constant 0 : index
    %354 = vector.load %arg30[%c0_239, %c0_240, %c0_241] : memref<2x64x192xf32, #tpu.memory_space<vmem>>, vector<2x64x192xf32>
    tpu.vector_store %arg30[%c0_239, %c0_240, %c0_241], %353 {strides = array<i32>} : memref<2x64x192xf32, #tpu.memory_space<vmem>>, vector<2x64x192xf32>,
    return
  }
}

</mosaic_0001>

<llo_original>
// kernel: forward.1
$region0: #{forward.1}
  #allocation0 [shape = 'u32[]', space=smem, size = 0x4, offset = 0x4, fixed_abs, tag = 'smem constant byte address 0x4 - core index']
  #allocation1 [shape = 'u32[72,128]{1,0:T(1,128)}', space=vmem, size = 0x9000, scoped, tag = 'internal scratch']
  #allocation2 [shape = 'f32[2,6,128]{2,1,0:T(8,128)}', space=vmem, size = 0x2000, scoped, tag = 'scratch operand']
  #allocation3 [shape = 'f32[2,10,128]{2,1,0:T(8,128)}', space=vmem, size = 0x4000, scoped, tag = 'scratch operand']
  #allocation4 [shape = 'f32[2,18,128]{2,1,0:T(8,128)}', space=vmem, size = 0x6000, scoped, tag = 'scratch operand']
  #allocation5 [shape = 'f32[2,34,128]{2,1,0:T(8,128)}', space=vmem, size = 0xa000, scoped, tag = 'scratch operand']
  %s0 = inlined_call_operand.smem [shape: u32[31], index: -1, kind: input, shape index: {}]
  %s1 = sld [smem:[%s0]]
  %s2 = scalar_lea.smem %s0, 1
  %s3 = sld [smem:[%s2]]
  %s4 = scalar_lea.smem %s0, 2
  %s5 = sld [smem:[%s4]]
  %s6 = scalar_lea.smem %s0, 3
  %s7 = sld [smem:[%s6]]
  %s8 = scalar_lea.smem %s0, 4
  %s9 = sld [smem:[%s8]]
  %s10 = scalar_lea.smem %s0, 5
  %s11 = sld [smem:[%s10]]
  %s12 = scalar_lea.smem %s0, 6
  %s13 = sld [smem:[%s12]]
  %s14 = scalar_lea.smem %s0, 7
  %s15 = sld [smem:[%s14]]
  %s16 = scalar_lea.smem %s0, 8
  %s17 = sld [smem:[%s16]]
  %s18 = scalar_lea.smem %s0, 9
  %s19 = sld [smem:[%s18]]
  %s20 = scalar_lea.smem %s0, 10
  %s21 = sld [smem:[%s20]]
  %s22 = scalar_lea.smem %s0, 11
  %s23 = sld [smem:[%s22]]
  %s24 = scalar_lea.smem %s0, 12
  %s25 = sld [smem:[%s24]]
  %s26 = scalar_lea.smem %s0, 13
  %s27 = sld [smem:[%s26]]
  %s28 = scalar_lea.smem %s0, 14
  %s29 = sld [smem:[%s28]]
  %s30 = scalar_lea.smem %s0, 15
  %s31 = sld [smem:[%s30]]
  %s32 = scalar_lea.smem %s0, 16
  %s33 = sld [smem:[%s32]]
  %s34 = scalar_lea.smem %s0, 17
  %s35 = sld [smem:[%s34]]
  %s36 = scalar_lea.smem %s0, 18
  %s37 = sld [smem:[%s36]]
  %s38 = scalar_lea.smem %s0, 19
  %s39 = sld [smem:[%s38]]
  %s40 = scalar_lea.smem %s0, 20
  %s41 = sld [smem:[%s40]]
  %s42 = scalar_lea.smem %s0, 21
  %s43 = sld [smem:[%s42]]
  %s44 = scalar_lea.smem %s0, 22
  %s45 = sld [smem:[%s44]]
  %s46 = scalar_lea.smem %s0, 23
  %s47 = sld [smem:[%s46]]
  %s48 = scalar_lea.smem %s0, 24
  %s49 = sld [smem:[%s48]]
  %s50 = scalar_lea.smem %s0, 25
  %s51 = sld [smem:[%s50]]
  %s52 = scalar_lea.smem %s0, 26
  %s53 = sld [smem:[%s52]]
  %s54 = scalar_lea.smem %s0, 27
  %s55 = sld [smem:[%s54]]
  %s56 = scalar_lea.smem %s0, 28
  %s57 = sld [smem:[%s56]]
  %s58 = scalar_lea.smem %s0, 29
  %s59 = sld [smem:[%s58]]
  %s60 = scalar_lea.smem %s0, 30
  %s61 = sld [smem:[%s60]]
  %s62 = sld [smem:[#allocation0]]
  $region130: #{forward.1} parent=0
    _
  %s64 = ssub.s32 1, %s62
  %s65 = scalar_select 0, %s64, %s62
  // Predicated region
  $region2: #{forward.1} parent=0 // pred_check
    _
  $region3: #{forward.1} parent=0 // pred_check_branch
    %67 = sbr.rel (0) target = $region5
  $region4: #{forward.1} parent=0 // pred_region
    _
  $region5: #{forward.1} parent=0 // pred_fallthru
    _
  // Predicated region
  $region6: #{forward.1} parent=0 // pred_check
    _
  $region7: #{forward.1} parent=0 // pred_check_branch
    %69 = sbr.rel (0) target = $region9
  $region8: #{forward.1} parent=0 // pred_region
    _
  $region9: #{forward.1} parent=0 // pred_fallthru
    _
  // Predicated region
  $region10: #{forward.1} parent=0 // pred_check
    _
  $region11: #{forward.1} parent=0 // pred_check_branch
    %71 = sbr.rel (0) target = $region13
  $region12: #{forward.1} parent=0 // pred_region
    _
  $region13: #{forward.1} parent=0 // pred_fallthru
    _
  // Predicated region
  $region14: #{forward.1} parent=0 // pred_check
    _
  $region15: #{forward.1} parent=0 // pred_check_branch
    %73 = sbr.rel (0) target = $region17
  $region16: #{forward.1} parent=0 // pred_region
    _
  $region17: #{forward.1} parent=0 // pred_fallthru
    _
  // Predicated region
  $region18: #{forward.1} parent=0 // pred_check
    _
  $region19: #{forward.1} parent=0 // pred_check_branch
    %75 = sbr.rel (0) target = $region21
  $region20: #{forward.1} parent=0 // pred_region
    _
  $region21: #{forward.1} parent=0 // pred_fallthru
    _
  // Predicated region
  $region22: #{forward.1} parent=0 // pred_check
    _
  $region23: #{forward.1} parent=0 // pred_check_branch
    %77 = sbr.rel (0) target = $region25
  $region24: #{forward.1} parent=0 // pred_region
    _
  $region25: #{forward.1} parent=0 // pred_fallthru
    _
  // Predicated region
  $region26: #{forward.1} parent=0 // pred_check
    _
  $region27: #{forward.1} parent=0 // pred_check_branch
    %79 = sbr.rel (0) target = $region29
  $region28: #{forward.1} parent=0 // pred_region
    _
  $region29: #{forward.1} parent=0 // pred_fallthru
    _
  // Predicated region
  $region30: #{forward.1} parent=0 // pred_check
    _
  $region31: #{forward.1} parent=0 // pred_check_branch
    %81 = sbr.rel (0) target = $region33
  $region32: #{forward.1} parent=0 // pred_region
    _
  $region33: #{forward.1} parent=0 // pred_fallthru
    _
  // Predicated region
  $region34: #{forward.1} parent=0 // pred_check
    _
  $region35: #{forward.1} parent=0 // pred_check_branch
    %83 = sbr.rel (0) target = $region37
  $region36: #{forward.1} parent=0 // pred_region
    _
  $region37: #{forward.1} parent=0 // pred_fallthru
    _
  // Predicated region
  $region38: #{forward.1} parent=0 // pred_check
    _
  $region39: #{forward.1} parent=0 // pred_check_branch
    %85 = sbr.rel (0) target = $region41
  $region40: #{forward.1} parent=0 // pred_region
    _
  $region41: #{forward.1} parent=0 // pred_fallthru
    _
  // Predicated region
  $region42: #{forward.1} parent=0 // pred_check
    _
  $region43: #{forward.1} parent=0 // pred_check_branch
    %87 = sbr.rel (0) target = $region45
  $region44: #{forward.1} parent=0 // pred_region
    _
  $region45: #{forward.1} parent=0 // pred_fallthru
    _
  // Predicated region
  $region46: #{forward.1} parent=0 // pred_check
    _
  $region47: #{forward.1} parent=0 // pred_check_branch
    %89 = sbr.rel (0) target = $region49
  $region48: #{forward.1} parent=0 // pred_region
    _
  $region49: #{forward.1} parent=0 // pred_fallthru
    _
  // Predicated region
  $region50: #{forward.1} parent=0 // pred_check
    _
  $region51: #{forward.1} parent=0 // pred_check_branch
    %91 = sbr.rel (0) target = $region53
  $region52: #{forward.1} parent=0 // pred_region
    _
  $region53: #{forward.1} parent=0 // pred_fallthru
    _
  // Predicated region
  $region54: #{forward.1} parent=0 // pred_check
    _
  $region55: #{forward.1} parent=0 // pred_check_branch
    %93 = sbr.rel (0) target = $region57
  $region56: #{forward.1} parent=0 // pred_region
    _
  $region57: #{forward.1} parent=0 // pred_fallthru
    _
  // Predicated region
  $region58: #{forward.1} parent=0 // pred_check
    _
  $region59: #{forward.1} parent=0 // pred_check_branch
    %95 = sbr.rel (0) target = $region61
  $region60: #{forward.1} parent=0 // pred_region
    _
  $region61: #{forward.1} parent=0 // pred_fallthru
    _
  // Predicated region
  $region62: #{forward.1} parent=0 // pred_check
    _
  $region63: #{forward.1} parent=0 // pred_check_branch
    %97 = sbr.rel (0) target = $region65
  $region64: #{forward.1} parent=0 // pred_region
    _
  $region65: #{forward.1} parent=0 // pred_fallthru
    _
  // Predicated region
  $region66: #{forward.1} parent=0 // pred_check
    _
  $region67: #{forward.1} parent=0 // pred_check_branch
    %99 = sbr.rel (0) target = $region69
  $region68: #{forward.1} parent=0 // pred_region
    _
  $region69: #{forward.1} parent=0 // pred_fallthru
    _
  // Predicated region
  $region70: #{forward.1} parent=0 // pred_check
    _
  $region71: #{forward.1} parent=0 // pred_check_branch
    %101 = sbr.rel (0) target = $region73
  $region72: #{forward.1} parent=0 // pred_region
    _
  $region73: #{forward.1} parent=0 // pred_fallthru
    _
  // Predicated region
  $region74: #{forward.1} parent=0 // pred_check
    _
  $region75: #{forward.1} parent=0 // pred_check_branch
    %103 = sbr.rel (0) target = $region77
  $region76: #{forward.1} parent=0 // pred_region
    _
  $region77: #{forward.1} parent=0 // pred_fallthru
    _
  // Predicated region
  $region78: #{forward.1} parent=0 // pred_check
    _
  $region79: #{forward.1} parent=0 // pred_check_branch
    %105 = sbr.rel (0) target = $region81
  $region80: #{forward.1} parent=0 // pred_region
    _
  $region81: #{forward.1} parent=0 // pred_fallthru
    _
  // Predicated region
  $region82: #{forward.1} parent=0 // pred_check
    _
  $region83: #{forward.1} parent=0 // pred_check_branch
    %107 = sbr.rel (0) target = $region85
  $region84: #{forward.1} parent=0 // pred_region
    _
  $region85: #{forward.1} parent=0 // pred_fallthru
    _
  // Predicated region
  $region86: #{forward.1} parent=0 // pred_check
    _
  $region87: #{forward.1} parent=0 // pred_check_branch
    %109 = sbr.rel (0) target = $region89
  $region88: #{forward.1} parent=0 // pred_region
    _
  $region89: #{forward.1} parent=0 // pred_fallthru
    _
  // Predicated region
  $region90: #{forward.1} parent=0 // pred_check
    _
  $region91: #{forward.1} parent=0 // pred_check_branch
    %111 = sbr.rel (0) target = $region93
  $region92: #{forward.1} parent=0 // pred_region
    _
  $region93: #{forward.1} parent=0 // pred_fallthru
    _
  // Predicated region
  $region94: #{forward.1} parent=0 // pred_check
    _
  $region95: #{forward.1} parent=0 // pred_check_branch
    %113 = sbr.rel (0) target = $region97
  $region96: #{forward.1} parent=0 // pred_region
    _
  $region97: #{forward.1} parent=0 // pred_fallthru
    _
  // Predicated region
  $region98: #{forward.1} parent=0 // pred_check
    _
  $region99: #{forward.1} parent=0 // pred_check_branch
    %115 = sbr.rel (0) target = $region101
  $region100: #{forward.1} parent=0 // pred_region
    _
  $region101: #{forward.1} parent=0 // pred_fallthru
    _
  // Predicated region
  $region102: #{forward.1} parent=0 // pred_check
    _
  $region103: #{forward.1} parent=0 // pred_check_branch
    %117 = sbr.rel (0) target = $region105
  $region104: #{forward.1} parent=0 // pred_region
    _
  $region105: #{forward.1} parent=0 // pred_fallthru
    _
  // Predicated region
  $region106: #{forward.1} parent=0 // pred_check
    _
  $region107: #{forward.1} parent=0 // pred_check_branch
    %119 = sbr.rel (0) target = $region109
  $region108: #{forward.1} parent=0 // pred_region
    _
  $region109: #{forward.1} parent=0 // pred_fallthru
    _
  // Predicated region
  $region110: #{forward.1} parent=0 // pred_check
    _
  $region111: #{forward.1} parent=0 // pred_check_branch
    %121 = sbr.rel (0) target = $region113
  $region112: #{forward.1} parent=0 // pred_region
    _
  $region113: #{forward.1} parent=0 // pred_fallthru
    _
  // Predicated region
  $region114: #{forward.1} parent=0 // pred_check
    _
  $region115: #{forward.1} parent=0 // pred_check_branch
    %123 = sbr.rel (0) target = $region117
  $region116: #{forward.1} parent=0 // pred_region
    _
  $region117: #{forward.1} parent=0 // pred_fallthru
    _
  // Predicated region
  $region118: #{forward.1} parent=0 // pred_check
    _
  $region119: #{forward.1} parent=0 // pred_check_branch
    %125 = sbr.rel (0) target = $region121
  $region120: #{forward.1} parent=0 // pred_region
    _
  $region121: #{forward.1} parent=0 // pred_fallthru
    _
  %127 = vst [vmem:[#allocation2] sm:$0x1] 0.0
  %128 = vst [vmem:[#allocation2 + $0x8] sm:$0x1] 0.0
  %129 = vst [vmem:[#allocation2 + $0x5] sm:$0x1] 0.0
  %130 = vst [vmem:[#allocation2 + $0xd] sm:$0x1] 0.0
  %131 = vst [vmem:[#allocation3] sm:$0x1] 0.0
  %132 = vst [vmem:[#allocation3 + $0x10] sm:$0x1] 0.0
  %133 = vst [vmem:[#allocation3 + $0x9] sm:$0x1] 0.0
  %134 = vst [vmem:[#allocation3 + $0x19] sm:$0x1] 0.0
  %135 = vst [vmem:[#allocation4] sm:$0x1] 0.0
  %136 = vst [vmem:[#allocation4 + $0x18] sm:$0x1] 0.0
  %137 = vst [vmem:[#allocation4 + $0x11] sm:$0x1] 0.0
  %138 = vst [vmem:[#allocation4 + $0x29] sm:$0x1] 0.0
  %139 = vst [vmem:[#allocation5] sm:$0x1] 0.0
  %140 = vst [vmem:[#allocation5 + $0x28] sm:$0x1] 0.0
  %141 = vst [vmem:[#allocation5 + $0x21] sm:$0x1] 0.0
  %142 = vst [vmem:[#allocation5 + $0x49] sm:$0x1] 0.0
  %v143 = vld [vmem:[%s7] sm:$0x7]
  %v144 = vld [vmem:[%s1] sm:$0x3]
  %v145 = vld [vmem:[%s5] sm:$0xff]
  %v146 = vld [vmem:[%s5 + $0x8] sm:$0xff]
  %v147 = vld [vmem:[%s5 + $0x10] sm:$0xff]
  %v148 = vld [vmem:[%s5 + $0x18] sm:$0xff]
  %v149 = vperm.slane %v143, 0
  %vm150 = vcmask 261120
  %v152 = vsel %vm150, %v144, 0
  %154 = vmatpush.msra.mxu0 0.0
  %155 = vmatpush.msra.mxu0 0.0
  %156 = vmatpush.msra.mxu0 0.0
  %157 = vmatpush.msra.mxu0 0.0
  %158 = vmatpush.msra.mxu0 0.0
  %159 = vmatpush.msra.mxu0 0.0
  %160 = vmatpush.msra.mxu0 0.0
  %161 = vmatpush.msra.mxu0 0.0
  %162 = vmatpush.msra.mxu0 0.0
  %163 = vmatpush.msra.mxu0 0.0
  %164 = vmatpush.msra.mxu0 0.0
  %165 = vmatpush.msra.mxu0 0.0
  %166 = vmatpush.msra.mxu0 %v148
  %167 = vmatpush.msra.mxu0 %v147
  %168 = vmatpush.msra.mxu0 %v146
  %169 = vmatpush.msra.mxu0 %v145
  %170 = vmatmul.f32.gmra.mxu0 %v152
  %v171 = vpop.f32.mrf.mxu0
  %v172 = vadd.f32 %v149, %v171
  %173 = vdwg.mxu0
  %vm174 = vcmask 123904
  %v175 = vsel %vm174, %v172, 0.0
  %v176 = vrot.slane %v175, 4
  %v177 = vadd.f32 %v175, %v176
  %v178 = vrot.slane %v177, 2
  %v179 = vadd.f32 %v177, %v178
  %v180 = vrot.slane %v179, 1
  %v181 = vadd.f32 %v179, %v180
  %v182 = vrcp.pop 2.0
  %v183 = vmul.f32 2.0, %v182
  %v184 = vsub.f32 1.0, %v183
  %v185 = vmul.f32 %v182, %v184
  %v186 = vadd.f32 %v182, %v185
  %vm187 = vweird.f32 %v182
  %v188 = vsel %vm187, %v182, %v186
  %v189 = vmul.f32 %v181, %v188
  %v190 = vmul.f32 %v172, %v172
  %v191 = vsel %vm174, %v190, 0.0
  %v192 = vrot.slane %v191, 4
  %v193 = vadd.f32 %v191, %v192
  %v194 = vrot.slane %v193, 2
  %v195 = vadd.f32 %v193, %v194
  %v196 = vrot.slane %v195, 1
  %v197 = vadd.f32 %v195, %v196
  %v198 = vmul.f32 %v197, %v188
  %v199 = vmul.f32 %v189, %v189
  %v200 = vsub.f32 %v198, %v199
  %v201 = vmax.f32 %v200, 0.0
  %v202 = vsub.f32 %v172, %v189
  %v203 = vadd.f32 %v201, 1e-05
  %v204 = vrsqrt.pop %v203
  %v205 = vmul.f32 %v204, %v203
  %v206 = vmul.f32 %v205, %v204
  %v207 = vmul.f32 0.5, %v206
  %v208 = vsub.f32 1.5, %v207
  %v209 = vmul.f32 %v204, %v208
  %vm210 = vweird.f32 %v203
  %vm211 = vweird.f32 %v204
  %vm212 = vmor %vm210, %vm211
  %v213 = vsel %vm212, %v204, %v209
  %v214 = vmul.f32 %v202, %v213
  %v215 = vperm.slane %v143, 1
  %v216 = vmul.f32 %v214, %v215
  %v217 = vperm.slane %v143, 2
  %v218 = vadd.f32 %v216, %v217
  %vm219 = vcmp.ge.f32.partialorder %v218, 0.0
  %v220 = vmul.f32 %v218, 0.2
  %v221 = vsel %vm219, %v218, %v220
  %v222 = vpack.c.bf16 %v221, %v221
  %v223 = vld [vmem:[%s9] sm:$0xff]
  %v224 = vld [vmem:[%s9 + $0x8] sm:$0xff]
  %v225 = vld [vmem:[%s9 + $0x10] sm:$0xff]
  %v226 = vld [vmem:[%s9 + $0x18] sm:$0xff]
  %v227 = vld [vmem:[%s3] sm:$0x3]
  %v228 = vpack.c.bf16 %v227, %v227
  %v229 = vld [vmem:[%s11] sm:$0xff]
  %v230 = vld [vmem:[%s11 + $0x8] sm:$0xff]
  %v231 = vld [vmem:[%s11 + $0x10] sm:$0xff]
  %v232 = vld [vmem:[%s11 + $0x18] sm:$0xff]
  %v237 = vunpack.c.l.b16 %v229
  %v238 = vunpack.c.h.b16 %v229
  %v239 = vunpack.c.l.b16 %v230
  %v240 = vunpack.c.h.b16 %v230
  %v241 = vunpack.c.l.b16 %v231
  %v242 = vunpack.c.h.b16 %v231
  %v243 = vunpack.c.l.b16 %v232
  %v244 = vunpack.c.h.b16 %v232
  %v245 = vpack.c.b16 %v241, %v237
  %v246 = vpack.c.b16 %v242, %v238
  %v247 = vpack.c.b16 %v243, %v239
  %v248 = vpack.c.b16 %v244, %v240
  %vm253 = vcmask 130048
  %v255 = vsel %vm253, %v228, 0
  %257 = vmatpush.bf16.msra.mxu0 0
  %258 = vmatpush.bf16.msra.mxu0 0
  %259 = vmatpush.bf16.msra.mxu0 0
  %260 = vmatpush.bf16.msra.mxu0 0
  %261 = vmatpush.bf16.msra.mxu0 0
  %262 = vmatpush.bf16.msra.mxu0 0
  %263 = vmatpush.bf16.msra.mxu0 0
  %264 = vmatpush.bf16.msra.mxu0 %v245
  %265 = vmatmul.bf16.gmra.mxu0 %v255
  %v266 = vpop.f32.mrf.mxu0
  %v267 = vadd.f32 0.0, %v266
  %v268 = vpop.f32.mrf.mxu0
  %269 = vdwg.mxu0
  %270 = vmatpush.bf16.msra.mxu0 0
  %271 = vmatpush.bf16.msra.mxu0 0
  %272 = vmatpush.bf16.msra.mxu0 0
  %273 = vmatpush.bf16.msra.mxu0 0
  %274 = vmatpush.bf16.msra.mxu0 0
  %275 = vmatpush.bf16.msra.mxu0 0
  %276 = vmatpush.bf16.msra.mxu0 0
  %277 = vmatpush.bf16.msra.mxu0 %v246
  %278 = vmatmul.bf16.gmra.mxu0 %v255
  %v279 = vpop.f32.mrf.mxu0
  %v280 = vadd.f32 0.0, %v279
  %v281 = vpop.f32.mrf.mxu0
  %282 = vdwg.mxu0
  %283 = vmatpush.bf16.msra.mxu0 0
  %284 = vmatpush.bf16.msra.mxu0 0
  %285 = vmatpush.bf16.msra.mxu0 0
  %286 = vmatpush.bf16.msra.mxu0 0
  %287 = vmatpush.bf16.msra.mxu0 0
  %288 = vmatpush.bf16.msra.mxu0 0
  %289 = vmatpush.bf16.msra.mxu0 0
  %290 = vmatpush.bf16.msra.mxu0 %v247
  %291 = vmatmul.bf16.gmra.mxu0 %v255
  %v292 = vpop.f32.mrf.mxu0
  %v293 = vadd.f32 0.0, %v292
  %v294 = vpop.f32.mrf.mxu0
  %295 = vdwg.mxu0
  %296 = vmatpush.bf16.msra.mxu0 0
  %297 = vmatpush.bf16.msra.mxu0 0
  %298 = vmatpush.bf16.msra.mxu0 0
  %299 = vmatpush.bf16.msra.mxu0 0
  %300 = vmatpush.bf16.msra.mxu0 0
  %301 = vmatpush.bf16.msra.mxu0 0
  %302 = vmatpush.bf16.msra.mxu0 0
  %303 = vmatpush.bf16.msra.mxu0 %v248
  %304 = vmatmul.bf16.gmra.mxu0 %v255
  %v305 = vpop.f32.mrf.mxu0
  %v306 = vadd.f32 0.0, %v305
  %v307 = vpop.f32.mrf.mxu0
  %308 = vdwg.mxu0
  %v313 = vunpack.c.l.b16 %v223
  %v314 = vunpack.c.h.b16 %v223
  %v315 = vunpack.c.l.b16 %v224
  %v316 = vunpack.c.h.b16 %v224
  %v317 = vunpack.c.l.b16 %v225
  %v318 = vunpack.c.h.b16 %v225
  %v319 = vunpack.c.l.b16 %v226
  %v320 = vunpack.c.h.b16 %v226
  %v321 = vpack.c.b16 %v317, %v313
  %v322 = vpack.c.b16 %v318, %v314
  %v323 = vpack.c.b16 %v319, %v315
  %v324 = vpack.c.b16 %v320, %v316
  %v330 = vsel %vm253, %v222, 0
  %332 = vmatpush.bf16.msra.mxu0 0
  %333 = vmatpush.bf16.msra.mxu0 0
  %334 = vmatpush.bf16.msra.mxu0 0
  %335 = vmatpush.bf16.msra.mxu0 0
  %336 = vmatpush.bf16.msra.mxu0 0
  %337 = vmatpush.bf16.msra.mxu0 0
  %338 = vmatpush.bf16.msra.mxu0 0
  %339 = vmatpush.bf16.msra.mxu0 %v321
  %340 = vmatmul.bf16.gmra.mxu0 %v330
  %v341 = vpop.f32.mrf.mxu0
  %v342 = vadd.f32 %v267, %v341
  %v343 = vpop.f32.mrf.mxu0
  %344 = vdwg.mxu0
  %345 = vmatpush.bf16.msra.mxu0 0
  %346 = vmatpush.bf16.msra.mxu0 0
  %347 = vmatpush.bf16.msra.mxu0 0
  %348 = vmatpush.bf16.msra.mxu0 0
  %349 = vmatpush.bf16.msra.mxu0 0
  %350 = vmatpush.bf16.msra.mxu0 0
  %351 = vmatpush.bf16.msra.mxu0 0
  %352 = vmatpush.bf16.msra.mxu0 %v322
  %353 = vmatmul.bf16.gmra.mxu0 %v330
  %v354 = vpop.f32.mrf.mxu0
  %v355 = vadd.f32 %v280, %v354
  %v356 = vpop.f32.mrf.mxu0
  %357 = vdwg.mxu0
  %358 = vmatpush.bf16.msra.mxu0 0
  %359 = vmatpush.bf16.msra.mxu0 0
  %360 = vmatpush.bf16.msra.mxu0 0
  %361 = vmatpush.bf16.msra.mxu0 0
  %362 = vmatpush.bf16.msra.mxu0 0
  %363 = vmatpush.bf16.msra.mxu0 0
  %364 = vmatpush.bf16.msra.mxu0 0
  %365 = vmatpush.bf16.msra.mxu0 %v323
  %366 = vmatmul.bf16.gmra.mxu0 %v330
  %v367 = vpop.f32.mrf.mxu0
  %v368 = vadd.f32 %v293, %v367
  %v369 = vpop.f32.mrf.mxu0
  %370 = vdwg.mxu0
  %371 = vmatpush.bf16.msra.mxu0 0
  %372 = vmatpush.bf16.msra.mxu0 0
  %373 = vmatpush.bf16.msra.mxu0 0
  %374 = vmatpush.bf16.msra.mxu0 0
  %375 = vmatpush.bf16.msra.mxu0 0
  %376 = vmatpush.bf16.msra.mxu0 0
  %377 = vmatpush.bf16.msra.mxu0 0
  %378 = vmatpush.bf16.msra.mxu0 %v324
  %379 = vmatmul.bf16.gmra.mxu0 %v330
  %v380 = vpop.f32.mrf.mxu0
  %v381 = vadd.f32 %v306, %v380
  %v382 = vpop.f32.mrf.mxu0
  %383 = vdwg.mxu0
  %vm384 = vcmask 1041408
  %v385 = vsel %vm384, %v342, 0.0
  %v386 = vrot.slane %v385, 4
  %v387 = vadd.f32 %v385, %v386
  %v388 = vrot.slane %v387, 2
  %v389 = vadd.f32 %v387, %v388
  %v390 = vrot.slane %v389, 1
  %v391 = vadd.f32 %v389, %v390
  %v392 = vsel %vm384, %v355, 0.0
  %v393 = vrot.slane %v392, 4
  %v394 = vadd.f32 %v392, %v393
  %v395 = vrot.slane %v394, 2
  %v396 = vadd.f32 %v394, %v395
  %v397 = vrot.slane %v396, 1
  %v398 = vadd.f32 %v396, %v397
  %v399 = vsel %vm384, %v368, 0.0
  %v400 = vrot.slane %v399, 4
  %v401 = vadd.f32 %v399, %v400
  %v402 = vrot.slane %v401, 2
  %v403 = vadd.f32 %v401, %v402
  %v404 = vrot.slane %v403, 1
  %v405 = vadd.f32 %v403, %v404
  %v406 = vsel %vm384, %v381, 0.0
  %v407 = vrot.slane %v406, 4
  %v408 = vadd.f32 %v406, %v407
  %v409 = vrot.slane %v408, 2
  %v410 = vadd.f32 %v408, %v409
  %v411 = vrot.slane %v410, 1
  %v412 = vadd.f32 %v410, %v411
  %v413 = vld [vmem:[%s15] sm:$0xff]
  %v414 = vld [vmem:[%s15 + $0x8] sm:$0xff]
  %v415 = vld [vmem:[%s15 + $0x10] sm:$0xff]
  %v416 = vld [vmem:[%s15 + $0x18] sm:$0xff]
  %v417 = vld [vmem:[%s15 + $0x20] sm:$0xff]
  %v418 = vld [vmem:[%s15 + $0x28] sm:$0xff]
  %v419 = vld [vmem:[%s15 + $0x30] sm:$0xff]
  %v420 = vld [vmem:[%s15 + $0x38] sm:$0xff]
  %v421 = vld [vmem:[%s15 + $0x40] sm:$0xff]
  %v422 = vld [vmem:[%s15 + $0x48] sm:$0xff]
  %v423 = vld [vmem:[%s15 + $0x50] sm:$0xff]
  %v424 = vld [vmem:[%s15 + $0x58] sm:$0xff]
  %v425 = vld [vmem:[%s15 + $0x60] sm:$0xff]
  %v426 = vld [vmem:[%s15 + $0x68] sm:$0xff]
  %v427 = vld [vmem:[%s15 + $0x70] sm:$0xff]
  %v428 = vld [vmem:[%s15 + $0x78] sm:$0xff]
  %v429 = vld [vmem:[%s15 + $0x80] sm:$0xff]
  %v430 = vld [vmem:[%s15 + $0x88] sm:$0xff]
  %v431 = vld [vmem:[%s15 + $0x90] sm:$0xff]
  %v432 = vld [vmem:[%s15 + $0x98] sm:$0xff]
  %v433 = vld [vmem:[%s15 + $0xa0] sm:$0xff]
  %v434 = vld [vmem:[%s15 + $0xa8] sm:$0xff]
  %v435 = vld [vmem:[%s15 + $0xb0] sm:$0xff]
  %v436 = vld [vmem:[%s15 + $0xb8] sm:$0xff]
  %v437 = vld [vmem:[%s15 + $0xc0] sm:$0xff]
  %v438 = vld [vmem:[%s15 + $0xc8] sm:$0xff]
  %v439 = vld [vmem:[%s15 + $0xd0] sm:$0xff]
  %v440 = vld [vmem:[%s15 + $0xd8] sm:$0xff]
  %v441 = vld [vmem:[%s15 + $0xe0] sm:$0xff]
  %v442 = vld [vmem:[%s15 + $0xe8] sm:$0xff]
  %v443 = vld [vmem:[%s15 + $0xf0] sm:$0xff]
  %v444 = vld [vmem:[%s15 + $0xf8] sm:$0xff]
  %v445 = vld [vmem:[%s15 + $0x100] sm:$0xff]
  %v446 = vld [vmem:[%s15 + $0x108] sm:$0xff]
  %v447 = vld [vmem:[%s15 + $0x110] sm:$0xff]
  %v448 = vld [vmem:[%s15 + $0x118] sm:$0xff]
  %v449 = vld [vmem:[%s15 + $0x120] sm:$0xff]
  %v450 = vld [vmem:[%s15 + $0x128] sm:$0xff]
  %v451 = vld [vmem:[%s15 + $0x130] sm:$0xff]
  %v452 = vld [vmem:[%s15 + $0x138] sm:$0xff]
  %v453 = vld [vmem:[%s15 + $0x140] sm:$0xff]
  %v454 = vld [vmem:[%s15 + $0x148] sm:$0xff]
  %v455 = vld [vmem:[%s15 + $0x150] sm:$0xff]
  %v456 = vld [vmem:[%s15 + $0x158] sm:$0xff]
  %v457 = vld [vmem:[%s15 + $0x160] sm:$0xff]
  %v458 = vld [vmem:[%s15 + $0x168] sm:$0xff]
  %v459 = vld [vmem:[%s15 + $0x170] sm:$0xff]
  %v460 = vld [vmem:[%s15 + $0x178] sm:$0xff]
  %v461 = vld [vmem:[%s15 + $0x180] sm:$0xff]
  %v462 = vld [vmem:[%s15 + $0x188] sm:$0xff]
  %v463 = vld [vmem:[%s15 + $0x190] sm:$0xff]
  %v464 = vld [vmem:[%s15 + $0x198] sm:$0xff]
  %v465 = vld [vmem:[%s15 + $0x1a0] sm:$0xff]
  %v466 = vld [vmem:[%s15 + $0x1a8] sm:$0xff]
  %v467 = vld [vmem:[%s15 + $0x1b0] sm:$0xff]
  %v468 = vld [vmem:[%s15 + $0x1b8] sm:$0xff]
  %v469 = vld [vmem:[%s15 + $0x1c0] sm:$0xff]
  %v470 = vld [vmem:[%s15 + $0x1c8] sm:$0xff]
  %v471 = vld [vmem:[%s15 + $0x1d0] sm:$0xff]
  %v472 = vld [vmem:[%s15 + $0x1d8] sm:$0xff]
  %v473 = vld [vmem:[%s15 + $0x1e0] sm:$0xff]
  %v474 = vld [vmem:[%s15 + $0x1e8] sm:$0xff]
  %v475 = vld [vmem:[%s15 + $0x1f0] sm:$0xff]
  %v476 = vld [vmem:[%s15 + $0x1f8] sm:$0xff]
  %477 = vmatpush.msra.mxu0 %v428
  %478 = vmatpush.msra.mxu0 %v427
  %479 = vmatpush.msra.mxu0 %v426
  %480 = vmatpush.msra.mxu0 %v425
  %481 = vmatpush.msra.mxu0 %v424
  %482 = vmatpush.msra.mxu0 %v423
  %483 = vmatpush.msra.mxu0 %v422
  %484 = vmatpush.msra.mxu0 %v421
  %485 = vmatpush.msra.mxu0 %v420
  %486 = vmatpush.msra.mxu0 %v419
  %487 = vmatpush.msra.mxu0 %v418
  %488 = vmatpush.msra.mxu0 %v417
  %489 = vmatpush.msra.mxu0 %v416
  %490 = vmatpush.msra.mxu0 %v415
  %491 = vmatpush.msra.mxu0 %v414
  %492 = vmatpush.msra.mxu0 %v413
  %493 = vmatmul.f32.gmra.mxu0 %v391
  %v494 = vpop.f32.mrf.mxu0
  %v495 = vadd.f32 0.0, %v494
  %496 = vdwg.mxu0
  %497 = vmatpush.msra.mxu0 %v444
  %498 = vmatpush.msra.mxu0 %v443
  %499 = vmatpush.msra.mxu0 %v442
  %500 = vmatpush.msra.mxu0 %v441
  %501 = vmatpush.msra.mxu0 %v440
  %502 = vmatpush.msra.mxu0 %v439
  %503 = vmatpush.msra.mxu0 %v438
  %504 = vmatpush.msra.mxu0 %v437
  %505 = vmatpush.msra.mxu0 %v436
  %506 = vmatpush.msra.mxu0 %v435
  %507 = vmatpush.msra.mxu0 %v434
  %508 = vmatpush.msra.mxu0 %v433
  %509 = vmatpush.msra.mxu0 %v432
  %510 = vmatpush.msra.mxu0 %v431
  %511 = vmatpush.msra.mxu0 %v430
  %512 = vmatpush.msra.mxu0 %v429
  %513 = vmatmul.f32.gmra.mxu0 %v398
  %v514 = vpop.f32.mrf.mxu0
  %v515 = vadd.f32 %v495, %v514
  %516 = vdwg.mxu0
  %517 = vmatpush.msra.mxu0 %v460
  %518 = vmatpush.msra.mxu0 %v459
  %519 = vmatpush.msra.mxu0 %v458
  %520 = vmatpush.msra.mxu0 %v457
  %521 = vmatpush.msra.mxu0 %v456
  %522 = vmatpush.msra.mxu0 %v455
  %523 = vmatpush.msra.mxu0 %v454
  %524 = vmatpush.msra.mxu0 %v453
  %525 = vmatpush.msra.mxu0 %v452
  %526 = vmatpush.msra.mxu0 %v451
  %527 = vmatpush.msra.mxu0 %v450
  %528 = vmatpush.msra.mxu0 %v449
  %529 = vmatpush.msra.mxu0 %v448
  %530 = vmatpush.msra.mxu0 %v447
  %531 = vmatpush.msra.mxu0 %v446
  %532 = vmatpush.msra.mxu0 %v445
  %533 = vmatmul.f32.gmra.mxu0 %v405
  %v534 = vpop.f32.mrf.mxu0
  %v535 = vadd.f32 %v515, %v534
  %536 = vdwg.mxu0
  %537 = vmatpush.msra.mxu0 %v476
  %538 = vmatpush.msra.mxu0 %v475
  %539 = vmatpush.msra.mxu0 %v474
  %540 = vmatpush.msra.mxu0 %v473
  %541 = vmatpush.msra.mxu0 %v472
  %542 = vmatpush.msra.mxu0 %v471
  %543 = vmatpush.msra.mxu0 %v470
  %544 = vmatpush.msra.mxu0 %v469
  %545 = vmatpush.msra.mxu0 %v468
  %546 = vmatpush.msra.mxu0 %v467
  %547 = vmatpush.msra.mxu0 %v466
  %548 = vmatpush.msra.mxu0 %v465
  %549 = vmatpush.msra.mxu0 %v464
  %550 = vmatpush.msra.mxu0 %v463
  %551 = vmatpush.msra.mxu0 %v462
  %552 = vmatpush.msra.mxu0 %v461
  %553 = vmatmul.f32.gmra.mxu0 %v412
  %v554 = vpop.f32.mrf.mxu0
  %v555 = vadd.f32 %v535, %v554
  %556 = vdwg.mxu0
  %v557 = vmul.f32 %v342, %v342
  %v558 = vmul.f32 %v355, %v355
  %v559 = vmul.f32 %v368, %v368
  %v560 = vmul.f32 %v381, %v381
  %v561 = vsel %vm384, %v557, 0.0
  %v562 = vrot.slane %v561, 4
  %v563 = vadd.f32 %v561, %v562
  %v564 = vrot.slane %v563, 2
  %v565 = vadd.f32 %v563, %v564
  %v566 = vrot.slane %v565, 1
  %v567 = vadd.f32 %v565, %v566
  %v568 = vsel %vm384, %v558, 0.0
  %v569 = vrot.slane %v568, 4
  %v570 = vadd.f32 %v568, %v569
  %v571 = vrot.slane %v570, 2
  %v572 = vadd.f32 %v570, %v571
  %v573 = vrot.slane %v572, 1
  %v574 = vadd.f32 %v572, %v573
  %v575 = vsel %vm384, %v559, 0.0
  %v576 = vrot.slane %v575, 4
  %v577 = vadd.f32 %v575, %v576
  %v578 = vrot.slane %v577, 2
  %v579 = vadd.f32 %v577, %v578
  %v580 = vrot.slane %v579, 1
  %v581 = vadd.f32 %v579, %v580
  %v582 = vsel %vm384, %v560, 0.0
  %v583 = vrot.slane %v582, 4
  %v584 = vadd.f32 %v582, %v583
  %v585 = vrot.slane %v584, 2
  %v586 = vadd.f32 %v584, %v585
  %v587 = vrot.slane %v586, 1
  %v588 = vadd.f32 %v586, %v587
  %589 = vmatpush.msra.mxu0 %v428
  %590 = vmatpush.msra.mxu0 %v427
  %591 = vmatpush.msra.mxu0 %v426
  %592 = vmatpush.msra.mxu0 %v425
  %593 = vmatpush.msra.mxu0 %v424
  %594 = vmatpush.msra.mxu0 %v423
  %595 = vmatpush.msra.mxu0 %v422
  %596 = vmatpush.msra.mxu0 %v421
  %597 = vmatpush.msra.mxu0 %v420
  %598 = vmatpush.msra.mxu0 %v419
  %599 = vmatpush.msra.mxu0 %v418
  %600 = vmatpush.msra.mxu0 %v417
  %601 = vmatpush.msra.mxu0 %v416
  %602 = vmatpush.msra.mxu0 %v415
  %603 = vmatpush.msra.mxu0 %v414
  %604 = vmatpush.msra.mxu0 %v413
  %605 = vmatmul.f32.gmra.mxu0 %v567
  %v606 = vpop.f32.mrf.mxu0
  %v607 = vadd.f32 0.0, %v606
  %608 = vdwg.mxu0
  %609 = vmatpush.msra.mxu0 %v444
  %610 = vmatpush.msra.mxu0 %v443
  %611 = vmatpush.msra.mxu0 %v442
  %612 = vmatpush.msra.mxu0 %v441
  %613 = vmatpush.msra.mxu0 %v440
  %614 = vmatpush.msra.mxu0 %v439
  %615 = vmatpush.msra.mxu0 %v438
  %616 = vmatpush.msra.mxu0 %v437
  %617 = vmatpush.msra.mxu0 %v436
  %618 = vmatpush.msra.mxu0 %v435
  %619 = vmatpush.msra.mxu0 %v434
  %620 = vmatpush.msra.mxu0 %v433
  %621 = vmatpush.msra.mxu0 %v432
  %622 = vmatpush.msra.mxu0 %v431
  %623 = vmatpush.msra.mxu0 %v430
  %624 = vmatpush.msra.mxu0 %v429
  %625 = vmatmul.f32.gmra.mxu0 %v574
  %v626 = vpop.f32.mrf.mxu0
  %v627 = vadd.f32 %v607, %v626
  %628 = vdwg.mxu0
  %629 = vmatpush.msra.mxu0 %v460
  %630 = vmatpush.msra.mxu0 %v459
  %631 = vmatpush.msra.mxu0 %v458
  %632 = vmatpush.msra.mxu0 %v457
  %633 = vmatpush.msra.mxu0 %v456
  %634 = vmatpush.msra.mxu0 %v455
  %635 = vmatpush.msra.mxu0 %v454
  %636 = vmatpush.msra.mxu0 %v453
  %637 = vmatpush.msra.mxu0 %v452
  %638 = vmatpush.msra.mxu0 %v451
  %639 = vmatpush.msra.mxu0 %v450
  %640 = vmatpush.msra.mxu0 %v449
  %641 = vmatpush.msra.mxu0 %v448
  %642 = vmatpush.msra.mxu0 %v447
  %643 = vmatpush.msra.mxu0 %v446
  %644 = vmatpush.msra.mxu0 %v445
  %645 = vmatmul.f32.gmra.mxu0 %v581
  %v646 = vpop.f32.mrf.mxu0
  %v647 = vadd.f32 %v627, %v646
  %648 = vdwg.mxu0
  %649 = vmatpush.msra.mxu0 %v476
  %650 = vmatpush.msra.mxu0 %v475
  %651 = vmatpush.msra.mxu0 %v474
  %652 = vmatpush.msra.mxu0 %v473
  %653 = vmatpush.msra.mxu0 %v472
  %654 = vmatpush.msra.mxu0 %v471
  %655 = vmatpush.msra.mxu0 %v470
  %656 = vmatpush.msra.mxu0 %v469
  %657 = vmatpush.msra.mxu0 %v468
  %658 = vmatpush.msra.mxu0 %v467
  %659 = vmatpush.msra.mxu0 %v466
  %660 = vmatpush.msra.mxu0 %v465
  %661 = vmatpush.msra.mxu0 %v464
  %662 = vmatpush.msra.mxu0 %v463
  %663 = vmatpush.msra.mxu0 %v462
  %664 = vmatpush.msra.mxu0 %v461
  %665 = vmatmul.f32.gmra.mxu0 %v588
  %v666 = vpop.f32.mrf.mxu0
  %v667 = vadd.f32 %v647, %v666
  %668 = vdwg.mxu0
  %v669 = vrcp.pop 32.0
  %v670 = vmul.f32 32.0, %v669
  %v671 = vsub.f32 1.0, %v670
  %v672 = vmul.f32 %v669, %v671
  %v673 = vadd.f32 %v669, %v672
  %vm674 = vweird.f32 %v669
  %v675 = vsel %vm674, %v669, %v673
  %v676 = vmul.f32 %v555, %v675
  %v677 = vmul.f32 %v667, %v675
  %v678 = vmul.f32 %v676, %v676
  %v679 = vsub.f32 %v677, %v678
  %v680 = vmax.f32 %v679, 0.0
  %v681 = vld [vmem:[%s13] sm:$0x3]
  %v682 = vadd.f32 %v680, 1e-05
  %v683 = vrsqrt.pop %v682
  %v684 = vmul.f32 %v683, %v682
  %v685 = vmul.f32 %v684, %v683
  %v686 = vmul.f32 0.5, %v685
  %v687 = vsub.f32 1.5, %v686
  %v688 = vmul.f32 %v683, %v687
  %vm689 = vweird.f32 %v682
  %vm690 = vweird.f32 %v683
  %vm691 = vmor %vm689, %vm690
  %v692 = vsel %vm691, %v683, %v688
  %v693 = vmul.f32 %v681, %v692
  %v694 = vmul.f32 %v676, %v693
  %v696 = vrot.slane %v694, 7
  %v698 = vsub.f32 %v681, %v696
  %v699 = vld [vmem:[%s17] sm:$0xff]
  %v700 = vld [vmem:[%s17 + $0x8] sm:$0xff]
  %v701 = vld [vmem:[%s17 + $0x10] sm:$0xff]
  %v702 = vld [vmem:[%s17 + $0x18] sm:$0xff]
  %v703 = vld [vmem:[%s17 + $0x20] sm:$0xff]
  %v704 = vld [vmem:[%s17 + $0x28] sm:$0xff]
  %v705 = vld [vmem:[%s17 + $0x30] sm:$0xff]
  %v706 = vld [vmem:[%s17 + $0x38] sm:$0xff]
  %v707 = vld [vmem:[%s17 + $0x40] sm:$0xff]
  %v708 = vld [vmem:[%s17 + $0x48] sm:$0xff]
  %v709 = vld [vmem:[%s17 + $0x50] sm:$0xff]
  %v710 = vld [vmem:[%s17 + $0x58] sm:$0xff]
  %v711 = vld [vmem:[%s17 + $0x60] sm:$0xff]
  %v712 = vld [vmem:[%s17 + $0x68] sm:$0xff]
  %v713 = vld [vmem:[%s17 + $0x70] sm:$0xff]
  %v714 = vld [vmem:[%s17 + $0x78] sm:$0xff]
  %v716 = vsel %vm150, %v693, 0
  %718 = vmatpush.msra.mxu0 0.0
  %719 = vmatpush.msra.mxu0 0.0
  %720 = vmatpush.msra.mxu0 0.0
  %721 = vmatpush.msra.mxu0 0.0
  %722 = vmatpush.msra.mxu0 0.0
  %723 = vmatpush.msra.mxu0 0.0
  %724 = vmatpush.msra.mxu0 0.0
  %725 = vmatpush.msra.mxu0 0.0
  %726 = vmatpush.msra.mxu0 0.0
  %727 = vmatpush.msra.mxu0 0.0
  %728 = vmatpush.msra.mxu0 0.0
  %729 = vmatpush.msra.mxu0 0.0
  %730 = vmatpush.msra.mxu0 %v711
  %731 = vmatpush.msra.mxu0 %v707
  %732 = vmatpush.msra.mxu0 %v703
  %733 = vmatpush.msra.mxu0 %v699
  %734 = vmatmul.f32.gmra.mxu0 %v716
  %v735 = vpop.f32.mrf.mxu0
  %v736 = vadd.f32 0.0, %v735
  %737 = vdwg.mxu0
  %738 = vmatpush.msra.mxu0 0.0
  %739 = vmatpush.msra.mxu0 0.0
  %740 = vmatpush.msra.mxu0 0.0
  %741 = vmatpush.msra.mxu0 0.0
  %742 = vmatpush.msra.mxu0 0.0
  %743 = vmatpush.msra.mxu0 0.0
  %744 = vmatpush.msra.mxu0 0.0
  %745 = vmatpush.msra.mxu0 0.0
  %746 = vmatpush.msra.mxu0 0.0
  %747 = vmatpush.msra.mxu0 0.0
  %748 = vmatpush.msra.mxu0 0.0
  %749 = vmatpush.msra.mxu0 0.0
  %750 = vmatpush.msra.mxu0 %v712
  %751 = vmatpush.msra.mxu0 %v708
  %752 = vmatpush.msra.mxu0 %v704
  %753 = vmatpush.msra.mxu0 %v700
  %754 = vmatmul.f32.gmra.mxu0 %v716
  %v755 = vpop.f32.mrf.mxu0
  %v756 = vadd.f32 0.0, %v755
  %757 = vdwg.mxu0
  %758 = vmatpush.msra.mxu0 0.0
  %759 = vmatpush.msra.mxu0 0.0
  %760 = vmatpush.msra.mxu0 0.0
  %761 = vmatpush.msra.mxu0 0.0
  %762 = vmatpush.msra.mxu0 0.0
  %763 = vmatpush.msra.mxu0 0.0
  %764 = vmatpush.msra.mxu0 0.0
  %765 = vmatpush.msra.mxu0 0.0
  %766 = vmatpush.msra.mxu0 0.0
  %767 = vmatpush.msra.mxu0 0.0
  %768 = vmatpush.msra.mxu0 0.0
  %769 = vmatpush.msra.mxu0 0.0
  %770 = vmatpush.msra.mxu0 %v713
  %771 = vmatpush.msra.mxu0 %v709
  %772 = vmatpush.msra.mxu0 %v705
  %773 = vmatpush.msra.mxu0 %v701
  %774 = vmatmul.f32.gmra.mxu0 %v716
  %v775 = vpop.f32.mrf.mxu0
  %v776 = vadd.f32 0.0, %v775
  %777 = vdwg.mxu0
  %778 = vmatpush.msra.mxu0 0.0
  %779 = vmatpush.msra.mxu0 0.0
  %780 = vmatpush.msra.mxu0 0.0
  %781 = vmatpush.msra.mxu0 0.0
  %782 = vmatpush.msra.mxu0 0.0
  %783 = vmatpush.msra.mxu0 0.0
  %784 = vmatpush.msra.mxu0 0.0
  %785 = vmatpush.msra.mxu0 0.0
  %786 = vmatpush.msra.mxu0 0.0
  %787 = vmatpush.msra.mxu0 0.0
  %788 = vmatpush.msra.mxu0 0.0
  %789 = vmatpush.msra.mxu0 0.0
  %790 = vmatpush.msra.mxu0 %v714
  %791 = vmatpush.msra.mxu0 %v710
  %792 = vmatpush.msra.mxu0 %v706
  %793 = vmatpush.msra.mxu0 %v702
  %794 = vmatmul.f32.gmra.mxu0 %v716
  %v795 = vpop.f32.mrf.mxu0
  %v796 = vadd.f32 0.0, %v795
  %797 = vdwg.mxu0
  %v799 = vrot.slane %v698, 1
  %v800 = vsel %vm150, %v799, 0
  %802 = vmatpush.msra.mxu0 0.0
  %803 = vmatpush.msra.mxu0 0.0
  %804 = vmatpush.msra.mxu0 0.0
  %805 = vmatpush.msra.mxu0 0.0
  %806 = vmatpush.msra.mxu0 0.0
  %807 = vmatpush.msra.mxu0 0.0
  %808 = vmatpush.msra.mxu0 0.0
  %809 = vmatpush.msra.mxu0 0.0
  %810 = vmatpush.msra.mxu0 0.0
  %811 = vmatpush.msra.mxu0 0.0
  %812 = vmatpush.msra.mxu0 0.0
  %813 = vmatpush.msra.mxu0 0.0
  %814 = vmatpush.msra.mxu0 %v711
  %815 = vmatpush.msra.mxu0 %v707
  %816 = vmatpush.msra.mxu0 %v703
  %817 = vmatpush.msra.mxu0 %v699
  %818 = vmatmul.f32.gmra.mxu0 %v800
  %v819 = vpop.f32.mrf.mxu0
  %v820 = vadd.f32 0.0, %v819
  %821 = vdwg.mxu0
  %822 = vmatpush.msra.mxu0 0.0
  %823 = vmatpush.msra.mxu0 0.0
  %824 = vmatpush.msra.mxu0 0.0
  %825 = vmatpush.msra.mxu0 0.0
  %826 = vmatpush.msra.mxu0 0.0
  %827 = vmatpush.msra.mxu0 0.0
  %828 = vmatpush.msra.mxu0 0.0
  %829 = vmatpush.msra.mxu0 0.0
  %830 = vmatpush.msra.mxu0 0.0
  %831 = vmatpush.msra.mxu0 0.0
  %832 = vmatpush.msra.mxu0 0.0
  %833 = vmatpush.msra.mxu0 0.0
  %834 = vmatpush.msra.mxu0 %v712
  %835 = vmatpush.msra.mxu0 %v708
  %836 = vmatpush.msra.mxu0 %v704
  %837 = vmatpush.msra.mxu0 %v700
  %838 = vmatmul.f32.gmra.mxu0 %v800
  %v839 = vpop.f32.mrf.mxu0
  %v840 = vadd.f32 0.0, %v839
  %841 = vdwg.mxu0
  %842 = vmatpush.msra.mxu0 0.0
  %843 = vmatpush.msra.mxu0 0.0
  %844 = vmatpush.msra.mxu0 0.0
  %845 = vmatpush.msra.mxu0 0.0
  %846 = vmatpush.msra.mxu0 0.0
  %847 = vmatpush.msra.mxu0 0.0
  %848 = vmatpush.msra.mxu0 0.0
  %849 = vmatpush.msra.mxu0 0.0
  %850 = vmatpush.msra.mxu0 0.0
  %851 = vmatpush.msra.mxu0 0.0
  %852 = vmatpush.msra.mxu0 0.0
  %853 = vmatpush.msra.mxu0 0.0
  %854 = vmatpush.msra.mxu0 %v713
  %855 = vmatpush.msra.mxu0 %v709
  %856 = vmatpush.msra.mxu0 %v705
  %857 = vmatpush.msra.mxu0 %v701
  %858 = vmatmul.f32.gmra.mxu0 %v800
  %v859 = vpop.f32.mrf.mxu0
  %v860 = vadd.f32 0.0, %v859
  %861 = vdwg.mxu0
  %862 = vmatpush.msra.mxu0 0.0
  %863 = vmatpush.msra.mxu0 0.0
  %864 = vmatpush.msra.mxu0 0.0
  %865 = vmatpush.msra.mxu0 0.0
  %866 = vmatpush.msra.mxu0 0.0
  %867 = vmatpush.msra.mxu0 0.0
  %868 = vmatpush.msra.mxu0 0.0
  %869 = vmatpush.msra.mxu0 0.0
  %870 = vmatpush.msra.mxu0 0.0
  %871 = vmatpush.msra.mxu0 0.0
  %872 = vmatpush.msra.mxu0 0.0
  %873 = vmatpush.msra.mxu0 0.0
  %874 = vmatpush.msra.mxu0 %v714
  %875 = vmatpush.msra.mxu0 %v710
  %876 = vmatpush.msra.mxu0 %v706
  %877 = vmatpush.msra.mxu0 %v702
  %878 = vmatmul.f32.gmra.mxu0 %v800
  %v879 = vpop.f32.mrf.mxu0
  %v880 = vadd.f32 0.0, %v879
  %881 = vdwg.mxu0
  %v882 = vperm.slane %v736, 0
  %v883 = vperm.slane %v756, 0
  %v884 = vperm.slane %v776, 0
  %v885 = vperm.slane %v796, 0
  %v886 = vmul.f32 %v342, %v882
  %v887 = vmul.f32 %v355, %v883
  %v888 = vmul.f32 %v368, %v884
  %v889 = vmul.f32 %v381, %v885
  %v890 = vperm.slane %v820, 0
  %v891 = vperm.slane %v840, 0
  %v892 = vperm.slane %v860, 0
  %v893 = vperm.slane %v880, 0
  %v894 = vadd.f32 %v886, %v890
  %v895 = vadd.f32 %v887, %v891
  %v896 = vadd.f32 %v888, %v892
  %v897 = vadd.f32 %v889, %v893
  %v898 = vmax.f32 %v894, 0.0
  %v899 = vmax.f32 %v895, 0.0
  %v900 = vmax.f32 %v896, 0.0
  %v901 = vmax.f32 %v897, 0.0
  %v903 = vrot.slane %v898, 1
  %905 = vst [vmem:[#allocation2 + $0x1] sm:$0x1] %v898
  %906 = vst [vmem:[#allocation2 + $0x9] sm:$0x1] %v903
  %v908 = vrot.slane %v899, 1
  %910 = vst [vmem:[#allocation2 + $0x2] sm:$0x1] %v899
  %911 = vst [vmem:[#allocation2 + $0xa] sm:$0x1] %v908
  %v913 = vrot.slane %v900, 1
  %915 = vst [vmem:[#allocation2 + $0x3] sm:$0x1] %v900
  %916 = vst [vmem:[#allocation2 + $0xb] sm:$0x1] %v913
  %v918 = vrot.slane %v901, 1
  %920 = vst [vmem:[#allocation2 + $0x4] sm:$0x1] %v901
  %921 = vst [vmem:[#allocation2 + $0xc] sm:$0x1] %v918
  %v922 = vld [vmem:[#allocation2] sm:$0xf]
  %v923 = vld [vmem:[#allocation2 + $0x8] sm:$0xf]
  %v924 = vld [vmem:[#allocation2 + $0x1] sm:$0xf]
  %v925 = vld [vmem:[#allocation2 + $0x9] sm:$0xf]
  %v930 = vrot.slane %v924, 4
  %v931 = vrot.slane %v925, 4
  %vm932 = vcmask 1043456
  %v933 = vsel %vm932, %v922, %v930
  %v934 = vsel %vm932, %v923, %v931
  %935 = vst [vmem:[#allocation1] ss:$2 sm:$0xff] %v933
  %s936 = scalar_lea.vmem [#allocation1], 1
  %937 = vst [vmem:[%s936] ss:$2 sm:$0xff] %v934
  %v938 = vld.sshfl [vmem:[#allocation1] sm:$0xff pattern:$0x75316420]
  %v939 = vld.sshfl [vmem:[#allocation1 + $0x8] sm:$0xff pattern:$0x75316420]
  %v942 = vpack.c.bf16 %v938, %v938
  %v943 = vpack.c.bf16 %v939, %v939
  %v944 = vld [vmem:[%s19] sm:$0xf]
  %v945 = vld [vmem:[%s19 + $0x4] sm:$0xf]
  %v946 = vld [vmem:[%s19 + $0x8] sm:$0xf]
  %v947 = vld [vmem:[%s19 + $0xc] sm:$0xf]
  %v948 = vld [vmem:[%s19 + $0x10] sm:$0xf]
  %v949 = vld [vmem:[%s19 + $0x14] sm:$0xf]
  %v950 = vld [vmem:[%s19 + $0x18] sm:$0xf]
  %v951 = vld [vmem:[%s19 + $0x1c] sm:$0xf]
  %v952 = vld [vmem:[%s19 + $0x20] sm:$0xf]
  %v953 = vld [vmem:[%s19 + $0x24] sm:$0xf]
  %v954 = vld [vmem:[%s19 + $0x28] sm:$0xf]
  %v955 = vld [vmem:[%s19 + $0x2c] sm:$0xf]
  %v956 = vld [vmem:[%s19 + $0x30] sm:$0xf]
  %v957 = vld [vmem:[%s19 + $0x34] sm:$0xf]
  %v958 = vld [vmem:[%s19 + $0x38] sm:$0xf]
  %v959 = vld [vmem:[%s19 + $0x3c] sm:$0xf]
  %v960 = vld [vmem:[%s19 + $0x40] sm:$0xf]
  %v961 = vld [vmem:[%s19 + $0x44] sm:$0xf]
  %v962 = vld [vmem:[%s19 + $0x48] sm:$0xf]
  %v963 = vld [vmem:[%s19 + $0x4c] sm:$0xf]
  %v964 = vld [vmem:[%s19 + $0x50] sm:$0xf]
  %v965 = vld [vmem:[%s19 + $0x54] sm:$0xf]
  %v966 = vld [vmem:[%s19 + $0x58] sm:$0xf]
  %v967 = vld [vmem:[%s19 + $0x5c] sm:$0xf]
  %v968 = vld [vmem:[%s19 + $0x60] sm:$0xf]
  %v969 = vld [vmem:[%s19 + $0x64] sm:$0xf]
  %v970 = vld [vmem:[%s19 + $0x68] sm:$0xf]
  %v971 = vld [vmem:[%s19 + $0x6c] sm:$0xf]
  %v972 = vld [vmem:[%s19 + $0x70] sm:$0xf]
  %v973 = vld [vmem:[%s19 + $0x74] sm:$0xf]
  %v974 = vld [vmem:[%s19 + $0x78] sm:$0xf]
  %v975 = vld [vmem:[%s19 + $0x7c] sm:$0xf]
  %v1008 = vunpack.c.l.b16 %v944
  %v1009 = vunpack.c.l.b16 %v945
  %v1010 = vunpack.c.l.b16 %v946
  %v1011 = vunpack.c.l.b16 %v947
  %v1012 = vunpack.c.l.b16 %v948
  %v1013 = vunpack.c.l.b16 %v949
  %v1014 = vunpack.c.l.b16 %v950
  %v1015 = vunpack.c.l.b16 %v951
  %v1016 = vunpack.c.l.b16 %v952
  %v1017 = vunpack.c.l.b16 %v953
  %v1018 = vunpack.c.l.b16 %v954
  %v1019 = vunpack.c.l.b16 %v955
  %v1020 = vunpack.c.l.b16 %v956
  %v1021 = vunpack.c.l.b16 %v957
  %v1022 = vunpack.c.l.b16 %v958
  %v1023 = vunpack.c.l.b16 %v959
  %v1024 = vunpack.c.l.b16 %v960
  %v1025 = vunpack.c.l.b16 %v961
  %v1026 = vunpack.c.l.b16 %v962
  %v1027 = vunpack.c.l.b16 %v963
  %v1028 = vunpack.c.l.b16 %v964
  %v1029 = vunpack.c.l.b16 %v965
  %v1030 = vunpack.c.l.b16 %v966
  %v1031 = vunpack.c.l.b16 %v967
  %v1032 = vunpack.c.l.b16 %v968
  %v1033 = vunpack.c.l.b16 %v969
  %v1034 = vunpack.c.l.b16 %v970
  %v1035 = vunpack.c.l.b16 %v971
  %v1036 = vunpack.c.l.b16 %v972
  %v1037 = vunpack.c.l.b16 %v973
  %v1038 = vunpack.c.l.b16 %v974
  %v1039 = vunpack.c.l.b16 %v975
  %v1040 = vpack.c.b16 %v1009, %v1008
  %v1041 = vpack.c.b16 %v1011, %v1010
  %v1042 = vpack.c.b16 %v1013, %v1012
  %v1043 = vpack.c.b16 %v1015, %v1014
  %v1044 = vpack.c.b16 %v1017, %v1016
  %v1045 = vpack.c.b16 %v1019, %v1018
  %v1046 = vpack.c.b16 %v1021, %v1020
  %v1047 = vpack.c.b16 %v1023, %v1022
  %v1048 = vpack.c.b16 %v1025, %v1024
  %v1049 = vpack.c.b16 %v1027, %v1026
  %v1050 = vpack.c.b16 %v1029, %v1028
  %v1051 = vpack.c.b16 %v1031, %v1030
  %v1052 = vpack.c.b16 %v1033, %v1032
  %v1053 = vpack.c.b16 %v1035, %v1034
  %v1054 = vpack.c.b16 %v1037, %v1036
  %v1055 = vpack.c.b16 %v1039, %v1038
  %1072 = vmatpush.bf16.msra.mxu0 %v1047
  %1073 = vmatpush.bf16.msra.mxu0 %v1046
  %1074 = vmatpush.bf16.msra.mxu0 %v1045
  %1075 = vmatpush.bf16.msra.mxu0 %v1044
  %1076 = vmatpush.bf16.msra.mxu0 %v1043
  %1077 = vmatpush.bf16.msra.mxu0 %v1042
  %1078 = vmatpush.bf16.msra.mxu0 %v1041
  %1079 = vmatpush.bf16.msra.mxu0 %v1040
  %1080 = vmatmul.bf16.gmra.mxu0 %v942
  %v1081 = vpop.f32.mrf.mxu0
  %v1082 = vadd.f32 0.0, %v1081
  %v1083 = vpop.f32.mrf.mxu0
  %1084 = vdwg.mxu0
  %1085 = vmatpush.bf16.msra.mxu0 %v1055
  %1086 = vmatpush.bf16.msra.mxu0 %v1054
  %1087 = vmatpush.bf16.msra.mxu0 %v1053
  %1088 = vmatpush.bf16.msra.mxu0 %v1052
  %1089 = vmatpush.bf16.msra.mxu0 %v1051
  %1090 = vmatpush.bf16.msra.mxu0 %v1050
  %1091 = vmatpush.bf16.msra.mxu0 %v1049
  %1092 = vmatpush.bf16.msra.mxu0 %v1048
  %1093 = vmatmul.bf16.gmra.mxu0 %v943
  %v1094 = vpop.f32.mrf.mxu0
  %v1095 = vadd.f32 %v1082, %v1094
  %v1096 = vpop.f32.mrf.mxu0
  %1097 = vdwg.mxu0
  %v1098 = vld [vmem:[#allocation2 + $0x2] sm:$0xf]
  %v1099 = vld [vmem:[#allocation2 + $0xa] sm:$0xf]
  %v1102 = vrot.slane %v1098, 4
  %v1103 = vrot.slane %v1099, 4
  %v1104 = vsel %vm932, %v924, %v1102
  %v1105 = vsel %vm932, %v925, %v1103
  %1106 = vst [vmem:[#allocation1] ss:$2 sm:$0xff] %v1104
  %s1107 = scalar_lea.vmem [#allocation1], 1
  %1108 = vst [vmem:[%s1107] ss:$2 sm:$0xff] %v1105
  %v1109 = vld.sshfl [vmem:[#allocation1] sm:$0xff pattern:$0x75316420]
  %v1110 = vld.sshfl [vmem:[#allocation1 + $0x8] sm:$0xff pattern:$0x75316420]
  %v1113 = vpack.c.bf16 %v1109, %v1109
  %v1114 = vpack.c.bf16 %v1110, %v1110
  %v1115 = vld [vmem:[%s21] sm:$0xf]
  %v1116 = vld [vmem:[%s21 + $0x4] sm:$0xf]
  %v1117 = vld [vmem:[%s21 + $0x8] sm:$0xf]
  %v1118 = vld [vmem:[%s21 + $0xc] sm:$0xf]
  %v1119 = vld [vmem:[%s21 + $0x10] sm:$0xf]
  %v1120 = vld [vmem:[%s21 + $0x14] sm:$0xf]
  %v1121 = vld [vmem:[%s21 + $0x18] sm:$0xf]
  %v1122 = vld [vmem:[%s21 + $0x1c] sm:$0xf]
  %v1123 = vld [vmem:[%s21 + $0x20] sm:$0xf]
  %v1124 = vld [vmem:[%s21 + $0x24] sm:$0xf]
  %v1125 = vld [vmem:[%s21 + $0x28] sm:$0xf]
  %v1126 = vld [vmem:[%s21 + $0x2c] sm:$0xf]
  %v1127 = vld [vmem:[%s21 + $0x30] sm:$0xf]
  %v1128 = vld [vmem:[%s21 + $0x34] sm:$0xf]
  %v1129 = vld [vmem:[%s21 + $0x38] sm:$0xf]
  %v1130 = vld [vmem:[%s21 + $0x3c] sm:$0xf]
  %v1131 = vld [vmem:[%s21 + $0x40] sm:$0xf]
  %v1132 = vld [vmem:[%s21 + $0x44] sm:$0xf]
  %v1133 = vld [vmem:[%s21 + $0x48] sm:$0xf]
  %v1134 = vld [vmem:[%s21 + $0x4c] sm:$0xf]
  %v1135 = vld [vmem:[%s21 + $0x50] sm:$0xf]
  %v1136 = vld [vmem:[%s21 + $0x54] sm:$0xf]
  %v1137 = vld [vmem:[%s21 + $0x58] sm:$0xf]
  %v1138 = vld [vmem:[%s21 + $0x5c] sm:$0xf]
  %v1139 = vld [vmem:[%s21 + $0x60] sm:$0xf]
  %v1140 = vld [vmem:[%s21 + $0x64] sm:$0xf]
  %v1141 = vld [vmem:[%s21 + $0x68] sm:$0xf]
  %v1142 = vld [vmem:[%s21 + $0x6c] sm:$0xf]
  %v1143 = vld [vmem:[%s21 + $0x70] sm:$0xf]
  %v1144 = vld [vmem:[%s21 + $0x74] sm:$0xf]
  %v1145 = vld [vmem:[%s21 + $0x78] sm:$0xf]
  %v1146 = vld [vmem:[%s21 + $0x7c] sm:$0xf]
  %v1179 = vunpack.c.l.b16 %v1115
  %v1180 = vunpack.c.l.b16 %v1116
  %v1181 = vunpack.c.l.b16 %v1117
  %v1182 = vunpack.c.l.b16 %v1118
  %v1183 = vunpack.c.l.b16 %v1119
  %v1184 = vunpack.c.l.b16 %v1120
  %v1185 = vunpack.c.l.b16 %v1121
  %v1186 = vunpack.c.l.b16 %v1122
  %v1187 = vunpack.c.l.b16 %v1123
  %v1188 = vunpack.c.l.b16 %v1124
  %v1189 = vunpack.c.l.b16 %v1125
  %v1190 = vunpack.c.l.b16 %v1126
  %v1191 = vunpack.c.l.b16 %v1127
  %v1192 = vunpack.c.l.b16 %v1128
  %v1193 = vunpack.c.l.b16 %v1129
  %v1194 = vunpack.c.l.b16 %v1130
  %v1195 = vunpack.c.l.b16 %v1131
  %v1196 = vunpack.c.l.b16 %v1132
  %v1197 = vunpack.c.l.b16 %v1133
  %v1198 = vunpack.c.l.b16 %v1134
  %v1199 = vunpack.c.l.b16 %v1135
  %v1200 = vunpack.c.l.b16 %v1136
  %v1201 = vunpack.c.l.b16 %v1137
  %v1202 = vunpack.c.l.b16 %v1138
  %v1203 = vunpack.c.l.b16 %v1139
  %v1204 = vunpack.c.l.b16 %v1140
  %v1205 = vunpack.c.l.b16 %v1141
  %v1206 = vunpack.c.l.b16 %v1142
  %v1207 = vunpack.c.l.b16 %v1143
  %v1208 = vunpack.c.l.b16 %v1144
  %v1209 = vunpack.c.l.b16 %v1145
  %v1210 = vunpack.c.l.b16 %v1146
  %v1211 = vpack.c.b16 %v1180, %v1179
  %v1212 = vpack.c.b16 %v1182, %v1181
  %v1213 = vpack.c.b16 %v1184, %v1183
  %v1214 = vpack.c.b16 %v1186, %v1185
  %v1215 = vpack.c.b16 %v1188, %v1187
  %v1216 = vpack.c.b16 %v1190, %v1189
  %v1217 = vpack.c.b16 %v1192, %v1191
  %v1218 = vpack.c.b16 %v1194, %v1193
  %v1219 = vpack.c.b16 %v1196, %v1195
  %v1220 = vpack.c.b16 %v1198, %v1197
  %v1221 = vpack.c.b16 %v1200, %v1199
  %v1222 = vpack.c.b16 %v1202, %v1201
  %v1223 = vpack.c.b16 %v1204, %v1203
  %v1224 = vpack.c.b16 %v1206, %v1205
  %v1225 = vpack.c.b16 %v1208, %v1207
  %v1226 = vpack.c.b16 %v1210, %v1209
  %1243 = vmatpush.bf16.msra.mxu0 %v1218
  %1244 = vmatpush.bf16.msra.mxu0 %v1217
  %1245 = vmatpush.bf16.msra.mxu0 %v1216
  %1246 = vmatpush.bf16.msra.mxu0 %v1215
  %1247 = vmatpush.bf16.msra.mxu0 %v1214
  %1248 = vmatpush.bf16.msra.mxu0 %v1213
  %1249 = vmatpush.bf16.msra.mxu0 %v1212
  %1250 = vmatpush.bf16.msra.mxu0 %v1211
  %1251 = vmatmul.bf16.gmra.mxu0 %v1113
  %v1252 = vpop.f32.mrf.mxu0
  %v1253 = vadd.f32 0.0, %v1252
  %v1254 = vpop.f32.mrf.mxu0
  %1255 = vdwg.mxu0
  %1256 = vmatpush.bf16.msra.mxu0 %v1226
  %1257 = vmatpush.bf16.msra.mxu0 %v1225
  %1258 = vmatpush.bf16.msra.mxu0 %v1224
  %1259 = vmatpush.bf16.msra.mxu0 %v1223
  %1260 = vmatpush.bf16.msra.mxu0 %v1222
  %1261 = vmatpush.bf16.msra.mxu0 %v1221
  %1262 = vmatpush.bf16.msra.mxu0 %v1220
  %1263 = vmatpush.bf16.msra.mxu0 %v1219
  %1264 = vmatmul.bf16.gmra.mxu0 %v1114
  %v1265 = vpop.f32.mrf.mxu0
  %v1266 = vadd.f32 %v1253, %v1265
  %v1267 = vpop.f32.mrf.mxu0
  %1268 = vdwg.mxu0
  %v1269 = vrot.slane %v1095, 4
  %v1270 = vadd.f32 %v1095, %v1269
  %v1271 = vrot.slane %v1270, 2
  %v1272 = vadd.f32 %v1270, %v1271
  %v1273 = vrot.slane %v1272, 1
  %v1274 = vadd.f32 %v1272, %v1273
  %v1275 = vrot.slane %v1266, 4
  %v1276 = vadd.f32 %v1266, %v1275
  %v1277 = vrot.slane %v1276, 2
  %v1278 = vadd.f32 %v1276, %v1277
  %v1279 = vrot.slane %v1278, 1
  %v1280 = vadd.f32 %v1278, %v1279
  %v1281 = vadd.f32 %v1274, %v1280
  %v1282 = vmul.f32 %v1095, %v1095
  %v1283 = vrot.slane %v1282, 4
  %v1284 = vadd.f32 %v1282, %v1283
  %v1285 = vrot.slane %v1284, 2
  %v1286 = vadd.f32 %v1284, %v1285
  %v1287 = vrot.slane %v1286, 1
  %v1288 = vadd.f32 %v1286, %v1287
  %v1289 = vmul.f32 %v1266, %v1266
  %v1290 = vrot.slane %v1289, 4
  %v1291 = vadd.f32 %v1289, %v1290
  %v1292 = vrot.slane %v1291, 2
  %v1293 = vadd.f32 %v1291, %v1292
  %v1294 = vrot.slane %v1293, 1
  %v1295 = vadd.f32 %v1293, %v1294
  %v1296 = vadd.f32 %v1288, %v1295
  %v1297 = vld [vmem:[%s27] sm:$0xff]
  %v1298 = vld [vmem:[%s27 + $0x8] sm:$0xff]
  %v1299 = vld [vmem:[%s27 + $0x10] sm:$0xff]
  %v1300 = vld [vmem:[%s27 + $0x18] sm:$0xff]
  %v1301 = vld [vmem:[%s27 + $0x20] sm:$0xff]
  %v1302 = vld [vmem:[%s27 + $0x28] sm:$0xff]
  %v1303 = vld [vmem:[%s27 + $0x30] sm:$0xff]
  %v1304 = vld [vmem:[%s27 + $0x38] sm:$0xff]
  %v1305 = vld [vmem:[%s27 + $0x40] sm:$0xff]
  %v1306 = vld [vmem:[%s27 + $0x48] sm:$0xff]
  %v1307 = vld [vmem:[%s27 + $0x50] sm:$0xff]
  %v1308 = vld [vmem:[%s27 + $0x58] sm:$0xff]
  %v1309 = vld [vmem:[%s27 + $0x60] sm:$0xff]
  %v1310 = vld [vmem:[%s27 + $0x68] sm:$0xff]
  %v1311 = vld [vmem:[%s27 + $0x70] sm:$0xff]
  %v1312 = vld [vmem:[%s27 + $0x78] sm:$0xff]
  %1313 = vmatpush.msra.mxu0 %v1312
  %1314 = vmatpush.msra.mxu0 %v1311
  %1315 = vmatpush.msra.mxu0 %v1310
  %1316 = vmatpush.msra.mxu0 %v1309
  %1317 = vmatpush.msra.mxu0 %v1308
  %1318 = vmatpush.msra.mxu0 %v1307
  %1319 = vmatpush.msra.mxu0 %v1306
  %1320 = vmatpush.msra.mxu0 %v1305
  %1321 = vmatpush.msra.mxu0 %v1304
  %1322 = vmatpush.msra.mxu0 %v1303
  %1323 = vmatpush.msra.mxu0 %v1302
  %1324 = vmatpush.msra.mxu0 %v1301
  %1325 = vmatpush.msra.mxu0 %v1300
  %1326 = vmatpush.msra.mxu0 %v1299
  %1327 = vmatpush.msra.mxu0 %v1298
  %1328 = vmatpush.msra.mxu0 %v1297
  %1329 = vmatmul.f32.gmra.mxu0 %v1281
  %v1330 = vpop.f32.mrf.mxu0
  %v1331 = vadd.f32 0.0, %v1330
  %1332 = vdwg.mxu0
  %1333 = vmatpush.msra.mxu0 %v1312
  %1334 = vmatpush.msra.mxu0 %v1311
  %1335 = vmatpush.msra.mxu0 %v1310
  %1336 = vmatpush.msra.mxu0 %v1309
  %1337 = vmatpush.msra.mxu0 %v1308
  %1338 = vmatpush.msra.mxu0 %v1307
  %1339 = vmatpush.msra.mxu0 %v1306
  %1340 = vmatpush.msra.mxu0 %v1305
  %1341 = vmatpush.msra.mxu0 %v1304
  %1342 = vmatpush.msra.mxu0 %v1303
  %1343 = vmatpush.msra.mxu0 %v1302
  %1344 = vmatpush.msra.mxu0 %v1301
  %1345 = vmatpush.msra.mxu0 %v1300
  %1346 = vmatpush.msra.mxu0 %v1299
  %1347 = vmatpush.msra.mxu0 %v1298
  %1348 = vmatpush.msra.mxu0 %v1297
  %1349 = vmatmul.f32.gmra.mxu0 %v1296
  %v1350 = vpop.f32.mrf.mxu0
  %v1351 = vadd.f32 0.0, %v1350
  %1352 = vdwg.mxu0
  %v1353 = vrcp.pop 128.0
  %v1354 = vmul.f32 128.0, %v1353
  %v1355 = vsub.f32 1.0, %v1354
  %v1356 = vmul.f32 %v1353, %v1355
  %v1357 = vadd.f32 %v1353, %v1356
  %vm1358 = vweird.f32 %v1353
  %v1359 = vsel %vm1358, %v1353, %v1357
  %v1360 = vmul.f32 %v1331, %v1359
  %v1361 = vmul.f32 %v1351, %v1359
  %v1362 = vmul.f32 %v1360, %v1360
  %v1363 = vsub.f32 %v1361, %v1362
  %v1364 = vmax.f32 %v1363, 0.0
  %v1365 = vld [vmem:[%s25] sm:$0x3]
  %v1366 = vadd.f32 %v1364, 1e-05
  %v1367 = vrsqrt.pop %v1366
  %v1368 = vmul.f32 %v1367, %v1366
  %v1369 = vmul.f32 %v1368, %v1367
  %v1370 = vmul.f32 0.5, %v1369
  %v1371 = vsub.f32 1.5, %v1370
  %v1372 = vmul.f32 %v1367, %v1371
  %vm1373 = vweird.f32 %v1366
  %vm1374 = vweird.f32 %v1367
  %vm1375 = vmor %vm1373, %vm1374
  %v1376 = vsel %vm1375, %v1367, %v1372
  %v1377 = vmul.f32 %v1365, %v1376
  %v1378 = vmul.f32 %v1360, %v1377
  %v1380 = vrot.slane %v1378, 7
  %v1382 = vsub.f32 %v1365, %v1380
  %v1383 = vld [vmem:[%s29] sm:$0xff]
  %v1384 = vld [vmem:[%s29 + $0x8] sm:$0xff]
  %v1386 = vsel %vm253, %v1377, 0
  %1388 = vmatpush.msra.mxu0 0.0
  %1389 = vmatpush.msra.mxu0 0.0
  %1390 = vmatpush.msra.mxu0 0.0
  %1391 = vmatpush.msra.mxu0 0.0
  %1392 = vmatpush.msra.mxu0 0.0
  %1393 = vmatpush.msra.mxu0 0.0
  %1394 = vmatpush.msra.mxu0 0.0
  %1395 = vmatpush.msra.mxu0 0.0
  %1396 = vmatpush.msra.mxu0 0.0
  %1397 = vmatpush.msra.mxu0 0.0
  %1398 = vmatpush.msra.mxu0 0.0
  %1399 = vmatpush.msra.mxu0 0.0
  %1400 = vmatpush.msra.mxu0 0.0
  %1401 = vmatpush.msra.mxu0 0.0
  %1402 = vmatpush.msra.mxu0 %v1384
  %1403 = vmatpush.msra.mxu0 %v1383
  %1404 = vmatmul.f32.gmra.mxu0 %v1386
  %v1405 = vpop.f32.mrf.mxu0
  %v1406 = vadd.f32 0.0, %v1405
  %1407 = vdwg.mxu0
  %v1409 = vrot.slane %v1382, 1
  %v1410 = vsel %vm253, %v1409, 0
  %1412 = vmatpush.msra.mxu0 0.0
  %1413 = vmatpush.msra.mxu0 0.0
  %1414 = vmatpush.msra.mxu0 0.0
  %1415 = vmatpush.msra.mxu0 0.0
  %1416 = vmatpush.msra.mxu0 0.0
  %1417 = vmatpush.msra.mxu0 0.0
  %1418 = vmatpush.msra.mxu0 0.0
  %1419 = vmatpush.msra.mxu0 0.0
  %1420 = vmatpush.msra.mxu0 0.0
  %1421 = vmatpush.msra.mxu0 0.0
  %1422 = vmatpush.msra.mxu0 0.0
  %1423 = vmatpush.msra.mxu0 0.0
  %1424 = vmatpush.msra.mxu0 0.0
  %1425 = vmatpush.msra.mxu0 0.0
  %1426 = vmatpush.msra.mxu0 %v1384
  %1427 = vmatpush.msra.mxu0 %v1383
  %1428 = vmatmul.f32.gmra.mxu0 %v1410
  %v1429 = vpop.f32.mrf.mxu0
  %v1430 = vadd.f32 0.0, %v1429
  %1431 = vdwg.mxu0
  %v1432 = vperm.slane %v1406, 0
  %v1433 = vmul.f32 %v1095, %v1432
  %v1434 = vperm.slane %v1430, 0
  %v1435 = vadd.f32 %v1433, %v1434
  %v1436 = vmax.f32 %v1435, 0.0
  %v1437 = vmul.f32 %v1266, %v1432
  %v1438 = vadd.f32 %v1437, %v1434
  %v1439 = vmax.f32 %v1438, 0.0
  %v1440 = vpack.c.bf16 %v1439, %v1436
  %v1441 = vld [vmem:[%s23] sm:$0xf]
  %v1442 = vld [vmem:[%s23 + $0x4] sm:$0xf]
  %v1445 = vunpack.c.l.b16 %v1441
  %v1446 = vunpack.c.l.b16 %v1442
  %v1447 = vpack.c.b16 %v1446, %v1445
  %v1449 = vsel %vm253, %v1447, 0
  %1451 = vmatpush.bf16.msra.mxu0 0
  %1452 = vmatpush.bf16.msra.mxu0 0
  %1453 = vmatpush.bf16.msra.mxu0 0
  %1454 = vmatpush.bf16.msra.mxu0 0
  %1455 = vmatpush.bf16.msra.mxu0 0
  %1456 = vmatpush.bf16.msra.mxu0 0
  %1457 = vmatpush.bf16.msra.mxu0 0
  %1458 = vmatpush.bf16.msra.mxu0 %v1440
  %1459 = vmatmul.bf16.gmra.mxu0 %v1449
  %v1460 = vpop.f32.mrf.mxu0
  %v1461 = vadd.f32 0.0, %v1460
  %v1462 = vpop.f32.mrf.mxu0
  %v1463 = vadd.f32 0.0, %v1462
  %1464 = vdwg.mxu0
  %1465 = vst [vmem:[#allocation3 + $0x1] sm:$0xff] %v1461
  %1466 = vst [vmem:[#allocation3 + $0x11] sm:$0xff] %v1463
  %v1467 = vld [vmem:[#allocation3] sm:$0xff]
  %v1468 = vld [vmem:[#allocation3 + $0x10] sm:$0xff]
  %v1469 = vld [vmem:[#allocation3 + $0x1] sm:$0xff]
  %v1470 = vld [vmem:[#allocation3 + $0x11] sm:$0xff]
  %v1471 = vpack.c.bf16 %v1468, %v1467
  %v1472 = vpack.c.bf16 %v1470, %v1469
  %v1473 = vld [vmem:[%s31] sm:$0xf]
  %v1474 = vld [vmem:[%s31 + $0x4] sm:$0xf]
  %v1475 = vld [vmem:[%s31 + $0x8] sm:$0xf]
  %v1476 = vld [vmem:[%s31 + $0xc] sm:$0xf]
  %v1477 = vld [vmem:[%s31 + $0x10] sm:$0xf]
  %v1478 = vld [vmem:[%s31 + $0x14] sm:$0xf]
  %v1479 = vld [vmem:[%s31 + $0x18] sm:$0xf]
  %v1480 = vld [vmem:[%s31 + $0x1c] sm:$0xf]
  %v1481 = vld [vmem:[%s31 + $0x20] sm:$0xf]
  %v1482 = vld [vmem:[%s31 + $0x24] sm:$0xf]
  %v1483 = vld [vmem:[%s31 + $0x28] sm:$0xf]
  %v1484 = vld [vmem:[%s31 + $0x2c] sm:$0xf]
  %v1485 = vld [vmem:[%s31 + $0x30] sm:$0xf]
  %v1486 = vld [vmem:[%s31 + $0x34] sm:$0xf]
  %v1487 = vld [vmem:[%s31 + $0x38] sm:$0xf]
  %v1488 = vld [vmem:[%s31 + $0x3c] sm:$0xf]
  %v1489 = vld [vmem:[%s31 + $0x40] sm:$0xf]
  %v1490 = vld [vmem:[%s31 + $0x44] sm:$0xf]
  %v1491 = vld [vmem:[%s31 + $0x48] sm:$0xf]
  %v1492 = vld [vmem:[%s31 + $0x4c] sm:$0xf]
  %v1493 = vld [vmem:[%s31 + $0x50] sm:$0xf]
  %v1494 = vld [vmem:[%s31 + $0x54] sm:$0xf]
  %v1495 = vld [vmem:[%s31 + $0x58] sm:$0xf]
  %v1496 = vld [vmem:[%s31 + $0x5c] sm:$0xf]
  %v1497 = vld [vmem:[%s31 + $0x60] sm:$0xf]
  %v1498 = vld [vmem:[%s31 + $0x64] sm:$0xf]
  %v1499 = vld [vmem:[%s31 + $0x68] sm:$0xf]
  %v1500 = vld [vmem:[%s31 + $0x6c] sm:$0xf]
  %v1501 = vld [vmem:[%s31 + $0x70] sm:$0xf]
  %v1502 = vld [vmem:[%s31 + $0x74] sm:$0xf]
  %v1503 = vld [vmem:[%s31 + $0x78] sm:$0xf]
  %v1504 = vld [vmem:[%s31 + $0x7c] sm:$0xf]
  %v1537 = vunpack.c.l.b16 %v1473
  %v1538 = vunpack.c.l.b16 %v1474
  %v1539 = vunpack.c.l.b16 %v1475
  %v1540 = vunpack.c.l.b16 %v1476
  %v1541 = vunpack.c.l.b16 %v1477
  %v1542 = vunpack.c.l.b16 %v1478
  %v1543 = vunpack.c.l.b16 %v1479
  %v1544 = vunpack.c.l.b16 %v1480
  %v1545 = vunpack.c.l.b16 %v1481
  %v1546 = vunpack.c.l.b16 %v1482
  %v1547 = vunpack.c.l.b16 %v1483
  %v1548 = vunpack.c.l.b16 %v1484
  %v1549 = vunpack.c.l.b16 %v1485
  %v1550 = vunpack.c.l.b16 %v1486
  %v1551 = vunpack.c.l.b16 %v1487
  %v1552 = vunpack.c.l.b16 %v1488
  %v1553 = vunpack.c.l.b16 %v1489
  %v1554 = vunpack.c.l.b16 %v1490
  %v1555 = vunpack.c.l.b16 %v1491
  %v1556 = vunpack.c.l.b16 %v1492
  %v1557 = vunpack.c.l.b16 %v1493
  %v1558 = vunpack.c.l.b16 %v1494
  %v1559 = vunpack.c.l.b16 %v1495
  %v1560 = vunpack.c.l.b16 %v1496
  %v1561 = vunpack.c.l.b16 %v1497
  %v1562 = vunpack.c.l.b16 %v1498
  %v1563 = vunpack.c.l.b16 %v1499
  %v1564 = vunpack.c.l.b16 %v1500
  %v1565 = vunpack.c.l.b16 %v1501
  %v1566 = vunpack.c.l.b16 %v1502
  %v1567 = vunpack.c.l.b16 %v1503
  %v1568 = vunpack.c.l.b16 %v1504
  %v1569 = vpack.c.b16 %v1538, %v1537
  %v1570 = vpack.c.b16 %v1540, %v1539
  %v1571 = vpack.c.b16 %v1542, %v1541
  %v1572 = vpack.c.b16 %v1544, %v1543
  %v1573 = vpack.c.b16 %v1546, %v1545
  %v1574 = vpack.c.b16 %v1548, %v1547
  %v1575 = vpack.c.b16 %v1550, %v1549
  %v1576 = vpack.c.b16 %v1552, %v1551
  %v1577 = vpack.c.b16 %v1554, %v1553
  %v1578 = vpack.c.b16 %v1556, %v1555
  %v1579 = vpack.c.b16 %v1558, %v1557
  %v1580 = vpack.c.b16 %v1560, %v1559
  %v1581 = vpack.c.b16 %v1562, %v1561
  %v1582 = vpack.c.b16 %v1564, %v1563
  %v1583 = vpack.c.b16 %v1566, %v1565
  %v1584 = vpack.c.b16 %v1568, %v1567
  %1601 = vmatpush.bf16.msra.mxu0 %v1576
  %1602 = vmatpush.bf16.msra.mxu0 %v1575
  %1603 = vmatpush.bf16.msra.mxu0 %v1574
  %1604 = vmatpush.bf16.msra.mxu0 %v1573
  %1605 = vmatpush.bf16.msra.mxu0 %v1572
  %1606 = vmatpush.bf16.msra.mxu0 %v1571
  %1607 = vmatpush.bf16.msra.mxu0 %v1570
  %1608 = vmatpush.bf16.msra.mxu0 %v1569
  %1609 = vmatmul.bf16.gmra.mxu0 %v1471
  %v1610 = vpop.f32.mrf.mxu0
  %v1611 = vadd.f32 0.0, %v1610
  %v1612 = vpop.f32.mrf.mxu0
  %v1613 = vadd.f32 0.0, %v1612
  %1614 = vdwg.mxu0
  %1615 = vmatpush.bf16.msra.mxu0 %v1584
  %1616 = vmatpush.bf16.msra.mxu0 %v1583
  %1617 = vmatpush.bf16.msra.mxu0 %v1582
  %1618 = vmatpush.bf16.msra.mxu0 %v1581
  %1619 = vmatpush.bf16.msra.mxu0 %v1580
  %1620 = vmatpush.bf16.msra.mxu0 %v1579
  %1621 = vmatpush.bf16.msra.mxu0 %v1578
  %1622 = vmatpush.bf16.msra.mxu0 %v1577
  %1623 = vmatmul.bf16.gmra.mxu0 %v1472
  %v1624 = vpop.f32.mrf.mxu0
  %v1625 = vadd.f32 %v1611, %v1624
  %v1626 = vpop.f32.mrf.mxu0
  %v1627 = vadd.f32 %v1613, %v1626
  %1628 = vdwg.mxu0
  %v1629 = vld [vmem:[#allocation3 + $0x2] sm:$0xff]
  %v1630 = vld [vmem:[#allocation3 + $0x12] sm:$0xff]
  %v1631 = vpack.c.bf16 %v1630, %v1629
  %v1632 = vld [vmem:[%s33] sm:$0xf]
  %v1633 = vld [vmem:[%s33 + $0x4] sm:$0xf]
  %v1634 = vld [vmem:[%s33 + $0x8] sm:$0xf]
  %v1635 = vld [vmem:[%s33 + $0xc] sm:$0xf]
  %v1636 = vld [vmem:[%s33 + $0x10] sm:$0xf]
  %v1637 = vld [vmem:[%s33 + $0x14] sm:$0xf]
  %v1638 = vld [vmem:[%s33 + $0x18] sm:$0xf]
  %v1639 = vld [vmem:[%s33 + $0x1c] sm:$0xf]
  %v1640 = vld [vmem:[%s33 + $0x20] sm:$0xf]
  %v1641 = vld [vmem:[%s33 + $0x24] sm:$0xf]
  %v1642 = vld [vmem:[%s33 + $0x28] sm:$0xf]
  %v1643 = vld [vmem:[%s33 + $0x2c] sm:$0xf]
  %v1644 = vld [vmem:[%s33 + $0x30] sm:$0xf]
  %v1645 = vld [vmem:[%s33 + $0x34] sm:$0xf]
  %v1646 = vld [vmem:[%s33 + $0x38] sm:$0xf]
  %v1647 = vld [vmem:[%s33 + $0x3c] sm:$0xf]
  %v1648 = vld [vmem:[%s33 + $0x40] sm:$0xf]
  %v1649 = vld [vmem:[%s33 + $0x44] sm:$0xf]
  %v1650 = vld [vmem:[%s33 + $0x48] sm:$0xf]
  %v1651 = vld [vmem:[%s33 + $0x4c] sm:$0xf]
  %v1652 = vld [vmem:[%s33 + $0x50] sm:$0xf]
  %v1653 = vld [vmem:[%s33 + $0x54] sm:$0xf]
  %v1654 = vld [vmem:[%s33 + $0x58] sm:$0xf]
  %v1655 = vld [vmem:[%s33 + $0x5c] sm:$0xf]
  %v1656 = vld [vmem:[%s33 + $0x60] sm:$0xf]
  %v1657 = vld [vmem:[%s33 + $0x64] sm:$0xf]
  %v1658 = vld [vmem:[%s33 + $0x68] sm:$0xf]
  %v1659 = vld [vmem:[%s33 + $0x6c] sm:$0xf]
  %v1660 = vld [vmem:[%s33 + $0x70] sm:$0xf]
  %v1661 = vld [vmem:[%s33 + $0x74] sm:$0xf]
  %v1662 = vld [vmem:[%s33 + $0x78] sm:$0xf]
  %v1663 = vld [vmem:[%s33 + $0x7c] sm:$0xf]
  %v1696 = vunpack.c.l.b16 %v1632
  %v1697 = vunpack.c.l.b16 %v1633
  %v1698 = vunpack.c.l.b16 %v1634
  %v1699 = vunpack.c.l.b16 %v1635
  %v1700 = vunpack.c.l.b16 %v1636
  %v1701 = vunpack.c.l.b16 %v1637
  %v1702 = vunpack.c.l.b16 %v1638
  %v1703 = vunpack.c.l.b16 %v1639
  %v1704 = vunpack.c.l.b16 %v1640
  %v1705 = vunpack.c.l.b16 %v1641
  %v1706 = vunpack.c.l.b16 %v1642
  %v1707 = vunpack.c.l.b16 %v1643
  %v1708 = vunpack.c.l.b16 %v1644
  %v1709 = vunpack.c.l.b16 %v1645
  %v1710 = vunpack.c.l.b16 %v1646
  %v1711 = vunpack.c.l.b16 %v1647
  %v1712 = vunpack.c.l.b16 %v1648
  %v1713 = vunpack.c.l.b16 %v1649
  %v1714 = vunpack.c.l.b16 %v1650
  %v1715 = vunpack.c.l.b16 %v1651
  %v1716 = vunpack.c.l.b16 %v1652
  %v1717 = vunpack.c.l.b16 %v1653
  %v1718 = vunpack.c.l.b16 %v1654
  %v1719 = vunpack.c.l.b16 %v1655
  %v1720 = vunpack.c.l.b16 %v1656
  %v1721 = vunpack.c.l.b16 %v1657
  %v1722 = vunpack.c.l.b16 %v1658
  %v1723 = vunpack.c.l.b16 %v1659
  %v1724 = vunpack.c.l.b16 %v1660
  %v1725 = vunpack.c.l.b16 %v1661
  %v1726 = vunpack.c.l.b16 %v1662
  %v1727 = vunpack.c.l.b16 %v1663
  %v1728 = vpack.c.b16 %v1697, %v1696
  %v1729 = vpack.c.b16 %v1699, %v1698
  %v1730 = vpack.c.b16 %v1701, %v1700
  %v1731 = vpack.c.b16 %v1703, %v1702
  %v1732 = vpack.c.b16 %v1705, %v1704
  %v1733 = vpack.c.b16 %v1707, %v1706
  %v1734 = vpack.c.b16 %v1709, %v1708
  %v1735 = vpack.c.b16 %v1711, %v1710
  %v1736 = vpack.c.b16 %v1713, %v1712
  %v1737 = vpack.c.b16 %v1715, %v1714
  %v1738 = vpack.c.b16 %v1717, %v1716
  %v1739 = vpack.c.b16 %v1719, %v1718
  %v1740 = vpack.c.b16 %v1721, %v1720
  %v1741 = vpack.c.b16 %v1723, %v1722
  %v1742 = vpack.c.b16 %v1725, %v1724
  %v1743 = vpack.c.b16 %v1727, %v1726
  %1760 = vmatpush.bf16.msra.mxu0 %v1735
  %1761 = vmatpush.bf16.msra.mxu0 %v1734
  %1762 = vmatpush.bf16.msra.mxu0 %v1733
  %1763 = vmatpush.bf16.msra.mxu0 %v1732
  %1764 = vmatpush.bf16.msra.mxu0 %v1731
  %1765 = vmatpush.bf16.msra.mxu0 %v1730
  %1766 = vmatpush.bf16.msra.mxu0 %v1729
  %1767 = vmatpush.bf16.msra.mxu0 %v1728
  %1768 = vmatmul.bf16.gmra.mxu0 %v1472
  %v1769 = vpop.f32.mrf.mxu0
  %v1770 = vadd.f32 0.0, %v1769
  %v1771 = vpop.f32.mrf.mxu0
  %v1772 = vadd.f32 0.0, %v1771
  %1773 = vdwg.mxu0
  %1774 = vmatpush.bf16.msra.mxu0 %v1743
  %1775 = vmatpush.bf16.msra.mxu0 %v1742
  %1776 = vmatpush.bf16.msra.mxu0 %v1741
  %1777 = vmatpush.bf16.msra.mxu0 %v1740
  %1778 = vmatpush.bf16.msra.mxu0 %v1739
  %1779 = vmatpush.bf16.msra.mxu0 %v1738
  %1780 = vmatpush.bf16.msra.mxu0 %v1737
  %1781 = vmatpush.bf16.msra.mxu0 %v1736
  %1782 = vmatmul.bf16.gmra.mxu0 %v1631
  %v1783 = vpop.f32.mrf.mxu0
  %v1784 = vadd.f32 %v1770, %v1783
  %v1785 = vpop.f32.mrf.mxu0
  %v1786 = vadd.f32 %v1772, %v1785
  %1787 = vdwg.mxu0
  %v1788 = vadd.f32 %v1625, %v1627
  %v1789 = vrot.slane %v1788, 4
  %v1790 = vadd.f32 %v1788, %v1789
  %v1791 = vrot.slane %v1790, 2
  %v1792 = vadd.f32 %v1790, %v1791
  %v1793 = vrot.slane %v1792, 1
  %v1794 = vadd.f32 %v1792, %v1793
  %v1795 = vadd.f32 %v1784, %v1786
  %v1796 = vrot.slane %v1795, 4
  %v1797 = vadd.f32 %v1795, %v1796
  %v1798 = vrot.slane %v1797, 2
  %v1799 = vadd.f32 %v1797, %v1798
  %v1800 = vrot.slane %v1799, 1
  %v1801 = vadd.f32 %v1799, %v1800
  %v1802 = vadd.f32 %v1794, %v1801
  %v1803 = vmul.f32 %v1625, %v1625
  %v1804 = vmul.f32 %v1627, %v1627
  %v1805 = vadd.f32 %v1803, %v1804
  %v1806 = vrot.slane %v1805, 4
  %v1807 = vadd.f32 %v1805, %v1806
  %v1808 = vrot.slane %v1807, 2
  %v1809 = vadd.f32 %v1807, %v1808
  %v1810 = vrot.slane %v1809, 1
  %v1811 = vadd.f32 %v1809, %v1810
  %v1812 = vmul.f32 %v1784, %v1784
  %v1813 = vmul.f32 %v1786, %v1786
  %v1814 = vadd.f32 %v1812, %v1813
  %v1815 = vrot.slane %v1814, 4
  %v1816 = vadd.f32 %v1814, %v1815
  %v1817 = vrot.slane %v1816, 2
  %v1818 = vadd.f32 %v1816, %v1817
  %v1819 = vrot.slane %v1818, 1
  %v1820 = vadd.f32 %v1818, %v1819
  %v1821 = vadd.f32 %v1811, %v1820
  %v1822 = vld [vmem:[%s39] sm:$0xff]
  %v1823 = vld [vmem:[%s39 + $0x8] sm:$0xff]
  %v1824 = vld [vmem:[%s39 + $0x10] sm:$0xff]
  %v1825 = vld [vmem:[%s39 + $0x18] sm:$0xff]
  %v1826 = vld [vmem:[%s39 + $0x20] sm:$0xff]
  %v1827 = vld [vmem:[%s39 + $0x28] sm:$0xff]
  %v1828 = vld [vmem:[%s39 + $0x30] sm:$0xff]
  %v1829 = vld [vmem:[%s39 + $0x38] sm:$0xff]
  %v1830 = vld [vmem:[%s39 + $0x40] sm:$0xff]
  %v1831 = vld [vmem:[%s39 + $0x48] sm:$0xff]
  %v1832 = vld [vmem:[%s39 + $0x50] sm:$0xff]
  %v1833 = vld [vmem:[%s39 + $0x58] sm:$0xff]
  %v1834 = vld [vmem:[%s39 + $0x60] sm:$0xff]
  %v1835 = vld [vmem:[%s39 + $0x68] sm:$0xff]
  %v1836 = vld [vmem:[%s39 + $0x70] sm:$0xff]
  %v1837 = vld [vmem:[%s39 + $0x78] sm:$0xff]
  %1838 = vmatpush.msra.mxu0 %v1837
  %1839 = vmatpush.msra.mxu0 %v1836
  %1840 = vmatpush.msra.mxu0 %v1835
  %1841 = vmatpush.msra.mxu0 %v1834
  %1842 = vmatpush.msra.mxu0 %v1833
  %1843 = vmatpush.msra.mxu0 %v1832
  %1844 = vmatpush.msra.mxu0 %v1831
  %1845 = vmatpush.msra.mxu0 %v1830
  %1846 = vmatpush.msra.mxu0 %v1829
  %1847 = vmatpush.msra.mxu0 %v1828
  %1848 = vmatpush.msra.mxu0 %v1827
  %1849 = vmatpush.msra.mxu0 %v1826
  %1850 = vmatpush.msra.mxu0 %v1825
  %1851 = vmatpush.msra.mxu0 %v1824
  %1852 = vmatpush.msra.mxu0 %v1823
  %1853 = vmatpush.msra.mxu0 %v1822
  %1854 = vmatmul.f32.gmra.mxu0 %v1802
  %v1855 = vpop.f32.mrf.mxu0
  %v1856 = vadd.f32 0.0, %v1855
  %1857 = vdwg.mxu0
  %1858 = vmatpush.msra.mxu0 %v1837
  %1859 = vmatpush.msra.mxu0 %v1836
  %1860 = vmatpush.msra.mxu0 %v1835
  %1861 = vmatpush.msra.mxu0 %v1834
  %1862 = vmatpush.msra.mxu0 %v1833
  %1863 = vmatpush.msra.mxu0 %v1832
  %1864 = vmatpush.msra.mxu0 %v1831
  %1865 = vmatpush.msra.mxu0 %v1830
  %1866 = vmatpush.msra.mxu0 %v1829
  %1867 = vmatpush.msra.mxu0 %v1828
  %1868 = vmatpush.msra.mxu0 %v1827
  %1869 = vmatpush.msra.mxu0 %v1826
  %1870 = vmatpush.msra.mxu0 %v1825
  %1871 = vmatpush.msra.mxu0 %v1824
  %1872 = vmatpush.msra.mxu0 %v1823
  %1873 = vmatpush.msra.mxu0 %v1822
  %1874 = vmatmul.f32.gmra.mxu0 %v1821
  %v1875 = vpop.f32.mrf.mxu0
  %v1876 = vadd.f32 0.0, %v1875
  %1877 = vdwg.mxu0
  %v1878 = vrcp.pop 512.0
  %v1879 = vmul.f32 512.0, %v1878
  %v1880 = vsub.f32 1.0, %v1879
  %v1881 = vmul.f32 %v1878, %v1880
  %v1882 = vadd.f32 %v1878, %v1881
  %vm1883 = vweird.f32 %v1878
  %v1884 = vsel %vm1883, %v1878, %v1882
  %v1885 = vmul.f32 %v1856, %v1884
  %v1886 = vmul.f32 %v1876, %v1884
  %v1887 = vmul.f32 %v1885, %v1885
  %v1888 = vsub.f32 %v1886, %v1887
  %v1889 = vmax.f32 %v1888, 0.0
  %v1890 = vld [vmem:[%s37] sm:$0x3]
  %v1891 = vadd.f32 %v1889, 1e-05
  %v1892 = vrsqrt.pop %v1891
  %v1893 = vmul.f32 %v1892, %v1891
  %v1894 = vmul.f32 %v1893, %v1892
  %v1895 = vmul.f32 0.5, %v1894
  %v1896 = vsub.f32 1.5, %v1895
  %v1897 = vmul.f32 %v1892, %v1896
  %vm1898 = vweird.f32 %v1891
  %vm1899 = vweird.f32 %v1892
  %vm1900 = vmor %vm1898, %vm1899
  %v1901 = vsel %vm1900, %v1892, %v1897
  %v1902 = vmul.f32 %v1890, %v1901
  %v1903 = vmul.f32 %v1885, %v1902
  %v1905 = vrot.slane %v1903, 7
  %v1907 = vsub.f32 %v1890, %v1905
  %v1908 = vld [vmem:[%s41] sm:$0xff]
  %vm1909 = vcmask 64512
  %v1911 = vsel %vm1909, %v1902, 0
  %1913 = vmatpush.msra.mxu0 0.0
  %1914 = vmatpush.msra.mxu0 0.0
  %1915 = vmatpush.msra.mxu0 0.0
  %1916 = vmatpush.msra.mxu0 0.0
  %1917 = vmatpush.msra.mxu0 0.0
  %1918 = vmatpush.msra.mxu0 0.0
  %1919 = vmatpush.msra.mxu0 0.0
  %1920 = vmatpush.msra.mxu0 0.0
  %1921 = vmatpush.msra.mxu0 0.0
  %1922 = vmatpush.msra.mxu0 0.0
  %1923 = vmatpush.msra.mxu0 0.0
  %1924 = vmatpush.msra.mxu0 0.0
  %1925 = vmatpush.msra.mxu0 0.0
  %1926 = vmatpush.msra.mxu0 0.0
  %1927 = vmatpush.msra.mxu0 0.0
  %1928 = vmatpush.msra.mxu0 %v1908
  %1929 = vmatmul.f32.gmra.mxu0 %v1911
  %v1930 = vpop.f32.mrf.mxu0
  %v1931 = vadd.f32 0.0, %v1930
  %1932 = vdwg.mxu0
  %v1934 = vrot.slane %v1907, 1
  %v1935 = vsel %vm1909, %v1934, 0
  %1937 = vmatpush.msra.mxu0 0.0
  %1938 = vmatpush.msra.mxu0 0.0
  %1939 = vmatpush.msra.mxu0 0.0
  %1940 = vmatpush.msra.mxu0 0.0
  %1941 = vmatpush.msra.mxu0 0.0
  %1942 = vmatpush.msra.mxu0 0.0
  %1943 = vmatpush.msra.mxu0 0.0
  %1944 = vmatpush.msra.mxu0 0.0
  %1945 = vmatpush.msra.mxu0 0.0
  %1946 = vmatpush.msra.mxu0 0.0
  %1947 = vmatpush.msra.mxu0 0.0
  %1948 = vmatpush.msra.mxu0 0.0
  %1949 = vmatpush.msra.mxu0 0.0
  %1950 = vmatpush.msra.mxu0 0.0
  %1951 = vmatpush.msra.mxu0 0.0
  %1952 = vmatpush.msra.mxu0 %v1908
  %1953 = vmatmul.f32.gmra.mxu0 %v1935
  %v1954 = vpop.f32.mrf.mxu0
  %v1955 = vadd.f32 0.0, %v1954
  %1956 = vdwg.mxu0
  %v1957 = vperm.slane %v1931, 0
  %v1958 = vmul.f32 %v1625, %v1957
  %v1959 = vmul.f32 %v1627, %v1957
  %v1960 = vperm.slane %v1955, 0
  %v1961 = vadd.f32 %v1958, %v1960
  %v1962 = vadd.f32 %v1959, %v1960
  %v1963 = vmax.f32 %v1961, 0.0
  %v1964 = vmax.f32 %v1962, 0.0
  %v1965 = vmul.f32 %v1784, %v1957
  %v1966 = vmul.f32 %v1786, %v1957
  %v1967 = vadd.f32 %v1965, %v1960
  %v1968 = vadd.f32 %v1966, %v1960
  %v1969 = vmax.f32 %v1967, 0.0
  %v1970 = vmax.f32 %v1968, 0.0
  %v1971 = vpack.c.bf16 %v1964, %v1963
  %v1972 = vpack.c.bf16 %v1970, %v1969
  %v1973 = vld [vmem:[%s35] sm:$0xf]
  %v1974 = vld [vmem:[%s35 + $0x4] sm:$0xf]
  %v1975 = vld [vmem:[%s35 + $0x8] sm:$0xf]
  %v1976 = vld [vmem:[%s35 + $0xc] sm:$0xf]
  %v1981 = vunpack.c.l.b16 %v1973
  %v1982 = vunpack.c.l.b16 %v1974
  %v1983 = vunpack.c.l.b16 %v1975
  %v1984 = vunpack.c.l.b16 %v1976
  %v1985 = vpack.c.b16 %v1982, %v1981
  %v1986 = vpack.c.b16 %v1984, %v1983
  %v1988 = vsel %vm150, %v1985, 0
  %v1991 = vsel %vm150, %v1986, 0
  %1993 = vmatpush.bf16.msra.mxu0 0
  %1994 = vmatpush.bf16.msra.mxu0 0
  %1995 = vmatpush.bf16.msra.mxu0 0
  %1996 = vmatpush.bf16.msra.mxu0 0
  %1997 = vmatpush.bf16.msra.mxu0 0
  %1998 = vmatpush.bf16.msra.mxu0 0
  %1999 = vmatpush.bf16.msra.mxu0 %v1972
  %2000 = vmatpush.bf16.msra.mxu0 %v1971
  %2001 = vmatmul.bf16.gmra.mxu0 %v1988
  %v2002 = vpop.f32.mrf.mxu0
  %v2003 = vadd.f32 0.0, %v2002
  %v2004 = vpop.f32.mrf.mxu0
  %v2005 = vadd.f32 0.0, %v2004
  %2006 = vmatmul.bf16.gmra.mxu0 %v1991
  %v2007 = vpop.f32.mrf.mxu0
  %v2008 = vadd.f32 0.0, %v2007
  %v2009 = vpop.f32.mrf.mxu0
  %v2010 = vadd.f32 0.0, %v2009
  %2011 = vdwg.mxu0
  %2012 = vst [vmem:[#allocation4 + $0x1] sm:$0xff] %v2003
  %2013 = vst [vmem:[#allocation4 + $0x9] sm:$0xff] %v2005
  %2014 = vst [vmem:[#allocation4 + $0x19] sm:$0xff] %v2008
  %2015 = vst [vmem:[#allocation4 + $0x21] sm:$0xff] %v2010
  %v2016 = vld [vmem:[#allocation4] sm:$0xff]
  %v2017 = vld [vmem:[#allocation4 + $0x8] sm:$0xff]
  %v2018 = vld [vmem:[#allocation4 + $0x18] sm:$0xff]
  %v2019 = vld [vmem:[#allocation4 + $0x20] sm:$0xff]
  %v2020 = vld [vmem:[#allocation4 + $0x1] sm:$0xff]
  %v2021 = vld [vmem:[#allocation4 + $0x9] sm:$0xff]
  %v2022 = vld [vmem:[#allocation4 + $0x19] sm:$0xff]
  %v2023 = vld [vmem:[#allocation4 + $0x21] sm:$0xff]
  %v2024 = vpack.c.bf16 %v2017, %v2016
  %v2025 = vpack.c.bf16 %v2021, %v2020
  %v2026 = vpack.c.bf16 %v2019, %v2018
  %v2027 = vpack.c.bf16 %v2023, %v2022
  %v2028 = vld [vmem:[%s43] sm:$0xf]
  %v2029 = vld [vmem:[%s43 + $0x4] sm:$0xf]
  %v2030 = vld [vmem:[%s43 + $0x8] sm:$0xf]
  %v2031 = vld [vmem:[%s43 + $0xc] sm:$0xf]
  %v2032 = vld [vmem:[%s43 + $0x10] sm:$0xf]
  %v2033 = vld [vmem:[%s43 + $0x14] sm:$0xf]
  %v2034 = vld [vmem:[%s43 + $0x18] sm:$0xf]
  %v2035 = vld [vmem:[%s43 + $0x1c] sm:$0xf]
  %v2036 = vld [vmem:[%s43 + $0x20] sm:$0xf]
  %v2037 = vld [vmem:[%s43 + $0x24] sm:$0xf]
  %v2038 = vld [vmem:[%s43 + $0x28] sm:$0xf]
  %v2039 = vld [vmem:[%s43 + $0x2c] sm:$0xf]
  %v2040 = vld [vmem:[%s43 + $0x30] sm:$0xf]
  %v2041 = vld [vmem:[%s43 + $0x34] sm:$0xf]
  %v2042 = vld [vmem:[%s43 + $0x38] sm:$0xf]
  %v2043 = vld [vmem:[%s43 + $0x3c] sm:$0xf]
  %v2044 = vld [vmem:[%s43 + $0x40] sm:$0xf]
  %v2045 = vld [vmem:[%s43 + $0x44] sm:$0xf]
  %v2046 = vld [vmem:[%s43 + $0x48] sm:$0xf]
  %v2047 = vld [vmem:[%s43 + $0x4c] sm:$0xf]
  %v2048 = vld [vmem:[%s43 + $0x50] sm:$0xf]
  %v2049 = vld [vmem:[%s43 + $0x54] sm:$0xf]
  %v2050 = vld [vmem:[%s43 + $0x58] sm:$0xf]
  %v2051 = vld [vmem:[%s43 + $0x5c] sm:$0xf]
  %v2052 = vld [vmem:[%s43 + $0x60] sm:$0xf]
  %v2053 = vld [vmem:[%s43 + $0x64] sm:$0xf]
  %v2054 = vld [vmem:[%s43 + $0x68] sm:$0xf]
  %v2055 = vld [vmem:[%s43 + $0x6c] sm:$0xf]
  %v2056 = vld [vmem:[%s43 + $0x70] sm:$0xf]
  %v2057 = vld [vmem:[%s43 + $0x74] sm:$0xf]
  %v2058 = vld [vmem:[%s43 + $0x78] sm:$0xf]
  %v2059 = vld [vmem:[%s43 + $0x7c] sm:$0xf]
  %v2092 = vunpack.c.l.b16 %v2028
  %v2093 = vunpack.c.l.b16 %v2029
  %v2094 = vunpack.c.l.b16 %v2030
  %v2095 = vunpack.c.l.b16 %v2031
  %v2096 = vunpack.c.l.b16 %v2032
  %v2097 = vunpack.c.l.b16 %v2033
  %v2098 = vunpack.c.l.b16 %v2034
  %v2099 = vunpack.c.l.b16 %v2035
  %v2100 = vunpack.c.l.b16 %v2036
  %v2101 = vunpack.c.l.b16 %v2037
  %v2102 = vunpack.c.l.b16 %v2038
  %v2103 = vunpack.c.l.b16 %v2039
  %v2104 = vunpack.c.l.b16 %v2040
  %v2105 = vunpack.c.l.b16 %v2041
  %v2106 = vunpack.c.l.b16 %v2042
  %v2107 = vunpack.c.l.b16 %v2043
  %v2108 = vunpack.c.l.b16 %v2044
  %v2109 = vunpack.c.l.b16 %v2045
  %v2110 = vunpack.c.l.b16 %v2046
  %v2111 = vunpack.c.l.b16 %v2047
  %v2112 = vunpack.c.l.b16 %v2048
  %v2113 = vunpack.c.l.b16 %v2049
  %v2114 = vunpack.c.l.b16 %v2050
  %v2115 = vunpack.c.l.b16 %v2051
  %v2116 = vunpack.c.l.b16 %v2052
  %v2117 = vunpack.c.l.b16 %v2053
  %v2118 = vunpack.c.l.b16 %v2054
  %v2119 = vunpack.c.l.b16 %v2055
  %v2120 = vunpack.c.l.b16 %v2056
  %v2121 = vunpack.c.l.b16 %v2057
  %v2122 = vunpack.c.l.b16 %v2058
  %v2123 = vunpack.c.l.b16 %v2059
  %v2124 = vpack.c.b16 %v2093, %v2092
  %v2125 = vpack.c.b16 %v2095, %v2094
  %v2126 = vpack.c.b16 %v2097, %v2096
  %v2127 = vpack.c.b16 %v2099, %v2098
  %v2128 = vpack.c.b16 %v2101, %v2100
  %v2129 = vpack.c.b16 %v2103, %v2102
  %v2130 = vpack.c.b16 %v2105, %v2104
  %v2131 = vpack.c.b16 %v2107, %v2106
  %v2132 = vpack.c.b16 %v2109, %v2108
  %v2133 = vpack.c.b16 %v2111, %v2110
  %v2134 = vpack.c.b16 %v2113, %v2112
  %v2135 = vpack.c.b16 %v2115, %v2114
  %v2136 = vpack.c.b16 %v2117, %v2116
  %v2137 = vpack.c.b16 %v2119, %v2118
  %v2138 = vpack.c.b16 %v2121, %v2120
  %v2139 = vpack.c.b16 %v2123, %v2122
  %2156 = vmatpush.bf16.msra.mxu0 %v2131
  %2157 = vmatpush.bf16.msra.mxu0 %v2130
  %2158 = vmatpush.bf16.msra.mxu0 %v2129
  %2159 = vmatpush.bf16.msra.mxu0 %v2128
  %2160 = vmatpush.bf16.msra.mxu0 %v2127
  %2161 = vmatpush.bf16.msra.mxu0 %v2126
  %2162 = vmatpush.bf16.msra.mxu0 %v2125
  %2163 = vmatpush.bf16.msra.mxu0 %v2124
  %2164 = vmatmul.bf16.gmra.mxu0 %v2024
  %v2165 = vpop.f32.mrf.mxu0
  %v2166 = vadd.f32 0.0, %v2165
  %v2167 = vpop.f32.mrf.mxu0
  %v2168 = vadd.f32 0.0, %v2167
  %2169 = vmatmul.bf16.gmra.mxu0 %v2026
  %v2170 = vpop.f32.mrf.mxu0
  %v2171 = vadd.f32 0.0, %v2170
  %v2172 = vpop.f32.mrf.mxu0
  %v2173 = vadd.f32 0.0, %v2172
  %2174 = vdwg.mxu0
  %2175 = vmatpush.bf16.msra.mxu0 %v2139
  %2176 = vmatpush.bf16.msra.mxu0 %v2138
  %2177 = vmatpush.bf16.msra.mxu0 %v2137
  %2178 = vmatpush.bf16.msra.mxu0 %v2136
  %2179 = vmatpush.bf16.msra.mxu0 %v2135
  %2180 = vmatpush.bf16.msra.mxu0 %v2134
  %2181 = vmatpush.bf16.msra.mxu0 %v2133
  %2182 = vmatpush.bf16.msra.mxu0 %v2132
  %2183 = vmatmul.bf16.gmra.mxu0 %v2025
  %v2184 = vpop.f32.mrf.mxu0
  %v2185 = vadd.f32 %v2166, %v2184
  %v2186 = vpop.f32.mrf.mxu0
  %v2187 = vadd.f32 %v2168, %v2186
  %2188 = vmatmul.bf16.gmra.mxu0 %v2027
  %v2189 = vpop.f32.mrf.mxu0
  %v2190 = vadd.f32 %v2171, %v2189
  %v2191 = vpop.f32.mrf.mxu0
  %v2192 = vadd.f32 %v2173, %v2191
  %2193 = vdwg.mxu0
  %v2194 = vld [vmem:[#allocation4 + $0x2] sm:$0xff]
  %v2195 = vld [vmem:[#allocation4 + $0xa] sm:$0xff]
  %v2196 = vld [vmem:[#allocation4 + $0x1a] sm:$0xff]
  %v2197 = vld [vmem:[#allocation4 + $0x22] sm:$0xff]
  %v2198 = vpack.c.bf16 %v2195, %v2194
  %v2199 = vpack.c.bf16 %v2197, %v2196
  %v2200 = vld [vmem:[%s45] sm:$0xf]
  %v2201 = vld [vmem:[%s45 + $0x4] sm:$0xf]
  %v2202 = vld [vmem:[%s45 + $0x8] sm:$0xf]
  %v2203 = vld [vmem:[%s45 + $0xc] sm:$0xf]
  %v2204 = vld [vmem:[%s45 + $0x10] sm:$0xf]
  %v2205 = vld [vmem:[%s45 + $0x14] sm:$0xf]
  %v2206 = vld [vmem:[%s45 + $0x18] sm:$0xf]
  %v2207 = vld [vmem:[%s45 + $0x1c] sm:$0xf]
  %v2208 = vld [vmem:[%s45 + $0x20] sm:$0xf]
  %v2209 = vld [vmem:[%s45 + $0x24] sm:$0xf]
  %v2210 = vld [vmem:[%s45 + $0x28] sm:$0xf]
  %v2211 = vld [vmem:[%s45 + $0x2c] sm:$0xf]
  %v2212 = vld [vmem:[%s45 + $0x30] sm:$0xf]
  %v2213 = vld [vmem:[%s45 + $0x34] sm:$0xf]
  %v2214 = vld [vmem:[%s45 + $0x38] sm:$0xf]
  %v2215 = vld [vmem:[%s45 + $0x3c] sm:$0xf]
  %v2216 = vld [vmem:[%s45 + $0x40] sm:$0xf]
  %v2217 = vld [vmem:[%s45 + $0x44] sm:$0xf]
  %v2218 = vld [vmem:[%s45 + $0x48] sm:$0xf]
  %v2219 = vld [vmem:[%s45 + $0x4c] sm:$0xf]
  %v2220 = vld [vmem:[%s45 + $0x50] sm:$0xf]
  %v2221 = vld [vmem:[%s45 + $0x54] sm:$0xf]
  %v2222 = vld [vmem:[%s45 + $0x58] sm:$0xf]
  %v2223 = vld [vmem:[%s45 + $0x5c] sm:$0xf]
  %v2224 = vld [vmem:[%s45 + $0x60] sm:$0xf]
  %v2225 = vld [vmem:[%s45 + $0x64] sm:$0xf]
  %v2226 = vld [vmem:[%s45 + $0x68] sm:$0xf]
  %v2227 = vld [vmem:[%s45 + $0x6c] sm:$0xf]
  %v2228 = vld [vmem:[%s45 + $0x70] sm:$0xf]
  %v2229 = vld [vmem:[%s45 + $0x74] sm:$0xf]
  %v2230 = vld [vmem:[%s45 + $0x78] sm:$0xf]
  %v2231 = vld [vmem:[%s45 + $0x7c] sm:$0xf]
  %v2264 = vunpack.c.l.b16 %v2200
  %v2265 = vunpack.c.l.b16 %v2201
  %v2266 = vunpack.c.l.b16 %v2202
  %v2267 = vunpack.c.l.b16 %v2203
  %v2268 = vunpack.c.l.b16 %v2204
  %v2269 = vunpack.c.l.b16 %v2205
  %v2270 = vunpack.c.l.b16 %v2206
  %v2271 = vunpack.c.l.b16 %v2207
  %v2272 = vunpack.c.l.b16 %v2208
  %v2273 = vunpack.c.l.b16 %v2209
  %v2274 = vunpack.c.l.b16 %v2210
  %v2275 = vunpack.c.l.b16 %v2211
  %v2276 = vunpack.c.l.b16 %v2212
  %v2277 = vunpack.c.l.b16 %v2213
  %v2278 = vunpack.c.l.b16 %v2214
  %v2279 = vunpack.c.l.b16 %v2215
  %v2280 = vunpack.c.l.b16 %v2216
  %v2281 = vunpack.c.l.b16 %v2217
  %v2282 = vunpack.c.l.b16 %v2218
  %v2283 = vunpack.c.l.b16 %v2219
  %v2284 = vunpack.c.l.b16 %v2220
  %v2285 = vunpack.c.l.b16 %v2221
  %v2286 = vunpack.c.l.b16 %v2222
  %v2287 = vunpack.c.l.b16 %v2223
  %v2288 = vunpack.c.l.b16 %v2224
  %v2289 = vunpack.c.l.b16 %v2225
  %v2290 = vunpack.c.l.b16 %v2226
  %v2291 = vunpack.c.l.b16 %v2227
  %v2292 = vunpack.c.l.b16 %v2228
  %v2293 = vunpack.c.l.b16 %v2229
  %v2294 = vunpack.c.l.b16 %v2230
  %v2295 = vunpack.c.l.b16 %v2231
  %v2296 = vpack.c.b16 %v2265, %v2264
  %v2297 = vpack.c.b16 %v2267, %v2266
  %v2298 = vpack.c.b16 %v2269, %v2268
  %v2299 = vpack.c.b16 %v2271, %v2270
  %v2300 = vpack.c.b16 %v2273, %v2272
  %v2301 = vpack.c.b16 %v2275, %v2274
  %v2302 = vpack.c.b16 %v2277, %v2276
  %v2303 = vpack.c.b16 %v2279, %v2278
  %v2304 = vpack.c.b16 %v2281, %v2280
  %v2305 = vpack.c.b16 %v2283, %v2282
  %v2306 = vpack.c.b16 %v2285, %v2284
  %v2307 = vpack.c.b16 %v2287, %v2286
  %v2308 = vpack.c.b16 %v2289, %v2288
  %v2309 = vpack.c.b16 %v2291, %v2290
  %v2310 = vpack.c.b16 %v2293, %v2292
  %v2311 = vpack.c.b16 %v2295, %v2294
  %2328 = vmatpush.bf16.msra.mxu0 %v2303
  %2329 = vmatpush.bf16.msra.mxu0 %v2302
  %2330 = vmatpush.bf16.msra.mxu0 %v2301
  %2331 = vmatpush.bf16.msra.mxu0 %v2300
  %2332 = vmatpush.bf16.msra.mxu0 %v2299
  %2333 = vmatpush.bf16.msra.mxu0 %v2298
  %2334 = vmatpush.bf16.msra.mxu0 %v2297
  %2335 = vmatpush.bf16.msra.mxu0 %v2296
  %2336 = vmatmul.bf16.gmra.mxu0 %v2025
  %v2337 = vpop.f32.mrf.mxu0
  %v2338 = vadd.f32 0.0, %v2337
  %v2339 = vpop.f32.mrf.mxu0
  %v2340 = vadd.f32 0.0, %v2339
  %2341 = vmatmul.bf16.gmra.mxu0 %v2027
  %v2342 = vpop.f32.mrf.mxu0
  %v2343 = vadd.f32 0.0, %v2342
  %v2344 = vpop.f32.mrf.mxu0
  %v2345 = vadd.f32 0.0, %v2344
  %2346 = vdwg.mxu0
  %2347 = vmatpush.bf16.msra.mxu0 %v2311
  %2348 = vmatpush.bf16.msra.mxu0 %v2310
  %2349 = vmatpush.bf16.msra.mxu0 %v2309
  %2350 = vmatpush.bf16.msra.mxu0 %v2308
  %2351 = vmatpush.bf16.msra.mxu0 %v2307
  %2352 = vmatpush.bf16.msra.mxu0 %v2306
  %2353 = vmatpush.bf16.msra.mxu0 %v2305
  %2354 = vmatpush.bf16.msra.mxu0 %v2304
  %2355 = vmatmul.bf16.gmra.mxu0 %v2198
  %v2356 = vpop.f32.mrf.mxu0
  %v2357 = vadd.f32 %v2338, %v2356
  %v2358 = vpop.f32.mrf.mxu0
  %v2359 = vadd.f32 %v2340, %v2358
  %2360 = vmatmul.bf16.gmra.mxu0 %v2199
  %v2361 = vpop.f32.mrf.mxu0
  %v2362 = vadd.f32 %v2343, %v2361
  %v2363 = vpop.f32.mrf.mxu0
  %v2364 = vadd.f32 %v2345, %v2363
  %2365 = vdwg.mxu0
  %v2366 = vadd.f32 %v2185, %v2187
  %v2367 = vadd.f32 %v2366, %v2190
  %v2368 = vadd.f32 %v2367, %v2192
  %v2369 = vrot.slane %v2368, 4
  %v2370 = vadd.f32 %v2368, %v2369
  %v2371 = vrot.slane %v2370, 2
  %v2372 = vadd.f32 %v2370, %v2371
  %v2373 = vrot.slane %v2372, 1
  %v2374 = vadd.f32 %v2372, %v2373
  %v2375 = vadd.f32 %v2357, %v2359
  %v2376 = vadd.f32 %v2375, %v2362
  %v2377 = vadd.f32 %v2376, %v2364
  %v2378 = vrot.slane %v2377, 4
  %v2379 = vadd.f32 %v2377, %v2378
  %v2380 = vrot.slane %v2379, 2
  %v2381 = vadd.f32 %v2379, %v2380
  %v2382 = vrot.slane %v2381, 1
  %v2383 = vadd.f32 %v2381, %v2382
  %v2384 = vadd.f32 %v2374, %v2383
  %v2385 = vmul.f32 %v2185, %v2185
  %v2386 = vmul.f32 %v2187, %v2187
  %v2387 = vmul.f32 %v2190, %v2190
  %v2388 = vmul.f32 %v2192, %v2192
  %v2389 = vadd.f32 %v2385, %v2386
  %v2390 = vadd.f32 %v2389, %v2387
  %v2391 = vadd.f32 %v2390, %v2388
  %v2392 = vrot.slane %v2391, 4
  %v2393 = vadd.f32 %v2391, %v2392
  %v2394 = vrot.slane %v2393, 2
  %v2395 = vadd.f32 %v2393, %v2394
  %v2396 = vrot.slane %v2395, 1
  %v2397 = vadd.f32 %v2395, %v2396
  %v2398 = vmul.f32 %v2357, %v2357
  %v2399 = vmul.f32 %v2359, %v2359
  %v2400 = vmul.f32 %v2362, %v2362
  %v2401 = vmul.f32 %v2364, %v2364
  %v2402 = vadd.f32 %v2398, %v2399
  %v2403 = vadd.f32 %v2402, %v2400
  %v2404 = vadd.f32 %v2403, %v2401
  %v2405 = vrot.slane %v2404, 4
  %v2406 = vadd.f32 %v2404, %v2405
  %v2407 = vrot.slane %v2406, 2
  %v2408 = vadd.f32 %v2406, %v2407
  %v2409 = vrot.slane %v2408, 1
  %v2410 = vadd.f32 %v2408, %v2409
  %v2411 = vadd.f32 %v2397, %v2410
  %v2412 = vld [vmem:[%s51] sm:$0xff]
  %v2413 = vld [vmem:[%s51 + $0x8] sm:$0xff]
  %v2414 = vld [vmem:[%s51 + $0x10] sm:$0xff]
  %v2415 = vld [vmem:[%s51 + $0x18] sm:$0xff]
  %v2416 = vld [vmem:[%s51 + $0x20] sm:$0xff]
  %v2417 = vld [vmem:[%s51 + $0x28] sm:$0xff]
  %v2418 = vld [vmem:[%s51 + $0x30] sm:$0xff]
  %v2419 = vld [vmem:[%s51 + $0x38] sm:$0xff]
  %v2420 = vld [vmem:[%s51 + $0x40] sm:$0xff]
  %v2421 = vld [vmem:[%s51 + $0x48] sm:$0xff]
  %v2422 = vld [vmem:[%s51 + $0x50] sm:$0xff]
  %v2423 = vld [vmem:[%s51 + $0x58] sm:$0xff]
  %v2424 = vld [vmem:[%s51 + $0x60] sm:$0xff]
  %v2425 = vld [vmem:[%s51 + $0x68] sm:$0xff]
  %v2426 = vld [vmem:[%s51 + $0x70] sm:$0xff]
  %v2427 = vld [vmem:[%s51 + $0x78] sm:$0xff]
  %2428 = vmatpush.msra.mxu0 %v2427
  %2429 = vmatpush.msra.mxu0 %v2426
  %2430 = vmatpush.msra.mxu0 %v2425
  %2431 = vmatpush.msra.mxu0 %v2424
  %2432 = vmatpush.msra.mxu0 %v2423
  %2433 = vmatpush.msra.mxu0 %v2422
  %2434 = vmatpush.msra.mxu0 %v2421
  %2435 = vmatpush.msra.mxu0 %v2420
  %2436 = vmatpush.msra.mxu0 %v2419
  %2437 = vmatpush.msra.mxu0 %v2418
  %2438 = vmatpush.msra.mxu0 %v2417
  %2439 = vmatpush.msra.mxu0 %v2416
  %2440 = vmatpush.msra.mxu0 %v2415
  %2441 = vmatpush.msra.mxu0 %v2414
  %2442 = vmatpush.msra.mxu0 %v2413
  %2443 = vmatpush.msra.mxu0 %v2412
  %2444 = vmatmul.f32.gmra.mxu0 %v2384
  %v2445 = vpop.f32.mrf.mxu0
  %v2446 = vadd.f32 0.0, %v2445
  %2447 = vdwg.mxu0
  %2448 = vmatpush.msra.mxu0 %v2427
  %2449 = vmatpush.msra.mxu0 %v2426
  %2450 = vmatpush.msra.mxu0 %v2425
  %2451 = vmatpush.msra.mxu0 %v2424
  %2452 = vmatpush.msra.mxu0 %v2423
  %2453 = vmatpush.msra.mxu0 %v2422
  %2454 = vmatpush.msra.mxu0 %v2421
  %2455 = vmatpush.msra.mxu0 %v2420
  %2456 = vmatpush.msra.mxu0 %v2419
  %2457 = vmatpush.msra.mxu0 %v2418
  %2458 = vmatpush.msra.mxu0 %v2417
  %2459 = vmatpush.msra.mxu0 %v2416
  %2460 = vmatpush.msra.mxu0 %v2415
  %2461 = vmatpush.msra.mxu0 %v2414
  %2462 = vmatpush.msra.mxu0 %v2413
  %2463 = vmatpush.msra.mxu0 %v2412
  %2464 = vmatmul.f32.gmra.mxu0 %v2411
  %v2465 = vpop.f32.mrf.mxu0
  %v2466 = vadd.f32 0.0, %v2465
  %2467 = vdwg.mxu0
  %v2468 = vrcp.pop 2048.0
  %v2469 = vmul.f32 2048.0, %v2468
  %v2470 = vsub.f32 1.0, %v2469
  %v2471 = vmul.f32 %v2468, %v2470
  %v2472 = vadd.f32 %v2468, %v2471
  %vm2473 = vweird.f32 %v2468
  %v2474 = vsel %vm2473, %v2468, %v2472
  %v2475 = vmul.f32 %v2446, %v2474
  %v2476 = vmul.f32 %v2466, %v2474
  %v2477 = vmul.f32 %v2475, %v2475
  %v2478 = vsub.f32 %v2476, %v2477
  %v2479 = vmax.f32 %v2478, 0.0
  %v2480 = vld [vmem:[%s49] sm:$0x3]
  %v2481 = vadd.f32 %v2479, 1e-05
  %v2482 = vrsqrt.pop %v2481
  %v2483 = vmul.f32 %v2482, %v2481
  %v2484 = vmul.f32 %v2483, %v2482
  %v2485 = vmul.f32 0.5, %v2484
  %v2486 = vsub.f32 1.5, %v2485
  %v2487 = vmul.f32 %v2482, %v2486
  %vm2488 = vweird.f32 %v2481
  %vm2489 = vweird.f32 %v2482
  %vm2490 = vmor %vm2488, %vm2489
  %v2491 = vsel %vm2490, %v2482, %v2487
  %v2492 = vmul.f32 %v2480, %v2491
  %v2493 = vmul.f32 %v2475, %v2492
  %v2495 = vrot.slane %v2493, 7
  %v2497 = vsub.f32 %v2480, %v2495
  %v2498 = vld [vmem:[%s53] sm:$0xf]
  %vm2499 = vcmask 31744
  %v2501 = vsel %vm2499, %v2492, 0
  %v2504 = vsel %vm932, %v2498, 0
  %2506 = vmatpush.msra.mxu0 0.0
  %2507 = vmatpush.msra.mxu0 0.0
  %2508 = vmatpush.msra.mxu0 0.0
  %2509 = vmatpush.msra.mxu0 0.0
  %2510 = vmatpush.msra.mxu0 0.0
  %2511 = vmatpush.msra.mxu0 0.0
  %2512 = vmatpush.msra.mxu0 0.0
  %2513 = vmatpush.msra.mxu0 0.0
  %2514 = vmatpush.msra.mxu0 0.0
  %2515 = vmatpush.msra.mxu0 0.0
  %2516 = vmatpush.msra.mxu0 0.0
  %2517 = vmatpush.msra.mxu0 0.0
  %2518 = vmatpush.msra.mxu0 0.0
  %2519 = vmatpush.msra.mxu0 0.0
  %2520 = vmatpush.msra.mxu0 0.0
  %2521 = vmatpush.msra.mxu0 %v2504
  %2522 = vmatmul.f32.gmra.mxu0 %v2501
  %v2523 = vpop.f32.mrf.mxu0
  %v2524 = vadd.f32 0.0, %v2523
  %2525 = vdwg.mxu0
  %v2527 = vrot.slane %v2497, 1
  %v2528 = vsel %vm2499, %v2527, 0
  %2530 = vmatpush.msra.mxu0 0.0
  %2531 = vmatpush.msra.mxu0 0.0
  %2532 = vmatpush.msra.mxu0 0.0
  %2533 = vmatpush.msra.mxu0 0.0
  %2534 = vmatpush.msra.mxu0 0.0
  %2535 = vmatpush.msra.mxu0 0.0
  %2536 = vmatpush.msra.mxu0 0.0
  %2537 = vmatpush.msra.mxu0 0.0
  %2538 = vmatpush.msra.mxu0 0.0
  %2539 = vmatpush.msra.mxu0 0.0
  %2540 = vmatpush.msra.mxu0 0.0
  %2541 = vmatpush.msra.mxu0 0.0
  %2542 = vmatpush.msra.mxu0 0.0
  %2543 = vmatpush.msra.mxu0 0.0
  %2544 = vmatpush.msra.mxu0 0.0
  %2545 = vmatpush.msra.mxu0 %v2504
  %2546 = vmatmul.f32.gmra.mxu0 %v2528
  %v2547 = vpop.f32.mrf.mxu0
  %v2548 = vadd.f32 0.0, %v2547
  %2549 = vdwg.mxu0
  %v2550 = vperm.slane %v2524, 0
  %v2551 = vmul.f32 %v2185, %v2550
  %v2552 = vmul.f32 %v2187, %v2550
  %v2553 = vmul.f32 %v2190, %v2550
  %v2554 = vmul.f32 %v2192, %v2550
  %v2555 = vperm.slane %v2548, 0
  %v2556 = vadd.f32 %v2551, %v2555
  %v2557 = vadd.f32 %v2552, %v2555
  %v2558 = vadd.f32 %v2553, %v2555
  %v2559 = vadd.f32 %v2554, %v2555
  %v2560 = vmax.f32 %v2556, 0.0
  %v2561 = vmax.f32 %v2557, 0.0
  %v2562 = vmax.f32 %v2558, 0.0
  %v2563 = vmax.f32 %v2559, 0.0
  %v2564 = vmul.f32 %v2357, %v2550
  %v2565 = vmul.f32 %v2359, %v2550
  %v2566 = vmul.f32 %v2362, %v2550
  %v2567 = vmul.f32 %v2364, %v2550
  %v2568 = vadd.f32 %v2564, %v2555
  %v2569 = vadd.f32 %v2565, %v2555
  %v2570 = vadd.f32 %v2566, %v2555
  %v2571 = vadd.f32 %v2567, %v2555
  %v2572 = vmax.f32 %v2568, 0.0
  %v2573 = vmax.f32 %v2569, 0.0
  %v2574 = vmax.f32 %v2570, 0.0
  %v2575 = vmax.f32 %v2571, 0.0
  %v2576 = vpack.c.bf16 %v2561, %v2560
  %v2577 = vpack.c.bf16 %v2563, %v2562
  %v2578 = vpack.c.bf16 %v2573, %v2572
  %v2579 = vpack.c.bf16 %v2575, %v2574
  %v2580 = vld [vmem:[%s47] sm:$0xf]
  %v2581 = vld [vmem:[%s47 + $0x4] sm:$0xf]
  %v2582 = vld [vmem:[%s47 + $0x8] sm:$0xf]
  %v2583 = vld [vmem:[%s47 + $0xc] sm:$0xf]
  %v2584 = vld [vmem:[%s47 + $0x10] sm:$0xf]
  %v2585 = vld [vmem:[%s47 + $0x14] sm:$0xf]
  %v2586 = vld [vmem:[%s47 + $0x18] sm:$0xf]
  %v2587 = vld [vmem:[%s47 + $0x1c] sm:$0xf]
  %v2596 = vunpack.c.l.b16 %v2580
  %v2597 = vunpack.c.l.b16 %v2581
  %v2598 = vunpack.c.l.b16 %v2582
  %v2599 = vunpack.c.l.b16 %v2583
  %v2600 = vunpack.c.l.b16 %v2584
  %v2601 = vunpack.c.l.b16 %v2585
  %v2602 = vunpack.c.l.b16 %v2586
  %v2603 = vunpack.c.l.b16 %v2587
  %v2604 = vpack.c.b16 %v2597, %v2596
  %v2605 = vpack.c.b16 %v2599, %v2598
  %v2606 = vpack.c.b16 %v2601, %v2600
  %v2607 = vpack.c.b16 %v2603, %v2602
  %vm2608 = vcmask 523264
  %v2610 = vsel %vm2608, %v2604, 0
  %v2613 = vsel %vm2608, %v2605, 0
  %v2616 = vsel %vm2608, %v2606, 0
  %v2619 = vsel %vm2608, %v2607, 0
  %2621 = vmatpush.bf16.msra.mxu0 0
  %2622 = vmatpush.bf16.msra.mxu0 0
  %2623 = vmatpush.bf16.msra.mxu0 0
  %2624 = vmatpush.bf16.msra.mxu0 0
  %2625 = vmatpush.bf16.msra.mxu0 %v2579
  %2626 = vmatpush.bf16.msra.mxu0 %v2578
  %2627 = vmatpush.bf16.msra.mxu0 %v2577
  %2628 = vmatpush.bf16.msra.mxu0 %v2576
  %2629 = vmatmul.bf16.gmra.mxu0 %v2610
  %v2630 = vpop.f32.mrf.mxu0
  %v2631 = vadd.f32 0.0, %v2630
  %v2632 = vpop.f32.mrf.mxu0
  %v2633 = vadd.f32 0.0, %v2632
  %2634 = vmatmul.bf16.gmra.mxu0 %v2613
  %v2635 = vpop.f32.mrf.mxu0
  %v2636 = vadd.f32 0.0, %v2635
  %v2637 = vpop.f32.mrf.mxu0
  %v2638 = vadd.f32 0.0, %v2637
  %2639 = vmatmul.bf16.gmra.mxu0 %v2616
  %v2640 = vpop.f32.mrf.mxu0
  %v2641 = vadd.f32 0.0, %v2640
  %v2642 = vpop.f32.mrf.mxu0
  %v2643 = vadd.f32 0.0, %v2642
  %2644 = vmatmul.bf16.gmra.mxu0 %v2619
  %v2645 = vpop.f32.mrf.mxu0
  %v2646 = vadd.f32 0.0, %v2645
  %v2647 = vpop.f32.mrf.mxu0
  %v2648 = vadd.f32 0.0, %v2647
  %2649 = vdwg.mxu0
  %2650 = vst [vmem:[#allocation5 + $0x1] sm:$0xff] %v2631
  %2651 = vst [vmem:[#allocation5 + $0x9] sm:$0xff] %v2633
  %2652 = vst [vmem:[#allocation5 + $0x11] sm:$0xff] %v2636
  %2653 = vst [vmem:[#allocation5 + $0x19] sm:$0xff] %v2638
  %2654 = vst [vmem:[#allocation5 + $0x29] sm:$0xff] %v2641
  %2655 = vst [vmem:[#allocation5 + $0x31] sm:$0xff] %v2643
  %2656 = vst [vmem:[#allocation5 + $0x39] sm:$0xff] %v2646
  %2657 = vst [vmem:[#allocation5 + $0x41] sm:$0xff] %v2648
  %v2658 = vld [vmem:[#allocation5] sm:$0xff]
  %v2659 = vld [vmem:[#allocation5 + $0x8] sm:$0xff]
  %v2660 = vld [vmem:[#allocation5 + $0x10] sm:$0xff]
  %v2661 = vld [vmem:[#allocation5 + $0x18] sm:$0xff]
  %v2662 = vld [vmem:[#allocation5 + $0x28] sm:$0xff]
  %v2663 = vld [vmem:[#allocation5 + $0x30] sm:$0xff]
  %v2664 = vld [vmem:[#allocation5 + $0x38] sm:$0xff]
  %v2665 = vld [vmem:[#allocation5 + $0x40] sm:$0xff]
  %v2666 = vld [vmem:[#allocation5 + $0x1] sm:$0xff]
  %v2667 = vld [vmem:[#allocation5 + $0x9] sm:$0xff]
  %v2668 = vld [vmem:[#allocation5 + $0x11] sm:$0xff]
  %v2669 = vld [vmem:[#allocation5 + $0x19] sm:$0xff]
  %v2670 = vld [vmem:[#allocation5 + $0x29] sm:$0xff]
  %v2671 = vld [vmem:[#allocation5 + $0x31] sm:$0xff]
  %v2672 = vld [vmem:[#allocation5 + $0x39] sm:$0xff]
  %v2673 = vld [vmem:[#allocation5 + $0x41] sm:$0xff]
  %v2674 = vpack.c.bf16 %v2659, %v2658
  %v2675 = vpack.c.bf16 %v2667, %v2666
  %v2676 = vpack.c.bf16 %v2661, %v2660
  %v2677 = vpack.c.bf16 %v2669, %v2668
  %v2678 = vpack.c.bf16 %v2663, %v2662
  %v2679 = vpack.c.bf16 %v2671, %v2670
  %v2680 = vpack.c.bf16 %v2665, %v2664
  %v2681 = vpack.c.bf16 %v2673, %v2672
  %v2682 = vld [vmem:[%s55] sm:$0xff]
  %v2683 = vld [vmem:[%s55 + $0x8] sm:$0xff]
  %v2684 = vld [vmem:[%s55 + $0x10] sm:$0xff]
  %v2685 = vld [vmem:[%s55 + $0x18] sm:$0xff]
  %v2686 = vld [vmem:[%s55 + $0x20] sm:$0xff]
  %v2687 = vld [vmem:[%s55 + $0x28] sm:$0xff]
  %v2688 = vld [vmem:[%s55 + $0x30] sm:$0xff]
  %v2689 = vld [vmem:[%s55 + $0x38] sm:$0xff]
  %v2690 = vld [vmem:[%s55 + $0x40] sm:$0xff]
  %v2691 = vld [vmem:[%s55 + $0x48] sm:$0xff]
  %v2692 = vld [vmem:[%s55 + $0x50] sm:$0xff]
  %v2693 = vld [vmem:[%s55 + $0x58] sm:$0xff]
  %v2694 = vld [vmem:[%s55 + $0x60] sm:$0xff]
  %v2695 = vld [vmem:[%s55 + $0x68] sm:$0xff]
  %v2696 = vld [vmem:[%s55 + $0x70] sm:$0xff]
  %v2697 = vld [vmem:[%s55 + $0x78] sm:$0xff]
  %v2698 = vld [vmem:[%s55 + $0x80] sm:$0xff]
  %v2699 = vld [vmem:[%s55 + $0x88] sm:$0xff]
  %v2700 = vld [vmem:[%s55 + $0x90] sm:$0xff]
  %v2701 = vld [vmem:[%s55 + $0x98] sm:$0xff]
  %v2702 = vld [vmem:[%s55 + $0xa0] sm:$0xff]
  %v2703 = vld [vmem:[%s55 + $0xa8] sm:$0xff]
  %v2704 = vld [vmem:[%s55 + $0xb0] sm:$0xff]
  %v2705 = vld [vmem:[%s55 + $0xb8] sm:$0xff]
  %v2706 = vld [vmem:[%s55 + $0xc0] sm:$0xff]
  %v2707 = vld [vmem:[%s55 + $0xc8] sm:$0xff]
  %v2708 = vld [vmem:[%s55 + $0xd0] sm:$0xff]
  %v2709 = vld [vmem:[%s55 + $0xd8] sm:$0xff]
  %v2710 = vld [vmem:[%s55 + $0xe0] sm:$0xff]
  %v2711 = vld [vmem:[%s55 + $0xe8] sm:$0xff]
  %v2712 = vld [vmem:[%s55 + $0xf0] sm:$0xff]
  %v2713 = vld [vmem:[%s55 + $0xf8] sm:$0xff]
  %v2746 = vunpack.c.l.b16 %v2682
  %v2747 = vunpack.c.h.b16 %v2682
  %v2748 = vunpack.c.l.b16 %v2683
  %v2749 = vunpack.c.h.b16 %v2683
  %v2750 = vunpack.c.l.b16 %v2684
  %v2751 = vunpack.c.h.b16 %v2684
  %v2752 = vunpack.c.l.b16 %v2685
  %v2753 = vunpack.c.h.b16 %v2685
  %v2754 = vunpack.c.l.b16 %v2686
  %v2755 = vunpack.c.h.b16 %v2686
  %v2756 = vunpack.c.l.b16 %v2687
  %v2757 = vunpack.c.h.b16 %v2687
  %v2758 = vunpack.c.l.b16 %v2688
  %v2759 = vunpack.c.h.b16 %v2688
  %v2760 = vunpack.c.l.b16 %v2689
  %v2761 = vunpack.c.h.b16 %v2689
  %v2762 = vunpack.c.l.b16 %v2690
  %v2763 = vunpack.c.h.b16 %v2690
  %v2764 = vunpack.c.l.b16 %v2691
  %v2765 = vunpack.c.h.b16 %v2691
  %v2766 = vunpack.c.l.b16 %v2692
  %v2767 = vunpack.c.h.b16 %v2692
  %v2768 = vunpack.c.l.b16 %v2693
  %v2769 = vunpack.c.h.b16 %v2693
  %v2770 = vunpack.c.l.b16 %v2694
  %v2771 = vunpack.c.h.b16 %v2694
  %v2772 = vunpack.c.l.b16 %v2695
  %v2773 = vunpack.c.h.b16 %v2695
  %v2774 = vunpack.c.l.b16 %v2696
  %v2775 = vunpack.c.h.b16 %v2696
  %v2776 = vunpack.c.l.b16 %v2697
  %v2777 = vunpack.c.h.b16 %v2697
  %v2778 = vunpack.c.l.b16 %v2698
  %v2779 = vunpack.c.h.b16 %v2698
  %v2780 = vunpack.c.l.b16 %v2699
  %v2781 = vunpack.c.h.b16 %v2699
  %v2782 = vunpack.c.l.b16 %v2700
  %v2783 = vunpack.c.h.b16 %v2700
  %v2784 = vunpack.c.l.b16 %v2701
  %v2785 = vunpack.c.h.b16 %v2701
  %v2786 = vunpack.c.l.b16 %v2702
  %v2787 = vunpack.c.h.b16 %v2702
  %v2788 = vunpack.c.l.b16 %v2703
  %v2789 = vunpack.c.h.b16 %v2703
  %v2790 = vunpack.c.l.b16 %v2704
  %v2791 = vunpack.c.h.b16 %v2704
  %v2792 = vunpack.c.l.b16 %v2705
  %v2793 = vunpack.c.h.b16 %v2705
  %v2794 = vunpack.c.l.b16 %v2706
  %v2795 = vunpack.c.h.b16 %v2706
  %v2796 = vunpack.c.l.b16 %v2707
  %v2797 = vunpack.c.h.b16 %v2707
  %v2798 = vunpack.c.l.b16 %v2708
  %v2799 = vunpack.c.h.b16 %v2708
  %v2800 = vunpack.c.l.b16 %v2709
  %v2801 = vunpack.c.h.b16 %v2709
  %v2802 = vunpack.c.l.b16 %v2710
  %v2803 = vunpack.c.h.b16 %v2710
  %v2804 = vunpack.c.l.b16 %v2711
  %v2805 = vunpack.c.h.b16 %v2711
  %v2806 = vunpack.c.l.b16 %v2712
  %v2807 = vunpack.c.h.b16 %v2712
  %v2808 = vunpack.c.l.b16 %v2713
  %v2809 = vunpack.c.h.b16 %v2713
  %v2810 = vpack.c.b16 %v2748, %v2746
  %v2811 = vpack.c.b16 %v2749, %v2747
  %v2812 = vpack.c.b16 %v2752, %v2750
  %v2813 = vpack.c.b16 %v2753, %v2751
  %v2814 = vpack.c.b16 %v2756, %v2754
  %v2815 = vpack.c.b16 %v2757, %v2755
  %v2816 = vpack.c.b16 %v2760, %v2758
  %v2817 = vpack.c.b16 %v2761, %v2759
  %v2818 = vpack.c.b16 %v2764, %v2762
  %v2819 = vpack.c.b16 %v2765, %v2763
  %v2820 = vpack.c.b16 %v2768, %v2766
  %v2821 = vpack.c.b16 %v2769, %v2767
  %v2822 = vpack.c.b16 %v2772, %v2770
  %v2823 = vpack.c.b16 %v2773, %v2771
  %v2824 = vpack.c.b16 %v2776, %v2774
  %v2825 = vpack.c.b16 %v2777, %v2775
  %v2826 = vpack.c.b16 %v2780, %v2778
  %v2827 = vpack.c.b16 %v2781, %v2779
  %v2828 = vpack.c.b16 %v2784, %v2782
  %v2829 = vpack.c.b16 %v2785, %v2783
  %v2830 = vpack.c.b16 %v2788, %v2786
  %v2831 = vpack.c.b16 %v2789, %v2787
  %v2832 = vpack.c.b16 %v2792, %v2790
  %v2833 = vpack.c.b16 %v2793, %v2791
  %v2834 = vpack.c.b16 %v2796, %v2794
  %v2835 = vpack.c.b16 %v2797, %v2795
  %v2836 = vpack.c.b16 %v2800, %v2798
  %v2837 = vpack.c.b16 %v2801, %v2799
  %v2838 = vpack.c.b16 %v2804, %v2802
  %v2839 = vpack.c.b16 %v2805, %v2803
  %v2840 = vpack.c.b16 %v2808, %v2806
  %v2841 = vpack.c.b16 %v2809, %v2807
  %2874 = vmatpush.bf16.msra.mxu0 %v2824
  %2875 = vmatpush.bf16.msra.mxu0 %v2822
  %2876 = vmatpush.bf16.msra.mxu0 %v2820
  %2877 = vmatpush.bf16.msra.mxu0 %v2818
  %2878 = vmatpush.bf16.msra.mxu0 %v2816
  %2879 = vmatpush.bf16.msra.mxu0 %v2814
  %2880 = vmatpush.bf16.msra.mxu0 %v2812
  %2881 = vmatpush.bf16.msra.mxu0 %v2810
  %2882 = vmatmul.bf16.gmra.mxu0 %v2674
  %v2883 = vpop.f32.mrf.mxu0
  %v2884 = vadd.f32 0.0, %v2883
  %v2885 = vpop.f32.mrf.mxu0
  %v2886 = vadd.f32 0.0, %v2885
  %2887 = vmatmul.bf16.gmra.mxu0 %v2676
  %v2888 = vpop.f32.mrf.mxu0
  %v2889 = vadd.f32 0.0, %v2888
  %v2890 = vpop.f32.mrf.mxu0
  %v2891 = vadd.f32 0.0, %v2890
  %2892 = vmatmul.bf16.gmra.mxu0 %v2678
  %v2893 = vpop.f32.mrf.mxu0
  %v2894 = vadd.f32 0.0, %v2893
  %v2895 = vpop.f32.mrf.mxu0
  %v2896 = vadd.f32 0.0, %v2895
  %2897 = vmatmul.bf16.gmra.mxu0 %v2680
  %v2898 = vpop.f32.mrf.mxu0
  %v2899 = vadd.f32 0.0, %v2898
  %v2900 = vpop.f32.mrf.mxu0
  %v2901 = vadd.f32 0.0, %v2900
  %2902 = vdwg.mxu0
  %2903 = vmatpush.bf16.msra.mxu0 %v2840
  %2904 = vmatpush.bf16.msra.mxu0 %v2838
  %2905 = vmatpush.bf16.msra.mxu0 %v2836
  %2906 = vmatpush.bf16.msra.mxu0 %v2834
  %2907 = vmatpush.bf16.msra.mxu0 %v2832
  %2908 = vmatpush.bf16.msra.mxu0 %v2830
  %2909 = vmatpush.bf16.msra.mxu0 %v2828
  %2910 = vmatpush.bf16.msra.mxu0 %v2826
  %2911 = vmatmul.bf16.gmra.mxu0 %v2675
  %v2912 = vpop.f32.mrf.mxu0
  %v2913 = vadd.f32 %v2884, %v2912
  %v2914 = vpop.f32.mrf.mxu0
  %v2915 = vadd.f32 %v2886, %v2914
  %2916 = vmatmul.bf16.gmra.mxu0 %v2677
  %v2917 = vpop.f32.mrf.mxu0
  %v2918 = vadd.f32 %v2889, %v2917
  %v2919 = vpop.f32.mrf.mxu0
  %v2920 = vadd.f32 %v2891, %v2919
  %2921 = vmatmul.bf16.gmra.mxu0 %v2679
  %v2922 = vpop.f32.mrf.mxu0
  %v2923 = vadd.f32 %v2894, %v2922
  %v2924 = vpop.f32.mrf.mxu0
  %v2925 = vadd.f32 %v2896, %v2924
  %2926 = vmatmul.bf16.gmra.mxu0 %v2681
  %v2927 = vpop.f32.mrf.mxu0
  %v2928 = vadd.f32 %v2899, %v2927
  %v2929 = vpop.f32.mrf.mxu0
  %v2930 = vadd.f32 %v2901, %v2929
  %2931 = vdwg.mxu0
  %2932 = vmatpush.bf16.msra.mxu0 %v2825
  %2933 = vmatpush.bf16.msra.mxu0 %v2823
  %2934 = vmatpush.bf16.msra.mxu0 %v2821
  %2935 = vmatpush.bf16.msra.mxu0 %v2819
  %2936 = vmatpush.bf16.msra.mxu0 %v2817
  %2937 = vmatpush.bf16.msra.mxu0 %v2815
  %2938 = vmatpush.bf16.msra.mxu0 %v2813
  %2939 = vmatpush.bf16.msra.mxu0 %v2811
  %2940 = vmatmul.bf16.gmra.mxu0 %v2674
  %v2941 = vpop.f32.mrf.mxu0
  %v2942 = vadd.f32 0.0, %v2941
  %v2943 = vpop.f32.mrf.mxu0
  %v2944 = vadd.f32 0.0, %v2943
  %2945 = vmatmul.bf16.gmra.mxu0 %v2676
  %v2946 = vpop.f32.mrf.mxu0
  %v2947 = vadd.f32 0.0, %v2946
  %v2948 = vpop.f32.mrf.mxu0
  %v2949 = vadd.f32 0.0, %v2948
  %2950 = vmatmul.bf16.gmra.mxu0 %v2678
  %v2951 = vpop.f32.mrf.mxu0
  %v2952 = vadd.f32 0.0, %v2951
  %v2953 = vpop.f32.mrf.mxu0
  %v2954 = vadd.f32 0.0, %v2953
  %2955 = vmatmul.bf16.gmra.mxu0 %v2680
  %v2956 = vpop.f32.mrf.mxu0
  %v2957 = vadd.f32 0.0, %v2956
  %v2958 = vpop.f32.mrf.mxu0
  %v2959 = vadd.f32 0.0, %v2958
  %2960 = vdwg.mxu0
  %2961 = vmatpush.bf16.msra.mxu0 %v2841
  %2962 = vmatpush.bf16.msra.mxu0 %v2839
  %2963 = vmatpush.bf16.msra.mxu0 %v2837
  %2964 = vmatpush.bf16.msra.mxu0 %v2835
  %2965 = vmatpush.bf16.msra.mxu0 %v2833
  %2966 = vmatpush.bf16.msra.mxu0 %v2831
  %2967 = vmatpush.bf16.msra.mxu0 %v2829
  %2968 = vmatpush.bf16.msra.mxu0 %v2827
  %2969 = vmatmul.bf16.gmra.mxu0 %v2675
  %v2970 = vpop.f32.mrf.mxu0
  %v2971 = vadd.f32 %v2942, %v2970
  %v2972 = vpop.f32.mrf.mxu0
  %v2973 = vadd.f32 %v2944, %v2972
  %2974 = vmatmul.bf16.gmra.mxu0 %v2677
  %v2975 = vpop.f32.mrf.mxu0
  %v2976 = vadd.f32 %v2947, %v2975
  %v2977 = vpop.f32.mrf.mxu0
  %v2978 = vadd.f32 %v2949, %v2977
  %2979 = vmatmul.bf16.gmra.mxu0 %v2679
  %v2980 = vpop.f32.mrf.mxu0
  %v2981 = vadd.f32 %v2952, %v2980
  %v2982 = vpop.f32.mrf.mxu0
  %v2983 = vadd.f32 %v2954, %v2982
  %2984 = vmatmul.bf16.gmra.mxu0 %v2681
  %v2985 = vpop.f32.mrf.mxu0
  %v2986 = vadd.f32 %v2957, %v2985
  %v2987 = vpop.f32.mrf.mxu0
  %v2988 = vadd.f32 %v2959, %v2987
  %2989 = vdwg.mxu0
  %v2990 = vld [vmem:[#allocation5 + $0x2] sm:$0xff]
  %v2991 = vld [vmem:[#allocation5 + $0xa] sm:$0xff]
  %v2992 = vld [vmem:[#allocation5 + $0x12] sm:$0xff]
  %v2993 = vld [vmem:[#allocation5 + $0x1a] sm:$0xff]
  %v2994 = vld [vmem:[#allocation5 + $0x2a] sm:$0xff]
  %v2995 = vld [vmem:[#allocation5 + $0x32] sm:$0xff]
  %v2996 = vld [vmem:[#allocation5 + $0x3a] sm:$0xff]
  %v2997 = vld [vmem:[#allocation5 + $0x42] sm:$0xff]
  %v2998 = vpack.c.bf16 %v2991, %v2990
  %v2999 = vpack.c.bf16 %v2993, %v2992
  %v3000 = vpack.c.bf16 %v2995, %v2994
  %v3001 = vpack.c.bf16 %v2997, %v2996
  %v3002 = vld [vmem:[%s57] sm:$0xff]
  %v3003 = vld [vmem:[%s57 + $0x8] sm:$0xff]
  %v3004 = vld [vmem:[%s57 + $0x10] sm:$0xff]
  %v3005 = vld [vmem:[%s57 + $0x18] sm:$0xff]
  %v3006 = vld [vmem:[%s57 + $0x20] sm:$0xff]
  %v3007 = vld [vmem:[%s57 + $0x28] sm:$0xff]
  %v3008 = vld [vmem:[%s57 + $0x30] sm:$0xff]
  %v3009 = vld [vmem:[%s57 + $0x38] sm:$0xff]
  %v3010 = vld [vmem:[%s57 + $0x40] sm:$0xff]
  %v3011 = vld [vmem:[%s57 + $0x48] sm:$0xff]
  %v3012 = vld [vmem:[%s57 + $0x50] sm:$0xff]
  %v3013 = vld [vmem:[%s57 + $0x58] sm:$0xff]
  %v3014 = vld [vmem:[%s57 + $0x60] sm:$0xff]
  %v3015 = vld [vmem:[%s57 + $0x68] sm:$0xff]
  %v3016 = vld [vmem:[%s57 + $0x70] sm:$0xff]
  %v3017 = vld [vmem:[%s57 + $0x78] sm:$0xff]
  %v3018 = vld [vmem:[%s57 + $0x80] sm:$0xff]
  %v3019 = vld [vmem:[%s57 + $0x88] sm:$0xff]
  %v3020 = vld [vmem:[%s57 + $0x90] sm:$0xff]
  %v3021 = vld [vmem:[%s57 + $0x98] sm:$0xff]
  %v3022 = vld [vmem:[%s57 + $0xa0] sm:$0xff]
  %v3023 = vld [vmem:[%s57 + $0xa8] sm:$0xff]
  %v3024 = vld [vmem:[%s57 + $0xb0] sm:$0xff]
  %v3025 = vld [vmem:[%s57 + $0xb8] sm:$0xff]
  %v3026 = vld [vmem:[%s57 + $0xc0] sm:$0xff]
  %v3027 = vld [vmem:[%s57 + $0xc8] sm:$0xff]
  %v3028 = vld [vmem:[%s57 + $0xd0] sm:$0xff]
  %v3029 = vld [vmem:[%s57 + $0xd8] sm:$0xff]
  %v3030 = vld [vmem:[%s57 + $0xe0] sm:$0xff]
  %v3031 = vld [vmem:[%s57 + $0xe8] sm:$0xff]
  %v3032 = vld [vmem:[%s57 + $0xf0] sm:$0xff]
  %v3033 = vld [vmem:[%s57 + $0xf8] sm:$0xff]
  %v3066 = vunpack.c.l.b16 %v3002
  %v3067 = vunpack.c.h.b16 %v3002
  %v3068 = vunpack.c.l.b16 %v3003
  %v3069 = vunpack.c.h.b16 %v3003
  %v3070 = vunpack.c.l.b16 %v3004
  %v3071 = vunpack.c.h.b16 %v3004
  %v3072 = vunpack.c.l.b16 %v3005
  %v3073 = vunpack.c.h.b16 %v3005
  %v3074 = vunpack.c.l.b16 %v3006
  %v3075 = vunpack.c.h.b16 %v3006
  %v3076 = vunpack.c.l.b16 %v3007
  %v3077 = vunpack.c.h.b16 %v3007
  %v3078 = vunpack.c.l.b16 %v3008
  %v3079 = vunpack.c.h.b16 %v3008
  %v3080 = vunpack.c.l.b16 %v3009
  %v3081 = vunpack.c.h.b16 %v3009
  %v3082 = vunpack.c.l.b16 %v3010
  %v3083 = vunpack.c.h.b16 %v3010
  %v3084 = vunpack.c.l.b16 %v3011
  %v3085 = vunpack.c.h.b16 %v3011
  %v3086 = vunpack.c.l.b16 %v3012
  %v3087 = vunpack.c.h.b16 %v3012
  %v3088 = vunpack.c.l.b16 %v3013
  %v3089 = vunpack.c.h.b16 %v3013
  %v3090 = vunpack.c.l.b16 %v3014
  %v3091 = vunpack.c.h.b16 %v3014
  %v3092 = vunpack.c.l.b16 %v3015
  %v3093 = vunpack.c.h.b16 %v3015
  %v3094 = vunpack.c.l.b16 %v3016
  %v3095 = vunpack.c.h.b16 %v3016
  %v3096 = vunpack.c.l.b16 %v3017
  %v3097 = vunpack.c.h.b16 %v3017
  %v3098 = vunpack.c.l.b16 %v3018
  %v3099 = vunpack.c.h.b16 %v3018
  %v3100 = vunpack.c.l.b16 %v3019
  %v3101 = vunpack.c.h.b16 %v3019
  %v3102 = vunpack.c.l.b16 %v3020
  %v3103 = vunpack.c.h.b16 %v3020
  %v3104 = vunpack.c.l.b16 %v3021
  %v3105 = vunpack.c.h.b16 %v3021
  %v3106 = vunpack.c.l.b16 %v3022
  %v3107 = vunpack.c.h.b16 %v3022
  %v3108 = vunpack.c.l.b16 %v3023
  %v3109 = vunpack.c.h.b16 %v3023
  %v3110 = vunpack.c.l.b16 %v3024
  %v3111 = vunpack.c.h.b16 %v3024
  %v3112 = vunpack.c.l.b16 %v3025
  %v3113 = vunpack.c.h.b16 %v3025
  %v3114 = vunpack.c.l.b16 %v3026
  %v3115 = vunpack.c.h.b16 %v3026
  %v3116 = vunpack.c.l.b16 %v3027
  %v3117 = vunpack.c.h.b16 %v3027
  %v3118 = vunpack.c.l.b16 %v3028
  %v3119 = vunpack.c.h.b16 %v3028
  %v3120 = vunpack.c.l.b16 %v3029
  %v3121 = vunpack.c.h.b16 %v3029
  %v3122 = vunpack.c.l.b16 %v3030
  %v3123 = vunpack.c.h.b16 %v3030
  %v3124 = vunpack.c.l.b16 %v3031
  %v3125 = vunpack.c.h.b16 %v3031
  %v3126 = vunpack.c.l.b16 %v3032
  %v3127 = vunpack.c.h.b16 %v3032
  %v3128 = vunpack.c.l.b16 %v3033
  %v3129 = vunpack.c.h.b16 %v3033
  %v3130 = vpack.c.b16 %v3068, %v3066
  %v3131 = vpack.c.b16 %v3069, %v3067
  %v3132 = vpack.c.b16 %v3072, %v3070
  %v3133 = vpack.c.b16 %v3073, %v3071
  %v3134 = vpack.c.b16 %v3076, %v3074
  %v3135 = vpack.c.b16 %v3077, %v3075
  %v3136 = vpack.c.b16 %v3080, %v3078
  %v3137 = vpack.c.b16 %v3081, %v3079
  %v3138 = vpack.c.b16 %v3084, %v3082
  %v3139 = vpack.c.b16 %v3085, %v3083
  %v3140 = vpack.c.b16 %v3088, %v3086
  %v3141 = vpack.c.b16 %v3089, %v3087
  %v3142 = vpack.c.b16 %v3092, %v3090
  %v3143 = vpack.c.b16 %v3093, %v3091
  %v3144 = vpack.c.b16 %v3096, %v3094
  %v3145 = vpack.c.b16 %v3097, %v3095
  %v3146 = vpack.c.b16 %v3100, %v3098
  %v3147 = vpack.c.b16 %v3101, %v3099
  %v3148 = vpack.c.b16 %v3104, %v3102
  %v3149 = vpack.c.b16 %v3105, %v3103
  %v3150 = vpack.c.b16 %v3108, %v3106
  %v3151 = vpack.c.b16 %v3109, %v3107
  %v3152 = vpack.c.b16 %v3112, %v3110
  %v3153 = vpack.c.b16 %v3113, %v3111
  %v3154 = vpack.c.b16 %v3116, %v3114
  %v3155 = vpack.c.b16 %v3117, %v3115
  %v3156 = vpack.c.b16 %v3120, %v3118
  %v3157 = vpack.c.b16 %v3121, %v3119
  %v3158 = vpack.c.b16 %v3124, %v3122
  %v3159 = vpack.c.b16 %v3125, %v3123
  %v3160 = vpack.c.b16 %v3128, %v3126
  %v3161 = vpack.c.b16 %v3129, %v3127
  %3194 = vmatpush.bf16.msra.mxu0 %v3144
  %3195 = vmatpush.bf16.msra.mxu0 %v3142
  %3196 = vmatpush.bf16.msra.mxu0 %v3140
  %3197 = vmatpush.bf16.msra.mxu0 %v3138
  %3198 = vmatpush.bf16.msra.mxu0 %v3136
  %3199 = vmatpush.bf16.msra.mxu0 %v3134
  %3200 = vmatpush.bf16.msra.mxu0 %v3132
  %3201 = vmatpush.bf16.msra.mxu0 %v3130
  %3202 = vmatmul.bf16.gmra.mxu0 %v2675
  %v3203 = vpop.f32.mrf.mxu0
  %v3204 = vadd.f32 0.0, %v3203
  %v3205 = vpop.f32.mrf.mxu0
  %v3206 = vadd.f32 0.0, %v3205
  %3207 = vmatmul.bf16.gmra.mxu0 %v2677
  %v3208 = vpop.f32.mrf.mxu0
  %v3209 = vadd.f32 0.0, %v3208
  %v3210 = vpop.f32.mrf.mxu0
  %v3211 = vadd.f32 0.0, %v3210
  %3212 = vmatmul.bf16.gmra.mxu0 %v2679
  %v3213 = vpop.f32.mrf.mxu0
  %v3214 = vadd.f32 0.0, %v3213
  %v3215 = vpop.f32.mrf.mxu0
  %v3216 = vadd.f32 0.0, %v3215
  %3217 = vmatmul.bf16.gmra.mxu0 %v2681
  %v3218 = vpop.f32.mrf.mxu0
  %v3219 = vadd.f32 0.0, %v3218
  %v3220 = vpop.f32.mrf.mxu0
  %v3221 = vadd.f32 0.0, %v3220
  %3222 = vdwg.mxu0
  %3223 = vmatpush.bf16.msra.mxu0 %v3160
  %3224 = vmatpush.bf16.msra.mxu0 %v3158
  %3225 = vmatpush.bf16.msra.mxu0 %v3156
  %3226 = vmatpush.bf16.msra.mxu0 %v3154
  %3227 = vmatpush.bf16.msra.mxu0 %v3152
  %3228 = vmatpush.bf16.msra.mxu0 %v3150
  %3229 = vmatpush.bf16.msra.mxu0 %v3148
  %3230 = vmatpush.bf16.msra.mxu0 %v3146
  %3231 = vmatmul.bf16.gmra.mxu0 %v2998
  %v3232 = vpop.f32.mrf.mxu0
  %v3233 = vadd.f32 %v3204, %v3232
  %v3234 = vpop.f32.mrf.mxu0
  %v3235 = vadd.f32 %v3206, %v3234
  %3236 = vmatmul.bf16.gmra.mxu0 %v2999
  %v3237 = vpop.f32.mrf.mxu0
  %v3238 = vadd.f32 %v3209, %v3237
  %v3239 = vpop.f32.mrf.mxu0
  %v3240 = vadd.f32 %v3211, %v3239
  %3241 = vmatmul.bf16.gmra.mxu0 %v3000
  %v3242 = vpop.f32.mrf.mxu0
  %v3243 = vadd.f32 %v3214, %v3242
  %v3244 = vpop.f32.mrf.mxu0
  %v3245 = vadd.f32 %v3216, %v3244
  %3246 = vmatmul.bf16.gmra.mxu0 %v3001
  %v3247 = vpop.f32.mrf.mxu0
  %v3248 = vadd.f32 %v3219, %v3247
  %v3249 = vpop.f32.mrf.mxu0
  %v3250 = vadd.f32 %v3221, %v3249
  %3251 = vdwg.mxu0
  %3252 = vmatpush.bf16.msra.mxu0 %v3145
  %3253 = vmatpush.bf16.msra.mxu0 %v3143
  %3254 = vmatpush.bf16.msra.mxu0 %v3141
  %3255 = vmatpush.bf16.msra.mxu0 %v3139
  %3256 = vmatpush.bf16.msra.mxu0 %v3137
  %3257 = vmatpush.bf16.msra.mxu0 %v3135
  %3258 = vmatpush.bf16.msra.mxu0 %v3133
  %3259 = vmatpush.bf16.msra.mxu0 %v3131
  %3260 = vmatmul.bf16.gmra.mxu0 %v2675
  %v3261 = vpop.f32.mrf.mxu0
  %v3262 = vadd.f32 0.0, %v3261
  %v3263 = vpop.f32.mrf.mxu0
  %v3264 = vadd.f32 0.0, %v3263
  %3265 = vmatmul.bf16.gmra.mxu0 %v2677
  %v3266 = vpop.f32.mrf.mxu0
  %v3267 = vadd.f32 0.0, %v3266
  %v3268 = vpop.f32.mrf.mxu0
  %v3269 = vadd.f32 0.0, %v3268
  %3270 = vmatmul.bf16.gmra.mxu0 %v2679
  %v3271 = vpop.f32.mrf.mxu0
  %v3272 = vadd.f32 0.0, %v3271
  %v3273 = vpop.f32.mrf.mxu0
  %v3274 = vadd.f32 0.0, %v3273
  %3275 = vmatmul.bf16.gmra.mxu0 %v2681
  %v3276 = vpop.f32.mrf.mxu0
  %v3277 = vadd.f32 0.0, %v3276
  %v3278 = vpop.f32.mrf.mxu0
  %v3279 = vadd.f32 0.0, %v3278
  %3280 = vdwg.mxu0
  %3281 = vmatpush.bf16.msra.mxu0 %v3161
  %3282 = vmatpush.bf16.msra.mxu0 %v3159
  %3283 = vmatpush.bf16.msra.mxu0 %v3157
  %3284 = vmatpush.bf16.msra.mxu0 %v3155
  %3285 = vmatpush.bf16.msra.mxu0 %v3153
  %3286 = vmatpush.bf16.msra.mxu0 %v3151
  %3287 = vmatpush.bf16.msra.mxu0 %v3149
  %3288 = vmatpush.bf16.msra.mxu0 %v3147
  %3289 = vmatmul.bf16.gmra.mxu0 %v2998
  %v3290 = vpop.f32.mrf.mxu0
  %v3291 = vadd.f32 %v3262, %v3290
  %v3292 = vpop.f32.mrf.mxu0
  %v3293 = vadd.f32 %v3264, %v3292
  %3294 = vmatmul.bf16.gmra.mxu0 %v2999
  %v3295 = vpop.f32.mrf.mxu0
  %v3296 = vadd.f32 %v3267, %v3295
  %v3297 = vpop.f32.mrf.mxu0
  %v3298 = vadd.f32 %v3269, %v3297
  %3299 = vmatmul.bf16.gmra.mxu0 %v3000
  %v3300 = vpop.f32.mrf.mxu0
  %v3301 = vadd.f32 %v3272, %v3300
  %v3302 = vpop.f32.mrf.mxu0
  %v3303 = vadd.f32 %v3274, %v3302
  %3304 = vmatmul.bf16.gmra.mxu0 %v3001
  %v3305 = vpop.f32.mrf.mxu0
  %v3306 = vadd.f32 %v3277, %v3305
  %v3307 = vpop.f32.mrf.mxu0
  %v3308 = vadd.f32 %v3279, %v3307
  %3309 = vdwg.mxu0
  %v3310 = vtanh.pop %v2913
  %v3311 = vtanh.pop %v2971
  %v3312 = vtanh.pop %v2915
  %v3313 = vtanh.pop %v2973
  %v3314 = vtanh.pop %v2918
  %v3315 = vtanh.pop %v2976
  %v3316 = vtanh.pop %v2920
  %v3317 = vtanh.pop %v2978
  %v3318 = vtanh.pop %v2923
  %v3319 = vtanh.pop %v2981
  %v3320 = vtanh.pop %v2925
  %v3321 = vtanh.pop %v2983
  %v3322 = vtanh.pop %v2928
  %v3323 = vtanh.pop %v2986
  %v3324 = vtanh.pop %v2930
  %v3325 = vtanh.pop %v2988
  %v3326 = vtanh.pop %v3233
  %v3327 = vtanh.pop %v3291
  %v3328 = vtanh.pop %v3235
  %v3329 = vtanh.pop %v3293
  %v3330 = vtanh.pop %v3238
  %v3331 = vtanh.pop %v3296
  %v3332 = vtanh.pop %v3240
  %v3333 = vtanh.pop %v3298
  %v3334 = vtanh.pop %v3243
  %v3335 = vtanh.pop %v3301
  %v3336 = vtanh.pop %v3245
  %v3337 = vtanh.pop %v3303
  %v3338 = vtanh.pop %v3248
  %v3339 = vtanh.pop %v3306
  %v3340 = vtanh.pop %v3250
  %v3341 = vtanh.pop %v3308
  %v3342 = vpack.c.bf16 %v3312, %v3310
  %v3343 = vpack.c.bf16 %v3313, %v3311
  %v3344 = vpack.c.bf16 %v3316, %v3314
  %v3345 = vpack.c.bf16 %v3317, %v3315
  %v3346 = vpack.c.bf16 %v3320, %v3318
  %v3347 = vpack.c.bf16 %v3321, %v3319
  %v3348 = vpack.c.bf16 %v3324, %v3322
  %v3349 = vpack.c.bf16 %v3325, %v3323
  %v3350 = vpack.c.bf16 %v3328, %v3326
  %v3351 = vpack.c.bf16 %v3329, %v3327
  %v3352 = vpack.c.bf16 %v3332, %v3330
  %v3353 = vpack.c.bf16 %v3333, %v3331
  %v3354 = vpack.c.bf16 %v3336, %v3334
  %v3355 = vpack.c.bf16 %v3337, %v3335
  %v3356 = vpack.c.bf16 %v3340, %v3338
  %v3357 = vpack.c.bf16 %v3341, %v3339
  %v3358 = vld [vmem:[%s59] sm:$0xf]
  %v3359 = vld [vmem:[%s59 + $0x4] sm:$0xf]
  %v3360 = vld [vmem:[%s59 + $0x8] sm:$0xf]
  %v3361 = vld [vmem:[%s59 + $0xc] sm:$0xf]
  %v3362 = vld [vmem:[%s59 + $0x10] sm:$0xf]
  %v3363 = vld [vmem:[%s59 + $0x14] sm:$0xf]
  %v3364 = vld [vmem:[%s59 + $0x18] sm:$0xf]
  %v3365 = vld [vmem:[%s59 + $0x1c] sm:$0xf]
  %v3366 = vld [vmem:[%s59 + $0x20] sm:$0xf]
  %v3367 = vld [vmem:[%s59 + $0x24] sm:$0xf]
  %v3368 = vld [vmem:[%s59 + $0x28] sm:$0xf]
  %v3369 = vld [vmem:[%s59 + $0x2c] sm:$0xf]
  %v3370 = vld [vmem:[%s59 + $0x30] sm:$0xf]
  %v3371 = vld [vmem:[%s59 + $0x34] sm:$0xf]
  %v3372 = vld [vmem:[%s59 + $0x38] sm:$0xf]
  %v3373 = vld [vmem:[%s59 + $0x3c] sm:$0xf]
  %v3390 = vunpack.c.l.b16 %v3358
  %v3391 = vunpack.c.l.b16 %v3359
  %v3392 = vunpack.c.l.b16 %v3360
  %v3393 = vunpack.c.l.b16 %v3361
  %v3394 = vunpack.c.l.b16 %v3362
  %v3395 = vunpack.c.l.b16 %v3363
  %v3396 = vunpack.c.l.b16 %v3364
  %v3397 = vunpack.c.l.b16 %v3365
  %v3398 = vunpack.c.l.b16 %v3366
  %v3399 = vunpack.c.l.b16 %v3367
  %v3400 = vunpack.c.l.b16 %v3368
  %v3401 = vunpack.c.l.b16 %v3369
  %v3402 = vunpack.c.l.b16 %v3370
  %v3403 = vunpack.c.l.b16 %v3371
  %v3404 = vunpack.c.l.b16 %v3372
  %v3405 = vunpack.c.l.b16 %v3373
  %v3406 = vpack.c.b16 %v3391, %v3390
  %v3407 = vpack.c.b16 %v3393, %v3392
  %v3408 = vpack.c.b16 %v3395, %v3394
  %v3409 = vpack.c.b16 %v3397, %v3396
  %v3410 = vpack.c.b16 %v3399, %v3398
  %v3411 = vpack.c.b16 %v3401, %v3400
  %v3412 = vpack.c.b16 %v3403, %v3402
  %v3413 = vpack.c.b16 %v3405, %v3404
  %3422 = vmatpush.bf16.msra.mxu0 %v3356
  %3423 = vmatpush.bf16.msra.mxu0 %v3354
  %3424 = vmatpush.bf16.msra.mxu0 %v3352
  %3425 = vmatpush.bf16.msra.mxu0 %v3350
  %3426 = vmatpush.bf16.msra.mxu0 %v3348
  %3427 = vmatpush.bf16.msra.mxu0 %v3346
  %3428 = vmatpush.bf16.msra.mxu0 %v3344
  %3429 = vmatpush.bf16.msra.mxu0 %v3342
  %3430 = vmatmul.bf16.gmra.mxu0 %v3406
  %v3431 = vpop.f32.mrf.mxu0
  %v3432 = vadd.f32 0.0, %v3431
  %v3433 = vpop.f32.mrf.mxu0
  %v3434 = vadd.f32 0.0, %v3433
  %3435 = vmatmul.bf16.gmra.mxu0 %v3407
  %v3436 = vpop.f32.mrf.mxu0
  %v3437 = vadd.f32 0.0, %v3436
  %v3438 = vpop.f32.mrf.mxu0
  %v3439 = vadd.f32 0.0, %v3438
  %3440 = vmatmul.bf16.gmra.mxu0 %v3408
  %v3441 = vpop.f32.mrf.mxu0
  %v3442 = vadd.f32 0.0, %v3441
  %v3443 = vpop.f32.mrf.mxu0
  %v3444 = vadd.f32 0.0, %v3443
  %3445 = vmatmul.bf16.gmra.mxu0 %v3409
  %v3446 = vpop.f32.mrf.mxu0
  %v3447 = vadd.f32 0.0, %v3446
  %v3448 = vpop.f32.mrf.mxu0
  %v3449 = vadd.f32 0.0, %v3448
  %3450 = vmatmul.bf16.gmra.mxu0 %v3410
  %v3451 = vpop.f32.mrf.mxu0
  %v3452 = vadd.f32 0.0, %v3451
  %v3453 = vpop.f32.mrf.mxu0
  %v3454 = vadd.f32 0.0, %v3453
  %3455 = vmatmul.bf16.gmra.mxu0 %v3411
  %v3456 = vpop.f32.mrf.mxu0
  %v3457 = vadd.f32 0.0, %v3456
  %v3458 = vpop.f32.mrf.mxu0
  %v3459 = vadd.f32 0.0, %v3458
  %3460 = vmatmul.bf16.gmra.mxu0 %v3412
  %v3461 = vpop.f32.mrf.mxu0
  %v3462 = vadd.f32 0.0, %v3461
  %v3463 = vpop.f32.mrf.mxu0
  %v3464 = vadd.f32 0.0, %v3463
  %3465 = vmatmul.bf16.gmra.mxu0 %v3413
  %v3466 = vpop.f32.mrf.mxu0
  %v3467 = vadd.f32 0.0, %v3466
  %v3468 = vpop.f32.mrf.mxu0
  %v3469 = vadd.f32 0.0, %v3468
  %3470 = vdwg.mxu0
  %3471 = vmatpush.bf16.msra.mxu0 %v3357
  %3472 = vmatpush.bf16.msra.mxu0 %v3355
  %3473 = vmatpush.bf16.msra.mxu0 %v3353
  %3474 = vmatpush.bf16.msra.mxu0 %v3351
  %3475 = vmatpush.bf16.msra.mxu0 %v3349
  %3476 = vmatpush.bf16.msra.mxu0 %v3347
  %3477 = vmatpush.bf16.msra.mxu0 %v3345
  %3478 = vmatpush.bf16.msra.mxu0 %v3343
  %3479 = vmatmul.bf16.gmra.mxu0 %v3406
  %v3480 = vpop.f32.mrf.mxu0
  %v3481 = vadd.f32 0.0, %v3480
  %v3482 = vpop.f32.mrf.mxu0
  %v3483 = vadd.f32 0.0, %v3482
  %3484 = vmatmul.bf16.gmra.mxu0 %v3407
  %v3485 = vpop.f32.mrf.mxu0
  %v3486 = vadd.f32 0.0, %v3485
  %v3487 = vpop.f32.mrf.mxu0
  %v3488 = vadd.f32 0.0, %v3487
  %3489 = vmatmul.bf16.gmra.mxu0 %v3408
  %v3490 = vpop.f32.mrf.mxu0
  %v3491 = vadd.f32 0.0, %v3490
  %v3492 = vpop.f32.mrf.mxu0
  %v3493 = vadd.f32 0.0, %v3492
  %3494 = vmatmul.bf16.gmra.mxu0 %v3409
  %v3495 = vpop.f32.mrf.mxu0
  %v3496 = vadd.f32 0.0, %v3495
  %v3497 = vpop.f32.mrf.mxu0
  %v3498 = vadd.f32 0.0, %v3497
  %3499 = vmatmul.bf16.gmra.mxu0 %v3410
  %v3500 = vpop.f32.mrf.mxu0
  %v3501 = vadd.f32 0.0, %v3500
  %v3502 = vpop.f32.mrf.mxu0
  %v3503 = vadd.f32 0.0, %v3502
  %3504 = vmatmul.bf16.gmra.mxu0 %v3411
  %v3505 = vpop.f32.mrf.mxu0
  %v3506 = vadd.f32 0.0, %v3505
  %v3507 = vpop.f32.mrf.mxu0
  %v3508 = vadd.f32 0.0, %v3507
  %3509 = vmatmul.bf16.gmra.mxu0 %v3412
  %v3510 = vpop.f32.mrf.mxu0
  %v3511 = vadd.f32 0.0, %v3510
  %v3512 = vpop.f32.mrf.mxu0
  %v3513 = vadd.f32 0.0, %v3512
  %3514 = vmatmul.bf16.gmra.mxu0 %v3413
  %v3515 = vpop.f32.mrf.mxu0
  %v3516 = vadd.f32 0.0, %v3515
  %v3517 = vpop.f32.mrf.mxu0
  %v3518 = vadd.f32 0.0, %v3517
  %3519 = vdwg.mxu0
  %3520 = vst [vmem:[%s61] sm:$0xff] %v3432
  %3521 = vst.msk [vmem:[%s61 + $0x8] sm:$0xff] %vm2608, %v3481
  %3522 = vst [vmem:[%s61 + $0x10] sm:$0xff] %v3434
  %3523 = vst.msk [vmem:[%s61 + $0x18] sm:$0xff] %vm2608, %v3483
  %3524 = vst [vmem:[%s61 + $0x20] sm:$0xff] %v3437
  %3525 = vst.msk [vmem:[%s61 + $0x28] sm:$0xff] %vm2608, %v3486
  %3526 = vst [vmem:[%s61 + $0x30] sm:$0xff] %v3439
  %3527 = vst.msk [vmem:[%s61 + $0x38] sm:$0xff] %vm2608, %v3488
  %3528 = vst [vmem:[%s61 + $0x40] sm:$0xff] %v3442
  %3529 = vst.msk [vmem:[%s61 + $0x48] sm:$0xff] %vm2608, %v3491
  %3530 = vst [vmem:[%s61 + $0x50] sm:$0xff] %v3444
  %3531 = vst.msk [vmem:[%s61 + $0x58] sm:$0xff] %vm2608, %v3493
  %3532 = vst [vmem:[%s61 + $0x60] sm:$0xff] %v3447
  %3533 = vst.msk [vmem:[%s61 + $0x68] sm:$0xff] %vm2608, %v3496
  %3534 = vst [vmem:[%s61 + $0x70] sm:$0xff] %v3449
  %3535 = vst.msk [vmem:[%s61 + $0x78] sm:$0xff] %vm2608, %v3498
  %3536 = vst [vmem:[%s61 + $0x80] sm:$0xff] %v3452
  %3537 = vst.msk [vmem:[%s61 + $0x88] sm:$0xff] %vm2608, %v3501
  %3538 = vst [vmem:[%s61 + $0x90] sm:$0xff] %v3454
  %3539 = vst.msk [vmem:[%s61 + $0x98] sm:$0xff] %vm2608, %v3503
  %3540 = vst [vmem:[%s61 + $0xa0] sm:$0xff] %v3457
  %3541 = vst.msk [vmem:[%s61 + $0xa8] sm:$0xff] %vm2608, %v3506
  %3542 = vst [vmem:[%s61 + $0xb0] sm:$0xff] %v3459
  %3543 = vst.msk [vmem:[%s61 + $0xb8] sm:$0xff] %vm2608, %v3508
  %3544 = vst [vmem:[%s61 + $0xc0] sm:$0xff] %v3462
  %3545 = vst.msk [vmem:[%s61 + $0xc8] sm:$0xff] %vm2608, %v3511
  %3546 = vst [vmem:[%s61 + $0xd0] sm:$0xff] %v3464
  %3547 = vst.msk [vmem:[%s61 + $0xd8] sm:$0xff] %vm2608, %v3513
  %3548 = vst [vmem:[%s61 + $0xe0] sm:$0xff] %v3467
  %3549 = vst.msk [vmem:[%s61 + $0xe8] sm:$0xff] %vm2608, %v3516
  %3550 = vst [vmem:[%s61 + $0xf0] sm:$0xff] %v3469
  %3551 = vst.msk [vmem:[%s61 + $0xf8] sm:$0xff] %vm2608, %v3518
  // Predicated region
  $region122: #{forward.1} parent=0 // pred_check
    _
  $region123: #{forward.1} parent=0 // pred_check_branch
    %3553 = sbr.rel (0) target = $region125
  $region124: #{forward.1} parent=0 // pred_region
    _
  $region125: #{forward.1} parent=0 // pred_fallthru
    _
  // Predicated region
  $region126: #{forward.1} parent=0 // pred_check
    _
  $region127: #{forward.1} parent=0 // pred_check_branch
    %3555 = sbr.rel (0) target = $region129
  $region128: #{forward.1} parent=0 // pred_region
    _
  $region129: #{forward.1} parent=0 // pred_fallthru
    _

</llo_original>
